<compile_context>
chip_gen: v7x
topology: tpu7x:2x2x1
jax: 0.10.0
libtpu: 0.0.40
codegen_flags: <defaults>
</compile_context>

<pallas_src>
import functools
import math

import jax
import jax.numpy as jnp
import numpy as np
from jax import lax
from jax.experimental import pallas as pl
from jax.experimental.pallas import tpu as pltpu

# ---- small synthetic config ----
B = 2            # batch
S = 8            # sequence length
H = 32           # hidden_size
NH = 4           # num_attention_heads
HD = H // NH     # attention_head_size
FF = 128         # intermediate_size (4 * H, lane-dense)
L = 2            # num_hidden_layers
EPS = 1e-12      # layer_norm_eps

_INV_SQRT_2 = 1.0 / math.sqrt(2.0)

# Row layout of the packed small-vector slab (8, max(3H, FF)):
_R_BQKV, _R_BO, _R_G1, _R_BE1, _R_BI, _R_B2, _R_G2, _R_BE2 = range(8)


def _erf_approx(x):
    """erf via Abramowitz & Stegun 7.1.26 (max abs err ~1.5e-7).

    Used inside the kernel because lax.erf is not guaranteed a Mosaic lowering;
    the divide goes through the EUP approximate reciprocal, exp is EUP anyway.
    """
    a1, a2, a3, a4, a5 = (0.254829592, -0.284496736, 1.421413741,
                          -1.453152027, 1.061405429)
    p = 0.3275911
    sgn = jnp.where(x >= 0.0, 1.0, -1.0)
    ax = jnp.abs(x)
    t = pl.reciprocal(1.0 + p * ax, approx=True)          # EUP slot
    poly = ((((a5 * t + a4) * t + a3) * t + a2) * t + a1) * t
    return sgn * (1.0 - poly * jnp.exp(-ax * ax))


def _layer_norm(y, gamma, beta, eps):
    u = jnp.mean(y, axis=-1, keepdims=True)
    d = y - u
    var = jnp.mean(d * d, axis=-1, keepdims=True)
    return d * lax.rsqrt(var + eps) * gamma + beta


def bert_layer_kernel(x_ref, mask_ref,
                      wqkv_ref,            # fused QKV weight: (H, 3H), Q columns pre-scaled by 1/sqrt(hd)
                      wo_ref,              # attention output dense: (H, H)
                      wi_ref,              # intermediate dense: (H, FF)
                      w2_ref,              # output dense: (FF, H)
                      vecs_ref,            # packed small vectors: (8, max(3H, FF))
                      out_ref,
                      *, batch, seq, hidden, num_heads, head_dim, ff, eps):
    x = x_ref[...]                         # (batch*seq, H) flattened hidden_states
    mask_rows = mask_ref[...]              # (batch*seq, S) additive mask, row b*S+i == mask[b]

    three_h = 3 * hidden
    bqkv = vecs_ref[_R_BQKV:_R_BQKV + 1, 0:three_h]      # (1, 3H)
    bo   = vecs_ref[_R_BO:_R_BO + 1, 0:hidden]
    g1   = vecs_ref[_R_G1:_R_G1 + 1, 0:hidden]
    be1  = vecs_ref[_R_BE1:_R_BE1 + 1, 0:hidden]
    bi   = vecs_ref[_R_BI:_R_BI + 1, 0:ff]
    b2   = vecs_ref[_R_B2:_R_B2 + 1, 0:hidden]
    g2   = vecs_ref[_R_G2:_R_G2 + 1, 0:hidden]
    be2  = vecs_ref[_R_BE2:_R_BE2 + 1, 0:hidden]

    bs = batch * seq
    bnh = batch * num_heads

    # ---- BertSelfAttention: one fused QKV projection (single wide MXU pass) ----
    qkv = jnp.dot(x, wqkv_ref[...],
                  preferred_element_type=jnp.float32) + bqkv            # (BS, 3H)

    # Build head-batched (B*NH, S, HD) operands ONCE, then use batched einsums.
    def to_heads(t2d):                                    # (BS, H) -> (B*NH, S, HD)
        heads = [t2d[:, h * head_dim:(h + 1) * head_dim]
                 .reshape(batch, 1, seq, head_dim) for h in range(num_heads)]
        return jnp.concatenate(heads, axis=1).reshape(bnh, seq, head_dim)

    q = to_heads(qkv[:, 0:hidden])                        # pre-scaled by 1/sqrt(hd)
    k = to_heads(qkv[:, hidden:2 * hidden])
    v = to_heads(qkv[:, 2 * hidden:3 * hidden])

    # scores = q @ k^T for every (batch, head) pair in one batched contraction.
    scores = jnp.einsum('bqd,bkd->bqk', q, k,
                        preferred_element_type=jnp.float32)              # (BNH, S, S)

    # Additive key mask: broadcast once for all heads (hoisted, no per-head re-broadcast).
    mask_full = jnp.broadcast_to(
        mask_rows.reshape(batch, 1, seq, seq),
        (batch, num_heads, seq, seq)).reshape(bnh, seq, seq)
    scores = scores + mask_full

    # Numerically stable softmax; denominator via EUP approximate reciprocal.
    scores = scores - jnp.max(scores, axis=-1, keepdims=True)
    p_exp = jnp.exp(scores)
    denom = jnp.sum(p_exp, axis=-1, keepdims=True)
    probs = p_exp * pl.reciprocal(denom, approx=True)
    # attention-probs dropout: identity (eval mode)

    ctx = jnp.einsum('bqk,bkd->bqd', probs, v,
                     preferred_element_type=jnp.float32)                 # (BNH, S, HD)

    # Merge heads back to (BS, H) once, then a single output-projection matmul.
    ctx4 = ctx.reshape(batch, num_heads, seq, head_dim)
    ctx2d = jnp.concatenate([ctx4[:, h] for h in range(num_heads)],
                            axis=-1).reshape(bs, hidden)                 # (BS, H)

    # ---- BertSelfOutput: dense + residual + LayerNorm (hidden dropout = identity) ----
    attn_dense = jnp.dot(ctx2d, wo_ref[...],
                         preferred_element_type=jnp.float32) + bo        # (BS, H)
    attn_out = _layer_norm(attn_dense + x, g1, be1, eps)

    # ---- BertIntermediate: dense + erf-based gelu (matches the PyTorch gelu) ----
    inter = jnp.dot(attn_out, wi_ref[...],
                    preferred_element_type=jnp.float32) + bi             # (BS, FF)
    inter = inter * 0.5 * (1.0 + _erf_approx(inter * _INV_SQRT_2))

    # ---- BertOutput: dense + residual + LayerNorm ----
    ffn = jnp.dot(inter, w2_ref[...],
                  preferred_element_type=jnp.float32) + b2               # (BS, H)
    # NOTE: out last dim is H=32 (<128 lanes) at this toy size -> masked stores;
    # keep H a multiple of 128 (or pad/pack) at production shapes.
    out_ref[...] = _layer_norm(ffn + attn_out, g2, be2, eps)


def _tensorcores_per_chip():
    """2 TensorCores on v7x (and megacore v4/v5p); 1 on v5e/v6e."""
    try:
        kind = jax.devices()[0].device_kind.lower()
    except Exception:
        return 1
    if "v7" in kind or "v4" in kind or "v5p" in kind:
        return 2
    return 1


def bert_layer(x, mask_rows, prep):
    """One fused BertLayer.

    x: (B, S, H) f32.  mask_rows: (B*S, S) additive mask (row b*S+i == mask[b]).
    prep: prepared parameters from prepare_layer_params().
    """
    Bn, Sn, Hn = x.shape
    x_flat = x.reshape(Bn * Sn, Hn)

    # Grid over batch only where a second TensorCore exists (v7x / megacore);
    # on v5e/v6e a single grid step keeps per-step overhead to one occurrence.
    n_cores = _tensorcores_per_chip()
    n_blocks = n_cores if (n_cores > 1 and Bn % n_cores == 0) else 1
    bpb = Bn // n_blocks                     # batch rows handled per grid step

    kernel = functools.partial(
        bert_layer_kernel, batch=bpb, seq=Sn, hidden=Hn,
        num_heads=NH, head_dim=HD, ff=FF, eps=EPS)

    def rows(i):                              # row-block of the flattened (B*S, .) arrays
        return (i, 0)

    def full(arr):                            # whole array resident, same block every step
        return pl.BlockSpec(arr.shape, lambda i: (0, 0))

    out_flat = pl.pallas_call(
        kernel,
        out_shape=jax.ShapeDtypeStruct((Bn * Sn, Hn), jnp.float32),
        grid=(n_blocks,),
        in_specs=[
            pl.BlockSpec((bpb * Sn, Hn), rows),     # hidden_states rows
            pl.BlockSpec((bpb * Sn, Sn), rows),     # pre-broadcast mask rows
            full(prep['wqkv']),
            full(prep['wo']),
            full(prep['wi']),
            full(prep['w2']),
            full(prep['vecs']),
        ],
        out_specs=pl.BlockSpec((bpb * Sn, Hn), rows),
        compiler_params=pltpu.CompilerParams(
            dimension_semantics=("parallel",)),
    )(x_flat, mask_rows, prep['wqkv'], prep['wo'], prep['wi'], prep['w2'],
      prep['vecs'])
    return out_flat.reshape(Bn, Sn, Hn)


def bert_encoder(x, mask2d, layer_params, output_all_encoded_layers=True):
    """Matches BertEncoder.forward: list of per-layer outputs (or just the last)."""
    Bn, Sn, _ = x.shape
    # Hoisted once for all layers/heads: (B, S) additive mask -> (B*S, S) slab
    # (JAX does not CSE broadcast_in_dim, so never re-broadcast inside loops).
    mask_rows = jnp.broadcast_to(mask2d[:, None, :], (Bn, Sn, Sn)).reshape(Bn * Sn, Sn)

    all_encoder_layers = []
    h = x
    for p in layer_params:
        h = bert_layer(h, mask_rows, p)
        if output_all_encoded_layers:
            all_encoder_layers.append(h)
    if not output_all_encoded_layers:
        all_encoder_layers.append(h)
    return all_encoder_layers


# ---------------- one-time (host-side) parameter preparation ----------------

def prepare_layer_params(p):
    """Hoisted out of the forward pass (runs once at init):
      * fuse Q/K/V weights & biases into a single (H, 3H)/(1, 3H) operand with
        the 1/sqrt(head_dim) attention scale folded into the Q columns;
      * pack the eight small (1,H)/(1,FF) vectors into one (8, 128) slab so the
        kernel takes 7 inputs instead of 14."""
    inv = 1.0 / math.sqrt(HD)
    wqkv = jnp.concatenate([p['wq'] * inv, p['wk'], p['wv']], axis=1)   # (H, 3H)
    bqkv = jnp.concatenate([p['bq'] * inv, p['bk'], p['bv']], axis=1)   # (1, 3H)

    width = max(3 * H, FF)

    def pad(v):
        return jnp.pad(v, ((0, 0), (0, width - v.shape[1])))

    vecs = jnp.concatenate(
        [pad(bqkv), pad(p['bo']), pad(p['g1']), pad(p['be1']),
         pad(p['bi']), pad(p['b2']), pad(p['g2']), pad(p['be2'])], axis=0)  # (8, width)

    return dict(wqkv=wqkv, wo=p['wo'], wi=p['wi'], w2=p['w2'], vecs=vecs)


# ---------------- pure-JAX reference (mirrors the PyTorch forward, eval mode) ----------------

def _ref_layer_norm(y, g, b):
    u = jnp.mean(y, axis=-1, keepdims=True)
    s = jnp.mean((y - u) ** 2, axis=-1, keepdims=True)
    return (y - u) / jnp.sqrt(s + EPS) * g + b


def ref_layer(x, mask2d, p):
    q = x @ p['wq'] + p['bq'][0]
    k = x @ p['wk'] + p['bk'][0]
    v = x @ p['wv'] + p['bv'][0]

    def split(t):  # (B,S,H) -> (B,NH,S,HD)
        return t.reshape(B, S, NH, HD).transpose(0, 2, 1, 3)

    qh, kh, vh = split(q), split(k), split(v)
    scores = jnp.einsum('bnqd,bnkd->bnqk', qh, kh) / math.sqrt(HD)
    scores = scores + mask2d[:, None, None, :]
    probs = jax.nn.softmax(scores, axis=-1)
    ctx = jnp.einsum('bnqk,bnkd->bnqd', probs, vh)
    ctx = ctx.transpose(0, 2, 1, 3).reshape(B, S, H)

    attn_dense = ctx @ p['wo'] + p['bo'][0]
    attn_out = _ref_layer_norm(attn_dense + x, p['g1'][0], p['be1'][0])

    inter = attn_out @ p['wi'] + p['bi'][0]
    inter = inter * 0.5 * (1.0 + jax.scipy.special.erf(inter / math.sqrt(2.0)))

    ffn = inter @ p['w2'] + p['b2'][0]
    return _ref_layer_norm(ffn + attn_out, p['g2'][0], p['be2'][0])


def ref_encoder(x, mask2d, layer_params, output_all_encoded_layers=True):
    outs = []
    h = x
    for p in layer_params:
        h = ref_layer(h, mask2d, p)
        if output_all_encoded_layers:
            outs.append(h)
    if not output_all_encoded_layers:
        outs.append(h)
    return outs


# ---------------- parameter init ----------------

def init_layer_params(key):
    ks = jax.random.split(key, 6)
    sc = 0.02

    def lin(k, d_in, d_out):  # weights stored as (in, out) to avoid transposes
        return sc * jax.random.normal(k, (d_in, d_out), jnp.float32)

    return dict(
        wq=lin(ks[0], H, H), bq=jnp.zeros((1, H), jnp.float32),
        wk=lin(ks[1], H, H), bk=jnp.full((1, H), 0.01, jnp.float32),
        wv=lin(ks[2], H, H), bv=jnp.full((1, H), -0.01, jnp.float32),
        wo=lin(ks[3], H, H), bo=jnp.full((1, H), 0.02, jnp.float32),
        g1=jnp.ones((1, H), jnp.float32), be1=jnp.zeros((1, H), jnp.float32),
        wi=lin(ks[4], H, FF), bi=jnp.full((1, FF), 0.01, jnp.float32),
        w2=lin(ks[5], FF, H), b2=jnp.full((1, H), -0.02, jnp.float32),
        g2=jnp.ones((1, H), jnp.float32), be2=jnp.zeros((1, H), jnp.float32),
    )


if __name__ == "__main__":
    key = jax.random.PRNGKey(0)
    k_x, k_m, k_p = jax.random.split(key, 3)

    x = jax.random.normal(k_x, (B, S, H), jnp.float32)
    raw_params = [init_layer_params(k) for k in jax.random.split(k_p, L)]
    # Host-side weight fusion / vector packing: done ONCE, not per forward call.
    prep_params = [prepare_layer_params(p) for p in raw_params]

    # Standard BERT extended attention mask: (B, 1, 1, S), 0 for keep, -10000 for pad.
    valid = (jax.random.uniform(k_m, (B, S)) > 0.2).astype(jnp.float32)
    attention_mask = ((1.0 - valid) * -10000.0).reshape(B, 1, 1, S)
    mask2d = attention_mask.reshape(B, S)

    encoder = jax.jit(functools.partial(bert_encoder, output_all_encoded_layers=True))
    outs = encoder(x, mask2d, prep_params)
    outs = jax.block_until_ready(outs)

    refs = ref_encoder(x, mask2d, raw_params, output_all_encoded_layers=True)
    # Tolerance loosened slightly (1e-4 -> 2e-3) to cover the EUP approximate
    # reciprocals (softmax denominator, erf polynomial) vs. the exact-erf f32
    # reference; a wrong kernel would be off by O(1), so this still validates.
    for o, r in zip(outs, refs):
        np.testing.assert_allclose(np.asarray(o), np.asarray(r),
                                   rtol=2e-3, atol=2e-3)
    print("KERNEL_OK")
</pallas_src>

<mosaic_0001>
module attributes {stable_mosaic.version = 11 : i64} {
  func.func @bert_layer_kernel(%arg0: i32, %arg1: memref<16x32xf32, #tpu.memory_space<vmem>>, %arg2: memref<16x8xf32, #tpu.memory_space<vmem>>, %arg3: memref<32x96xf32, #tpu.memory_space<vmem>>, %arg4: memref<32x32xf32, #tpu.memory_space<vmem>>, %arg5: memref<32x128xf32, #tpu.memory_space<vmem>>, %arg6: memref<128x32xf32, #tpu.memory_space<vmem>>, %arg7: memref<8x128xf32, #tpu.memory_space<vmem>>, %arg8: memref<16x32xf32, #tpu.memory_space<vmem>>) attributes {dimension_semantics = [#tpu.dimension_semantics<parallel>], iteration_bounds = array<i64: 1>, scalar_prefetch = 0 : i64, scratch_operands = 0 : i64, tpu.core_type = #tpu.core_type<tc>, window_params = [{transform_indices = @transform_0, window_bounds = array<i64: 16, 32>}, {transform_indices = @transform_1, window_bounds = array<i64: 16, 8>}, {pipeline_mode = #tpu.pipeline_mode<synchronous>, transform_indices = @transform_2, window_bounds = array<i64: 32, 96>}, {pipeline_mode = #tpu.pipeline_mode<synchronous>, transform_indices = @transform_3, window_bounds = array<i64: 32, 32>}, {pipeline_mode = #tpu.pipeline_mode<synchronous>, transform_indices = @transform_4, window_bounds = array<i64: 32, 128>}, {pipeline_mode = #tpu.pipeline_mode<synchronous>, transform_indices = @transform_5, window_bounds = array<i64: 128, 32>}, {pipeline_mode = #tpu.pipeline_mode<synchronous>, transform_indices = @transform_6, window_bounds = array<i64: 8, 128>}, {transform_indices = @transform_7, window_bounds = array<i64: 16, 32>}]} {
    %c0 = arith.constant 0 : index
    %c0_0 = arith.constant 0 : index
    %0 = vector.load %arg1[%c0, %c0_0] : memref<16x32xf32, #tpu.memory_space<vmem>>, vector<16x32xf32>
    %c0_1 = arith.constant 0 : index
    %c0_2 = arith.constant 0 : index
    %1 = vector.load %arg2[%c0_1, %c0_2] : memref<16x8xf32, #tpu.memory_space<vmem>>, vector<16x8xf32>
    %c0_3 = arith.constant 0 : index
    %c0_4 = arith.constant 0 : index
    %2 = vector.load %arg7[%c0_3, %c0_4] : memref<8x128xf32, #tpu.memory_space<vmem>>, vector<1x96xf32>
    %c1 = arith.constant 1 : index
    %c0_5 = arith.constant 0 : index
    %3 = vector.load %arg7[%c1, %c0_5] : memref<8x128xf32, #tpu.memory_space<vmem>>, vector<1x32xf32>
    %c2 = arith.constant 2 : index
    %c0_6 = arith.constant 0 : index
    %4 = vector.load %arg7[%c2, %c0_6] : memref<8x128xf32, #tpu.memory_space<vmem>>, vector<1x32xf32>
    %c3 = arith.constant 3 : index
    %c0_7 = arith.constant 0 : index
    %5 = vector.load %arg7[%c3, %c0_7] : memref<8x128xf32, #tpu.memory_space<vmem>>, vector<1x32xf32>
    %c4 = arith.constant 4 : index
    %c0_8 = arith.constant 0 : index
    %6 = vector.load %arg7[%c4, %c0_8] : memref<8x128xf32, #tpu.memory_space<vmem>>, vector<1x128xf32>
    %c5 = arith.constant 5 : index
    %c0_9 = arith.constant 0 : index
    %7 = vector.load %arg7[%c5, %c0_9] : memref<8x128xf32, #tpu.memory_space<vmem>>, vector<1x32xf32>
    %c6 = arith.constant 6 : index
    %c0_10 = arith.constant 0 : index
    %8 = vector.load %arg7[%c6, %c0_10] : memref<8x128xf32, #tpu.memory_space<vmem>>, vector<1x32xf32>
    %c7 = arith.constant 7 : index
    %c0_11 = arith.constant 0 : index
    %9 = vector.load %arg7[%c7, %c0_11] : memref<8x128xf32, #tpu.memory_space<vmem>>, vector<1x32xf32>
    %c0_12 = arith.constant 0 : index
    %c0_13 = arith.constant 0 : index
    %10 = vector.load %arg3[%c0_12, %c0_13] : memref<32x96xf32, #tpu.memory_space<vmem>>, vector<32x96xf32>
    %cst = arith.constant dense<0.000000e+00> : vector<16x96xf32>
    %11 = tpu.matmul %0, %10, %cst {dimension_numbers = #tpu.dot_dimension_numbers<[1], [0], [0], [1], [0, 0, 1, 1], [], []>} : vector<16x32xf32>, vector<32x96xf32>, vector<16x96xf32> -> vector<16x96xf32>
    %12 = vector.broadcast %2 : vector<1x96xf32> to vector<16x96xf32>
    %13 = arith.addf %11, %12 : vector<16x96xf32>
    %14 = vector.extract_strided_slice %13 {offsets = [0, 0], sizes = [16, 32], strides = [1, 1]} : vector<16x96xf32> to vector<16x32xf32>
    %15 = vector.extract_strided_slice %14 {offsets = [0, 0], sizes = [16, 8], strides = [1, 1]} : vector<16x32xf32> to vector<16x8xf32>
    %16 = vector.shape_cast %15 : vector<16x8xf32> to vector<2x1x8x8xf32>
    %17 = vector.extract_strided_slice %14 {offsets = [0, 8], sizes = [16, 8], strides = [1, 1]} : vector<16x32xf32> to vector<16x8xf32>
    %18 = vector.shape_cast %17 : vector<16x8xf32> to vector<2x1x8x8xf32>
    %19 = vector.extract_strided_slice %14 {offsets = [0, 16], sizes = [16, 8], strides = [1, 1]} : vector<16x32xf32> to vector<16x8xf32>
    %20 = vector.shape_cast %19 : vector<16x8xf32> to vector<2x1x8x8xf32>
    %21 = vector.extract_strided_slice %14 {offsets = [0, 24], sizes = [16, 8], strides = [1, 1]} : vector<16x32xf32> to vector<16x8xf32>
    %22 = vector.shape_cast %21 : vector<16x8xf32> to vector<2x1x8x8xf32>
    %23 = tpu.concatenate %16, %18, %20, %22 in 1 : vector<2x1x8x8xf32>, vector<2x1x8x8xf32>, vector<2x1x8x8xf32>, vector<2x1x8x8xf32> -> vector<2x4x8x8xf32>
    %24 = vector.shape_cast %23 : vector<2x4x8x8xf32> to vector<8x8x8xf32>
    %25 = vector.extract_strided_slice %13 {offsets = [0, 32], sizes = [16, 32], strides = [1, 1]} : vector<16x96xf32> to vector<16x32xf32>
    %26 = vector.extract_strided_slice %25 {offsets = [0, 0], sizes = [16, 8], strides = [1, 1]} : vector<16x32xf32> to vector<16x8xf32>
    %27 = vector.shape_cast %26 : vector<16x8xf32> to vector<2x1x8x8xf32>
    %28 = vector.extract_strided_slice %25 {offsets = [0, 8], sizes = [16, 8], strides = [1, 1]} : vector<16x32xf32> to vector<16x8xf32>
    %29 = vector.shape_cast %28 : vector<16x8xf32> to vector<2x1x8x8xf32>
    %30 = vector.extract_strided_slice %25 {offsets = [0, 16], sizes = [16, 8], strides = [1, 1]} : vector<16x32xf32> to vector<16x8xf32>
    %31 = vector.shape_cast %30 : vector<16x8xf32> to vector<2x1x8x8xf32>
    %32 = vector.extract_strided_slice %25 {offsets = [0, 24], sizes = [16, 8], strides = [1, 1]} : vector<16x32xf32> to vector<16x8xf32>
    %33 = vector.shape_cast %32 : vector<16x8xf32> to vector<2x1x8x8xf32>
    %34 = tpu.concatenate %27, %29, %31, %33 in 1 : vector<2x1x8x8xf32>, vector<2x1x8x8xf32>, vector<2x1x8x8xf32>, vector<2x1x8x8xf32> -> vector<2x4x8x8xf32>
    %35 = vector.shape_cast %34 : vector<2x4x8x8xf32> to vector<8x8x8xf32>
    %36 = vector.extract_strided_slice %13 {offsets = [0, 64], sizes = [16, 32], strides = [1, 1]} : vector<16x96xf32> to vector<16x32xf32>
    %37 = vector.extract_strided_slice %36 {offsets = [0, 0], sizes = [16, 8], strides = [1, 1]} : vector<16x32xf32> to vector<16x8xf32>
    %38 = vector.shape_cast %37 : vector<16x8xf32> to vector<2x1x8x8xf32>
    %39 = vector.extract_strided_slice %36 {offsets = [0, 8], sizes = [16, 8], strides = [1, 1]} : vector<16x32xf32> to vector<16x8xf32>
    %40 = vector.shape_cast %39 : vector<16x8xf32> to vector<2x1x8x8xf32>
    %41 = vector.extract_strided_slice %36 {offsets = [0, 16], sizes = [16, 8], strides = [1, 1]} : vector<16x32xf32> to vector<16x8xf32>
    %42 = vector.shape_cast %41 : vector<16x8xf32> to vector<2x1x8x8xf32>
    %43 = vector.extract_strided_slice %36 {offsets = [0, 24], sizes = [16, 8], strides = [1, 1]} : vector<16x32xf32> to vector<16x8xf32>
    %44 = vector.shape_cast %43 : vector<16x8xf32> to vector<2x1x8x8xf32>
    %45 = tpu.concatenate %38, %40, %42, %44 in 1 : vector<2x1x8x8xf32>, vector<2x1x8x8xf32>, vector<2x1x8x8xf32>, vector<2x1x8x8xf32> -> vector<2x4x8x8xf32>
    %46 = vector.shape_cast %45 : vector<2x4x8x8xf32> to vector<8x8x8xf32>
    "tpu.trace_start"() <{level = 10 : i32, message = "bqd,bkd->bqk"}> : () -> ()
    %cst_14 = arith.constant dense<0.000000e+00> : vector<8x8x8xf32>
    %47 = tpu.matmul %24, %35, %cst_14 {dimension_numbers = #tpu.dot_dimension_numbers<[2], [2], [1], [1], [0, 0, 0, 1, 1, 1], [0], [0]>} : vector<8x8x8xf32>, vector<8x8x8xf32>, vector<8x8x8xf32> -> vector<8x8x8xf32>
    "tpu.trace_stop"() : () -> ()
    %48 = vector.shape_cast %1 : vector<16x8xf32> to vector<2x1x8x8xf32>
    %49 = vector.shape_cast %48 : vector<2x1x8x8xf32> to vector<2x1x8x8xf32>
    %50 = vector.broadcast %49 : vector<2x1x8x8xf32> to vector<2x4x8x8xf32>
    %51 = vector.shape_cast %50 : vector<2x4x8x8xf32> to vector<8x8x8xf32>
    %52 = arith.addf %47, %51 : vector<8x8x8xf32>
    %cst_15 = arith.constant dense<0xFF800000> : vector<8x8xf32>
    %53 = vector.multi_reduction <maximumf>, %52, %cst_15 [2] : vector<8x8x8xf32> to vector<8x8xf32>
    %54 = vector.shape_cast %53 : vector<8x8xf32> to vector<8x8x1xf32>
    %55 = vector.broadcast %54 : vector<8x8x1xf32> to vector<8x8x8xf32>
    %56 = arith.subf %52, %55 : vector<8x8x8xf32>
    %57 = math.exp %56 : vector<8x8x8xf32>
    %cst_16 = arith.constant dense<0.000000e+00> : vector<8x8xf32>
    %58 = vector.multi_reduction <add>, %57, %cst_16 [2] : vector<8x8x8xf32> to vector<8x8xf32>
    %59 = vector.shape_cast %58 : vector<8x8xf32> to vector<8x8x1xf32>
    %60 = tpu.reciprocal %59 {approx = true} : vector<8x8x1xf32> -> vector<8x8x1xf32>
    %61 = vector.broadcast %60 : vector<8x8x1xf32> to vector<8x8x8xf32>
    %62 = arith.mulf %57, %61 : vector<8x8x8xf32>
    "tpu.trace_start"() <{level = 10 : i32, message = "bqk,bkd->bqd"}> : () -> ()
    %cst_17 = arith.constant dense<0.000000e+00> : vector<8x8x8xf32>
    %63 = tpu.matmul %62, %46, %cst_17 {dimension_numbers = #tpu.dot_dimension_numbers<[2], [1], [1], [2], [0, 0, 0, 1, 1, 2], [0], [0]>} : vector<8x8x8xf32>, vector<8x8x8xf32>, vector<8x8x8xf32> -> vector<8x8x8xf32>
    "tpu.trace_stop"() : () -> ()
    %64 = vector.shape_cast %63 : vector<8x8x8xf32> to vector<2x4x8x8xf32>
    %65 = vector.extract_strided_slice %64 {offsets = [0, 0, 0, 0], sizes = [2, 1, 8, 8], strides = [1, 1, 1, 1]} : vector<2x4x8x8xf32> to vector<2x1x8x8xf32>
    %66 = vector.shape_cast %65 : vector<2x1x8x8xf32> to vector<2x8x8xf32>
    %67 = vector.extract_strided_slice %64 {offsets = [0, 1, 0, 0], sizes = [2, 1, 8, 8], strides = [1, 1, 1, 1]} : vector<2x4x8x8xf32> to vector<2x1x8x8xf32>
    %68 = vector.shape_cast %67 : vector<2x1x8x8xf32> to vector<2x8x8xf32>
    %69 = vector.extract_strided_slice %64 {offsets = [0, 2, 0, 0], sizes = [2, 1, 8, 8], strides = [1, 1, 1, 1]} : vector<2x4x8x8xf32> to vector<2x1x8x8xf32>
    %70 = vector.shape_cast %69 : vector<2x1x8x8xf32> to vector<2x8x8xf32>
    %71 = vector.extract_strided_slice %64 {offsets = [0, 3, 0, 0], sizes = [2, 1, 8, 8], strides = [1, 1, 1, 1]} : vector<2x4x8x8xf32> to vector<2x1x8x8xf32>
    %72 = vector.shape_cast %71 : vector<2x1x8x8xf32> to vector<2x8x8xf32>
    %73 = tpu.concatenate %66, %68, %70, %72 in 2 : vector<2x8x8xf32>, vector<2x8x8xf32>, vector<2x8x8xf32>, vector<2x8x8xf32> -> vector<2x8x32xf32>
    %74 = vector.shape_cast %73 : vector<2x8x32xf32> to vector<16x32xf32>
    %c0_18 = arith.constant 0 : index
    %c0_19 = arith.constant 0 : index
    %75 = vector.load %arg4[%c0_18, %c0_19] : memref<32x32xf32, #tpu.memory_space<vmem>>, vector<32x32xf32>
    %cst_20 = arith.constant dense<0.000000e+00> : vector<16x32xf32>
    %76 = tpu.matmul %74, %75, %cst_20 {dimension_numbers = #tpu.dot_dimension_numbers<[1], [0], [0], [1], [0, 0, 1, 1], [], []>} : vector<16x32xf32>, vector<32x32xf32>, vector<16x32xf32> -> vector<16x32xf32>
    %77 = vector.broadcast %3 : vector<1x32xf32> to vector<16x32xf32>
    %78 = arith.addf %76, %77 : vector<16x32xf32>
    %79 = arith.addf %78, %0 : vector<16x32xf32>
    %cst_21 = arith.constant dense<0.000000e+00> : vector<16xf32>
    %80 = vector.multi_reduction <add>, %79, %cst_21 [1] : vector<16x32xf32> to vector<16xf32>
    %81 = vector.shape_cast %80 : vector<16xf32> to vector<16x1xf32>
    %cst_22 = arith.constant 3.200000e+01 : f32
    %82 = vector.broadcast %cst_22 : f32 to vector<16x1xf32>
    %83 = arith.divf %81, %82 : vector<16x1xf32>
    %84 = vector.broadcast %83 : vector<16x1xf32> to vector<16x32xf32>
    %85 = arith.subf %79, %84 : vector<16x32xf32>
    %86 = arith.mulf %85, %85 : vector<16x32xf32>
    %cst_23 = arith.constant dense<0.000000e+00> : vector<16xf32>
    %87 = vector.multi_reduction <add>, %86, %cst_23 [1] : vector<16x32xf32> to vector<16xf32>
    %88 = vector.shape_cast %87 : vector<16xf32> to vector<16x1xf32>
    %cst_24 = arith.constant 3.200000e+01 : f32
    %89 = vector.broadcast %cst_24 : f32 to vector<16x1xf32>
    %90 = arith.divf %88, %89 : vector<16x1xf32>
    %cst_25 = arith.constant 9.99999996E-13 : f32
    %91 = vector.broadcast %cst_25 : f32 to vector<16x1xf32>
    %92 = arith.addf %90, %91 : vector<16x1xf32>
    %93 = math.rsqrt %92 : vector<16x1xf32>
    %94 = vector.broadcast %93 : vector<16x1xf32> to vector<16x32xf32>
    %95 = arith.mulf %85, %94 : vector<16x32xf32>
    %96 = vector.broadcast %4 : vector<1x32xf32> to vector<16x32xf32>
    %97 = arith.mulf %95, %96 : vector<16x32xf32>
    %98 = vector.broadcast %5 : vector<1x32xf32> to vector<16x32xf32>
    %99 = arith.addf %97, %98 : vector<16x32xf32>
    %c0_26 = arith.constant 0 : index
    %c0_27 = arith.constant 0 : index
    %100 = vector.load %arg5[%c0_26, %c0_27] : memref<32x128xf32, #tpu.memory_space<vmem>>, vector<32x128xf32>
    %cst_28 = arith.constant dense<0.000000e+00> : vector<16x128xf32>
    %101 = tpu.matmul %99, %100, %cst_28 {dimension_numbers = #tpu.dot_dimension_numbers<[1], [0], [0], [1], [0, 0, 1, 1], [], []>} : vector<16x32xf32>, vector<32x128xf32>, vector<16x128xf32> -> vector<16x128xf32>
    %102 = vector.broadcast %6 : vector<1x128xf32> to vector<16x128xf32>
    %103 = arith.addf %101, %102 : vector<16x128xf32>
    %cst_29 = arith.constant 5.000000e-01 : f32
    %104 = vector.broadcast %cst_29 : f32 to vector<16x128xf32>
    %105 = arith.mulf %103, %104 : vector<16x128xf32>
    %cst_30 = arith.constant 0.707106769 : f32
    %106 = vector.broadcast %cst_30 : f32 to vector<16x128xf32>
    %107 = arith.mulf %103, %106 : vector<16x128xf32>
    %cst_31 = arith.constant 0.000000e+00 : f32
    %108 = vector.broadcast %cst_31 : f32 to vector<16x128xf32>
    %109 = arith.cmpf oge, %107, %108 : vector<16x128xf32>
    %cst_32 = arith.constant 1.000000e+00 : f32
    %cst_33 = arith.constant -1.000000e+00 : f32
    %110 = vector.broadcast %cst_32 : f32 to vector<16x128xf32>
    %111 = vector.broadcast %cst_33 : f32 to vector<16x128xf32>
    %112 = arith.select %109, %110, %111 : vector<16x128xi1>, vector<16x128xf32>
    %113 = math.absf %107 : vector<16x128xf32>
    %cst_34 = arith.constant 0.327591091 : f32
    %114 = vector.broadcast %cst_34 : f32 to vector<16x128xf32>
    %115 = arith.mulf %114, %113 : vector<16x128xf32>
    %cst_35 = arith.constant 1.000000e+00 : f32
    %116 = vector.broadcast %cst_35 : f32 to vector<16x128xf32>
    %117 = arith.addf %116, %115 : vector<16x128xf32>
    %118 = tpu.reciprocal %117 {approx = true} : vector<16x128xf32> -> vector<16x128xf32>
    %cst_36 = arith.constant 1.06140542 : f32
    %119 = vector.broadcast %cst_36 : f32 to vector<16x128xf32>
    %120 = arith.mulf %119, %118 : vector<16x128xf32>
    %cst_37 = arith.constant -1.45315206 : f32
    %121 = vector.broadcast %cst_37 : f32 to vector<16x128xf32>
    %122 = arith.addf %120, %121 : vector<16x128xf32>
    %123 = arith.mulf %122, %118 : vector<16x128xf32>
    %cst_38 = arith.constant 1.42141378 : f32
    %124 = vector.broadcast %cst_38 : f32 to vector<16x128xf32>
    %125 = arith.addf %123, %124 : vector<16x128xf32>
    %126 = arith.mulf %125, %118 : vector<16x128xf32>
    %cst_39 = arith.constant -0.284496725 : f32
    %127 = vector.broadcast %cst_39 : f32 to vector<16x128xf32>
    %128 = arith.addf %126, %127 : vector<16x128xf32>
    %129 = arith.mulf %128, %118 : vector<16x128xf32>
    %cst_40 = arith.constant 0.254829586 : f32
    %130 = vector.broadcast %cst_40 : f32 to vector<16x128xf32>
    %131 = arith.addf %129, %130 : vector<16x128xf32>
    %132 = arith.mulf %131, %118 : vector<16x128xf32>
    %cst_41 = arith.constant 0.000000e+00 : f32
    %133 = vector.broadcast %cst_41 : f32 to vector<16x128xf32>
    %134 = arith.subf %133, %113 : vector<16x128xf32>
    %135 = arith.mulf %134, %113 : vector<16x128xf32>
    %136 = math.exp %135 : vector<16x128xf32>
    %137 = arith.mulf %132, %136 : vector<16x128xf32>
    %cst_42 = arith.constant 1.000000e+00 : f32
    %138 = vector.broadcast %cst_42 : f32 to vector<16x128xf32>
    %139 = arith.subf %138, %137 : vector<16x128xf32>
    %140 = arith.mulf %112, %139 : vector<16x128xf32>
    %cst_43 = arith.constant 1.000000e+00 : f32
    %141 = vector.broadcast %cst_43 : f32 to vector<16x128xf32>
    %142 = arith.addf %141, %140 : vector<16x128xf32>
    %143 = arith.mulf %105, %142 : vector<16x128xf32>
    %c0_44 = arith.constant 0 : index
    %c0_45 = arith.constant 0 : index
    %144 = vector.load %arg6[%c0_44, %c0_45] : memref<128x32xf32, #tpu.memory_space<vmem>>, vector<128x32xf32>
    %cst_46 = arith.constant dense<0.000000e+00> : vector<16x32xf32>
    %145 = tpu.matmul %143, %144, %cst_46 {dimension_numbers = #tpu.dot_dimension_numbers<[1], [0], [0], [1], [0, 0, 1, 1], [], []>} : vector<16x128xf32>, vector<128x32xf32>, vector<16x32xf32> -> vector<16x32xf32>
    %146 = vector.broadcast %7 : vector<1x32xf32> to vector<16x32xf32>
    %147 = arith.addf %145, %146 : vector<16x32xf32>
    %148 = arith.addf %147, %99 : vector<16x32xf32>
    %cst_47 = arith.constant dense<0.000000e+00> : vector<16xf32>
    %149 = vector.multi_reduction <add>, %148, %cst_47 [1] : vector<16x32xf32> to vector<16xf32>
    %150 = vector.shape_cast %149 : vector<16xf32> to vector<16x1xf32>
    %cst_48 = arith.constant 3.200000e+01 : f32
    %151 = vector.broadcast %cst_48 : f32 to vector<16x1xf32>
    %152 = arith.divf %150, %151 : vector<16x1xf32>
    %153 = vector.broadcast %152 : vector<16x1xf32> to vector<16x32xf32>
    %154 = arith.subf %148, %153 : vector<16x32xf32>
    %155 = arith.mulf %154, %154 : vector<16x32xf32>
    %cst_49 = arith.constant dense<0.000000e+00> : vector<16xf32>
    %156 = vector.multi_reduction <add>, %155, %cst_49 [1] : vector<16x32xf32> to vector<16xf32>
    %157 = vector.shape_cast %156 : vector<16xf32> to vector<16x1xf32>
    %cst_50 = arith.constant 3.200000e+01 : f32
    %158 = vector.broadcast %cst_50 : f32 to vector<16x1xf32>
    %159 = arith.divf %157, %158 : vector<16x1xf32>
    %cst_51 = arith.constant 9.99999996E-13 : f32
    %160 = vector.broadcast %cst_51 : f32 to vector<16x1xf32>
    %161 = arith.addf %159, %160 : vector<16x1xf32>
    %162 = math.rsqrt %161 : vector<16x1xf32>
    %163 = vector.broadcast %162 : vector<16x1xf32> to vector<16x32xf32>
    %164 = arith.mulf %154, %163 : vector<16x32xf32>
    %165 = vector.broadcast %8 : vector<1x32xf32> to vector<16x32xf32>
    %166 = arith.mulf %164, %165 : vector<16x32xf32>
    %167 = vector.broadcast %9 : vector<1x32xf32> to vector<16x32xf32>
    %168 = arith.addf %166, %167 : vector<16x32xf32>
    %c0_52 = arith.constant 0 : index
    %c0_53 = arith.constant 0 : index
    %169 = vector.load %arg8[%c0_52, %c0_53] : memref<16x32xf32, #tpu.memory_space<vmem>>, vector<16x32xf32>
    tpu.vector_store %arg8[%c0_52, %c0_53], %168 {strides = array<i32>} : memref<16x32xf32, #tpu.memory_space<vmem>>, vector<16x32xf32>,
    return
  }
  func.func @transform_0(%arg0: i32) -> (i32, i32) {
    %c0_i32 = arith.constant 0 : i32
    %c0_i32_0 = arith.constant 0 : i32
    return %arg0, %c0_i32 : i32, i32
  }
  func.func @transform_1(%arg0: i32) -> (i32, i32) {
    %c0_i32 = arith.constant 0 : i32
    %c0_i32_0 = arith.constant 0 : i32
    return %arg0, %c0_i32 : i32, i32
  }
  func.func @transform_2(%arg0: i32) -> (i32, i32) {
    %c0_i32 = arith.constant 0 : i32
    %c0_i32_0 = arith.constant 0 : i32
    %c0_i32_1 = arith.constant 0 : i32
    return %c0_i32, %c0_i32_0 : i32, i32
  }
  func.func @transform_3(%arg0: i32) -> (i32, i32) {
    %c0_i32 = arith.constant 0 : i32
    %c0_i32_0 = arith.constant 0 : i32
    %c0_i32_1 = arith.constant 0 : i32
    return %c0_i32, %c0_i32_0 : i32, i32
  }
  func.func @transform_4(%arg0: i32) -> (i32, i32) {
    %c0_i32 = arith.constant 0 : i32
    %c0_i32_0 = arith.constant 0 : i32
    %c0_i32_1 = arith.constant 0 : i32
    return %c0_i32, %c0_i32_0 : i32, i32
  }
  func.func @transform_5(%arg0: i32) -> (i32, i32) {
    %c0_i32 = arith.constant 0 : i32
    %c0_i32_0 = arith.constant 0 : i32
    %c0_i32_1 = arith.constant 0 : i32
    return %c0_i32, %c0_i32_0 : i32, i32
  }
  func.func @transform_6(%arg0: i32) -> (i32, i32) {
    %c0_i32 = arith.constant 0 : i32
    %c0_i32_0 = arith.constant 0 : i32
    %c0_i32_1 = arith.constant 0 : i32
    return %c0_i32, %c0_i32_0 : i32, i32
  }
  func.func @transform_7(%arg0: i32) -> (i32, i32) {
    %c0_i32 = arith.constant 0 : i32
    %c0_i32_0 = arith.constant 0 : i32
    return %arg0, %c0_i32 : i32, i32
  }
}

module attributes {stable_mosaic.version = 11 : i64} {
  func.func @bert_layer_kernel(%arg0: i32, %arg1: memref<16x32xf32, #tpu.memory_space<vmem>>, %arg2: memref<16x8xf32, #tpu.memory_space<vmem>>, %arg3: memref<32x96xf32, #tpu.memory_space<vmem>>, %arg4: memref<32x32xf32, #tpu.memory_space<vmem>>, %arg5: memref<32x128xf32, #tpu.memory_space<vmem>>, %arg6: memref<128x32xf32, #tpu.memory_space<vmem>>, %arg7: memref<8x128xf32, #tpu.memory_space<vmem>>, %arg8: memref<16x32xf32, #tpu.memory_space<vmem>>) attributes {dimension_semantics = [#tpu.dimension_semantics<parallel>], iteration_bounds = array<i64: 1>, scalar_prefetch = 0 : i64, scratch_operands = 0 : i64, tpu.core_type = #tpu.core_type<tc>, window_params = [{transform_indices = @transform_0, window_bounds = array<i64: 16, 32>}, {transform_indices = @transform_1, window_bounds = array<i64: 16, 8>}, {pipeline_mode = #tpu.pipeline_mode<synchronous>, transform_indices = @transform_2, window_bounds = array<i64: 32, 96>}, {pipeline_mode = #tpu.pipeline_mode<synchronous>, transform_indices = @transform_3, window_bounds = array<i64: 32, 32>}, {pipeline_mode = #tpu.pipeline_mode<synchronous>, transform_indices = @transform_4, window_bounds = array<i64: 32, 128>}, {pipeline_mode = #tpu.pipeline_mode<synchronous>, transform_indices = @transform_5, window_bounds = array<i64: 128, 32>}, {pipeline_mode = #tpu.pipeline_mode<synchronous>, transform_indices = @transform_6, window_bounds = array<i64: 8, 128>}, {transform_indices = @transform_7, window_bounds = array<i64: 16, 32>}]} {
    %c0 = arith.constant 0 : index
    %c0_0 = arith.constant 0 : index
    %0 = vector.load %arg1[%c0, %c0_0] : memref<16x32xf32, #tpu.memory_space<vmem>>, vector<16x32xf32>
    %c0_1 = arith.constant 0 : index
    %c0_2 = arith.constant 0 : index
    %1 = vector.load %arg2[%c0_1, %c0_2] : memref<16x8xf32, #tpu.memory_space<vmem>>, vector<16x8xf32>
    %c0_3 = arith.constant 0 : index
    %c0_4 = arith.constant 0 : index
    %2 = vector.load %arg7[%c0_3, %c0_4] : memref<8x128xf32, #tpu.memory_space<vmem>>, vector<1x96xf32>
    %c1 = arith.constant 1 : index
    %c0_5 = arith.constant 0 : index
    %3 = vector.load %arg7[%c1, %c0_5] : memref<8x128xf32, #tpu.memory_space<vmem>>, vector<1x32xf32>
    %c2 = arith.constant 2 : index
    %c0_6 = arith.constant 0 : index
    %4 = vector.load %arg7[%c2, %c0_6] : memref<8x128xf32, #tpu.memory_space<vmem>>, vector<1x32xf32>
    %c3 = arith.constant 3 : index
    %c0_7 = arith.constant 0 : index
    %5 = vector.load %arg7[%c3, %c0_7] : memref<8x128xf32, #tpu.memory_space<vmem>>, vector<1x32xf32>
    %c4 = arith.constant 4 : index
    %c0_8 = arith.constant 0 : index
    %6 = vector.load %arg7[%c4, %c0_8] : memref<8x128xf32, #tpu.memory_space<vmem>>, vector<1x128xf32>
    %c5 = arith.constant 5 : index
    %c0_9 = arith.constant 0 : index
    %7 = vector.load %arg7[%c5, %c0_9] : memref<8x128xf32, #tpu.memory_space<vmem>>, vector<1x32xf32>
    %c6 = arith.constant 6 : index
    %c0_10 = arith.constant 0 : index
    %8 = vector.load %arg7[%c6, %c0_10] : memref<8x128xf32, #tpu.memory_space<vmem>>, vector<1x32xf32>
    %c7 = arith.constant 7 : index
    %c0_11 = arith.constant 0 : index
    %9 = vector.load %arg7[%c7, %c0_11] : memref<8x128xf32, #tpu.memory_space<vmem>>, vector<1x32xf32>
    %c0_12 = arith.constant 0 : index
    %c0_13 = arith.constant 0 : index
    %10 = vector.load %arg3[%c0_12, %c0_13] : memref<32x96xf32, #tpu.memory_space<vmem>>, vector<32x96xf32>
    %cst = arith.constant dense<0.000000e+00> : vector<16x96xf32>
    %11 = tpu.matmul %0, %10, %cst {dimension_numbers = #tpu.dot_dimension_numbers<[1], [0], [0], [1], [0, 0, 1, 1], [], []>} : vector<16x32xf32>, vector<32x96xf32>, vector<16x96xf32> -> vector<16x96xf32>
    %12 = vector.broadcast %2 : vector<1x96xf32> to vector<16x96xf32>
    %13 = arith.addf %11, %12 : vector<16x96xf32>
    %14 = vector.extract_strided_slice %13 {offsets = [0, 0], sizes = [16, 32], strides = [1, 1]} : vector<16x96xf32> to vector<16x32xf32>
    %15 = vector.extract_strided_slice %14 {offsets = [0, 0], sizes = [16, 8], strides = [1, 1]} : vector<16x32xf32> to vector<16x8xf32>
    %16 = vector.shape_cast %15 : vector<16x8xf32> to vector<2x1x8x8xf32>
    %17 = vector.extract_strided_slice %14 {offsets = [0, 8], sizes = [16, 8], strides = [1, 1]} : vector<16x32xf32> to vector<16x8xf32>
    %18 = vector.shape_cast %17 : vector<16x8xf32> to vector<2x1x8x8xf32>
    %19 = vector.extract_strided_slice %14 {offsets = [0, 16], sizes = [16, 8], strides = [1, 1]} : vector<16x32xf32> to vector<16x8xf32>
    %20 = vector.shape_cast %19 : vector<16x8xf32> to vector<2x1x8x8xf32>
    %21 = vector.extract_strided_slice %14 {offsets = [0, 24], sizes = [16, 8], strides = [1, 1]} : vector<16x32xf32> to vector<16x8xf32>
    %22 = vector.shape_cast %21 : vector<16x8xf32> to vector<2x1x8x8xf32>
    %23 = tpu.concatenate %16, %18, %20, %22 in 1 : vector<2x1x8x8xf32>, vector<2x1x8x8xf32>, vector<2x1x8x8xf32>, vector<2x1x8x8xf32> -> vector<2x4x8x8xf32>
    %24 = vector.shape_cast %23 : vector<2x4x8x8xf32> to vector<8x8x8xf32>
    %25 = vector.extract_strided_slice %13 {offsets = [0, 32], sizes = [16, 32], strides = [1, 1]} : vector<16x96xf32> to vector<16x32xf32>
    %26 = vector.extract_strided_slice %25 {offsets = [0, 0], sizes = [16, 8], strides = [1, 1]} : vector<16x32xf32> to vector<16x8xf32>
    %27 = vector.shape_cast %26 : vector<16x8xf32> to vector<2x1x8x8xf32>
    %28 = vector.extract_strided_slice %25 {offsets = [0, 8], sizes = [16, 8], strides = [1, 1]} : vector<16x32xf32> to vector<16x8xf32>
    %29 = vector.shape_cast %28 : vector<16x8xf32> to vector<2x1x8x8xf32>
    %30 = vector.extract_strided_slice %25 {offsets = [0, 16], sizes = [16, 8], strides = [1, 1]} : vector<16x32xf32> to vector<16x8xf32>
    %31 = vector.shape_cast %30 : vector<16x8xf32> to vector<2x1x8x8xf32>
    %32 = vector.extract_strided_slice %25 {offsets = [0, 24], sizes = [16, 8], strides = [1, 1]} : vector<16x32xf32> to vector<16x8xf32>
    %33 = vector.shape_cast %32 : vector<16x8xf32> to vector<2x1x8x8xf32>
    %34 = tpu.concatenate %27, %29, %31, %33 in 1 : vector<2x1x8x8xf32>, vector<2x1x8x8xf32>, vector<2x1x8x8xf32>, vector<2x1x8x8xf32> -> vector<2x4x8x8xf32>
    %35 = vector.shape_cast %34 : vector<2x4x8x8xf32> to vector<8x8x8xf32>
    %36 = vector.extract_strided_slice %13 {offsets = [0, 64], sizes = [16, 32], strides = [1, 1]} : vector<16x96xf32> to vector<16x32xf32>
    %37 = vector.extract_strided_slice %36 {offsets = [0, 0], sizes = [16, 8], strides = [1, 1]} : vector<16x32xf32> to vector<16x8xf32>
    %38 = vector.shape_cast %37 : vector<16x8xf32> to vector<2x1x8x8xf32>
    %39 = vector.extract_strided_slice %36 {offsets = [0, 8], sizes = [16, 8], strides = [1, 1]} : vector<16x32xf32> to vector<16x8xf32>
    %40 = vector.shape_cast %39 : vector<16x8xf32> to vector<2x1x8x8xf32>
    %41 = vector.extract_strided_slice %36 {offsets = [0, 16], sizes = [16, 8], strides = [1, 1]} : vector<16x32xf32> to vector<16x8xf32>
    %42 = vector.shape_cast %41 : vector<16x8xf32> to vector<2x1x8x8xf32>
    %43 = vector.extract_strided_slice %36 {offsets = [0, 24], sizes = [16, 8], strides = [1, 1]} : vector<16x32xf32> to vector<16x8xf32>
    %44 = vector.shape_cast %43 : vector<16x8xf32> to vector<2x1x8x8xf32>
    %45 = tpu.concatenate %38, %40, %42, %44 in 1 : vector<2x1x8x8xf32>, vector<2x1x8x8xf32>, vector<2x1x8x8xf32>, vector<2x1x8x8xf32> -> vector<2x4x8x8xf32>
    %46 = vector.shape_cast %45 : vector<2x4x8x8xf32> to vector<8x8x8xf32>
    "tpu.trace_start"() <{level = 10 : i32, message = "bqd,bkd->bqk"}> : () -> ()
    %cst_14 = arith.constant dense<0.000000e+00> : vector<8x8x8xf32>
    %47 = tpu.matmul %24, %35, %cst_14 {dimension_numbers = #tpu.dot_dimension_numbers<[2], [2], [1], [1], [0, 0, 0, 1, 1, 1], [0], [0]>} : vector<8x8x8xf32>, vector<8x8x8xf32>, vector<8x8x8xf32> -> vector<8x8x8xf32>
    "tpu.trace_stop"() : () -> ()
    %48 = vector.shape_cast %1 : vector<16x8xf32> to vector<2x1x8x8xf32>
    %49 = vector.shape_cast %48 : vector<2x1x8x8xf32> to vector<2x1x8x8xf32>
    %50 = vector.broadcast %49 : vector<2x1x8x8xf32> to vector<2x4x8x8xf32>
    %51 = vector.shape_cast %50 : vector<2x4x8x8xf32> to vector<8x8x8xf32>
    %52 = arith.addf %47, %51 : vector<8x8x8xf32>
    %cst_15 = arith.constant dense<0xFF800000> : vector<8x8xf32>
    %53 = vector.multi_reduction <maximumf>, %52, %cst_15 [2] : vector<8x8x8xf32> to vector<8x8xf32>
    %54 = vector.shape_cast %53 : vector<8x8xf32> to vector<8x8x1xf32>
    %55 = vector.broadcast %54 : vector<8x8x1xf32> to vector<8x8x8xf32>
    %56 = arith.subf %52, %55 : vector<8x8x8xf32>
    %57 = math.exp %56 : vector<8x8x8xf32>
    %cst_16 = arith.constant dense<0.000000e+00> : vector<8x8xf32>
    %58 = vector.multi_reduction <add>, %57, %cst_16 [2] : vector<8x8x8xf32> to vector<8x8xf32>
    %59 = vector.shape_cast %58 : vector<8x8xf32> to vector<8x8x1xf32>
    %60 = tpu.reciprocal %59 {approx = true} : vector<8x8x1xf32> -> vector<8x8x1xf32>
    %61 = vector.broadcast %60 : vector<8x8x1xf32> to vector<8x8x8xf32>
    %62 = arith.mulf %57, %61 : vector<8x8x8xf32>
    "tpu.trace_start"() <{level = 10 : i32, message = "bqk,bkd->bqd"}> : () -> ()
    %cst_17 = arith.constant dense<0.000000e+00> : vector<8x8x8xf32>
    %63 = tpu.matmul %62, %46, %cst_17 {dimension_numbers = #tpu.dot_dimension_numbers<[2], [1], [1], [2], [0, 0, 0, 1, 1, 2], [0], [0]>} : vector<8x8x8xf32>, vector<8x8x8xf32>, vector<8x8x8xf32> -> vector<8x8x8xf32>
    "tpu.trace_stop"() : () -> ()
    %64 = vector.shape_cast %63 : vector<8x8x8xf32> to vector<2x4x8x8xf32>
    %65 = vector.extract_strided_slice %64 {offsets = [0, 0, 0, 0], sizes = [2, 1, 8, 8], strides = [1, 1, 1, 1]} : vector<2x4x8x8xf32> to vector<2x1x8x8xf32>
    %66 = vector.shape_cast %65 : vector<2x1x8x8xf32> to vector<2x8x8xf32>
    %67 = vector.extract_strided_slice %64 {offsets = [0, 1, 0, 0], sizes = [2, 1, 8, 8], strides = [1, 1, 1, 1]} : vector<2x4x8x8xf32> to vector<2x1x8x8xf32>
    %68 = vector.shape_cast %67 : vector<2x1x8x8xf32> to vector<2x8x8xf32>
    %69 = vector.extract_strided_slice %64 {offsets = [0, 2, 0, 0], sizes = [2, 1, 8, 8], strides = [1, 1, 1, 1]} : vector<2x4x8x8xf32> to vector<2x1x8x8xf32>
    %70 = vector.shape_cast %69 : vector<2x1x8x8xf32> to vector<2x8x8xf32>
    %71 = vector.extract_strided_slice %64 {offsets = [0, 3, 0, 0], sizes = [2, 1, 8, 8], strides = [1, 1, 1, 1]} : vector<2x4x8x8xf32> to vector<2x1x8x8xf32>
    %72 = vector.shape_cast %71 : vector<2x1x8x8xf32> to vector<2x8x8xf32>
    %73 = tpu.concatenate %66, %68, %70, %72 in 2 : vector<2x8x8xf32>, vector<2x8x8xf32>, vector<2x8x8xf32>, vector<2x8x8xf32> -> vector<2x8x32xf32>
    %74 = vector.shape_cast %73 : vector<2x8x32xf32> to vector<16x32xf32>
    %c0_18 = arith.constant 0 : index
    %c0_19 = arith.constant 0 : index
    %75 = vector.load %arg4[%c0_18, %c0_19] : memref<32x32xf32, #tpu.memory_space<vmem>>, vector<32x32xf32>
    %cst_20 = arith.constant dense<0.000000e+00> : vector<16x32xf32>
    %76 = tpu.matmul %74, %75, %cst_20 {dimension_numbers = #tpu.dot_dimension_numbers<[1], [0], [0], [1], [0, 0, 1, 1], [], []>} : vector<16x32xf32>, vector<32x32xf32>, vector<16x32xf32> -> vector<16x32xf32>
    %77 = vector.broadcast %3 : vector<1x32xf32> to vector<16x32xf32>
    %78 = arith.addf %76, %77 : vector<16x32xf32>
    %79 = arith.addf %78, %0 : vector<16x32xf32>
    %cst_21 = arith.constant dense<0.000000e+00> : vector<16xf32>
    %80 = vector.multi_reduction <add>, %79, %cst_21 [1] : vector<16x32xf32> to vector<16xf32>
    %81 = vector.shape_cast %80 : vector<16xf32> to vector<16x1xf32>
    %cst_22 = arith.constant 3.200000e+01 : f32
    %82 = vector.broadcast %cst_22 : f32 to vector<16x1xf32>
    %83 = arith.divf %81, %82 : vector<16x1xf32>
    %84 = vector.broadcast %83 : vector<16x1xf32> to vector<16x32xf32>
    %85 = arith.subf %79, %84 : vector<16x32xf32>
    %86 = arith.mulf %85, %85 : vector<16x32xf32>
    %cst_23 = arith.constant dense<0.000000e+00> : vector<16xf32>
    %87 = vector.multi_reduction <add>, %86, %cst_23 [1] : vector<16x32xf32> to vector<16xf32>
    %88 = vector.shape_cast %87 : vector<16xf32> to vector<16x1xf32>
    %cst_24 = arith.constant 3.200000e+01 : f32
    %89 = vector.broadcast %cst_24 : f32 to vector<16x1xf32>
    %90 = arith.divf %88, %89 : vector<16x1xf32>
    %cst_25 = arith.constant 9.99999996E-13 : f32
    %91 = vector.broadcast %cst_25 : f32 to vector<16x1xf32>
    %92 = arith.addf %90, %91 : vector<16x1xf32>
    %93 = math.rsqrt %92 : vector<16x1xf32>
    %94 = vector.broadcast %93 : vector<16x1xf32> to vector<16x32xf32>
    %95 = arith.mulf %85, %94 : vector<16x32xf32>
    %96 = vector.broadcast %4 : vector<1x32xf32> to vector<16x32xf32>
    %97 = arith.mulf %95, %96 : vector<16x32xf32>
    %98 = vector.broadcast %5 : vector<1x32xf32> to vector<16x32xf32>
    %99 = arith.addf %97, %98 : vector<16x32xf32>
    %c0_26 = arith.constant 0 : index
    %c0_27 = arith.constant 0 : index
    %100 = vector.load %arg5[%c0_26, %c0_27] : memref<32x128xf32, #tpu.memory_space<vmem>>, vector<32x128xf32>
    %cst_28 = arith.constant dense<0.000000e+00> : vector<16x128xf32>
    %101 = tpu.matmul %99, %100, %cst_28 {dimension_numbers = #tpu.dot_dimension_numbers<[1], [0], [0], [1], [0, 0, 1, 1], [], []>} : vector<16x32xf32>, vector<32x128xf32>, vector<16x128xf32> -> vector<16x128xf32>
    %102 = vector.broadcast %6 : vector<1x128xf32> to vector<16x128xf32>
    %103 = arith.addf %101, %102 : vector<16x128xf32>
    %cst_29 = arith.constant 5.000000e-01 : f32
    %104 = vector.broadcast %cst_29 : f32 to vector<16x128xf32>
    %105 = arith.mulf %103, %104 : vector<16x128xf32>
    %cst_30 = arith.constant 0.707106769 : f32
    %106 = vector.broadcast %cst_30 : f32 to vector<16x128xf32>
    %107 = arith.mulf %103, %106 : vector<16x128xf32>
    %cst_31 = arith.constant 0.000000e+00 : f32
    %108 = vector.broadcast %cst_31 : f32 to vector<16x128xf32>
    %109 = arith.cmpf oge, %107, %108 : vector<16x128xf32>
    %cst_32 = arith.constant 1.000000e+00 : f32
    %cst_33 = arith.constant -1.000000e+00 : f32
    %110 = vector.broadcast %cst_32 : f32 to vector<16x128xf32>
    %111 = vector.broadcast %cst_33 : f32 to vector<16x128xf32>
    %112 = arith.select %109, %110, %111 : vector<16x128xi1>, vector<16x128xf32>
    %113 = math.absf %107 : vector<16x128xf32>
    %cst_34 = arith.constant 0.327591091 : f32
    %114 = vector.broadcast %cst_34 : f32 to vector<16x128xf32>
    %115 = arith.mulf %114, %113 : vector<16x128xf32>
    %cst_35 = arith.constant 1.000000e+00 : f32
    %116 = vector.broadcast %cst_35 : f32 to vector<16x128xf32>
    %117 = arith.addf %116, %115 : vector<16x128xf32>
    %118 = tpu.reciprocal %117 {approx = true} : vector<16x128xf32> -> vector<16x128xf32>
    %cst_36 = arith.constant 1.06140542 : f32
    %119 = vector.broadcast %cst_36 : f32 to vector<16x128xf32>
    %120 = arith.mulf %119, %118 : vector<16x128xf32>
    %cst_37 = arith.constant -1.45315206 : f32
    %121 = vector.broadcast %cst_37 : f32 to vector<16x128xf32>
    %122 = arith.addf %120, %121 : vector<16x128xf32>
    %123 = arith.mulf %122, %118 : vector<16x128xf32>
    %cst_38 = arith.constant 1.42141378 : f32
    %124 = vector.broadcast %cst_38 : f32 to vector<16x128xf32>
    %125 = arith.addf %123, %124 : vector<16x128xf32>
    %126 = arith.mulf %125, %118 : vector<16x128xf32>
    %cst_39 = arith.constant -0.284496725 : f32
    %127 = vector.broadcast %cst_39 : f32 to vector<16x128xf32>
    %128 = arith.addf %126, %127 : vector<16x128xf32>
    %129 = arith.mulf %128, %118 : vector<16x128xf32>
    %cst_40 = arith.constant 0.254829586 : f32
    %130 = vector.broadcast %cst_40 : f32 to vector<16x128xf32>
    %131 = arith.addf %129, %130 : vector<16x128xf32>
    %132 = arith.mulf %131, %118 : vector<16x128xf32>
    %cst_41 = arith.constant 0.000000e+00 : f32
    %133 = vector.broadcast %cst_41 : f32 to vector<16x128xf32>
    %134 = arith.subf %133, %113 : vector<16x128xf32>
    %135 = arith.mulf %134, %113 : vector<16x128xf32>
    %136 = math.exp %135 : vector<16x128xf32>
    %137 = arith.mulf %132, %136 : vector<16x128xf32>
    %cst_42 = arith.constant 1.000000e+00 : f32
    %138 = vector.broadcast %cst_42 : f32 to vector<16x128xf32>
    %139 = arith.subf %138, %137 : vector<16x128xf32>
    %140 = arith.mulf %112, %139 : vector<16x128xf32>
    %cst_43 = arith.constant 1.000000e+00 : f32
    %141 = vector.broadcast %cst_43 : f32 to vector<16x128xf32>
    %142 = arith.addf %141, %140 : vector<16x128xf32>
    %143 = arith.mulf %105, %142 : vector<16x128xf32>
    %c0_44 = arith.constant 0 : index
    %c0_45 = arith.constant 0 : index
    %144 = vector.load %arg6[%c0_44, %c0_45] : memref<128x32xf32, #tpu.memory_space<vmem>>, vector<128x32xf32>
    %cst_46 = arith.constant dense<0.000000e+00> : vector<16x32xf32>
    %145 = tpu.matmul %143, %144, %cst_46 {dimension_numbers = #tpu.dot_dimension_numbers<[1], [0], [0], [1], [0, 0, 1, 1], [], []>} : vector<16x128xf32>, vector<128x32xf32>, vector<16x32xf32> -> vector<16x32xf32>
    %146 = vector.broadcast %7 : vector<1x32xf32> to vector<16x32xf32>
    %147 = arith.addf %145, %146 : vector<16x32xf32>
    %148 = arith.addf %147, %99 : vector<16x32xf32>
    %cst_47 = arith.constant dense<0.000000e+00> : vector<16xf32>
    %149 = vector.multi_reduction <add>, %148, %cst_47 [1] : vector<16x32xf32> to vector<16xf32>
    %150 = vector.shape_cast %149 : vector<16xf32> to vector<16x1xf32>
    %cst_48 = arith.constant 3.200000e+01 : f32
    %151 = vector.broadcast %cst_48 : f32 to vector<16x1xf32>
    %152 = arith.divf %150, %151 : vector<16x1xf32>
    %153 = vector.broadcast %152 : vector<16x1xf32> to vector<16x32xf32>
    %154 = arith.subf %148, %153 : vector<16x32xf32>
    %155 = arith.mulf %154, %154 : vector<16x32xf32>
    %cst_49 = arith.constant dense<0.000000e+00> : vector<16xf32>
    %156 = vector.multi_reduction <add>, %155, %cst_49 [1] : vector<16x32xf32> to vector<16xf32>
    %157 = vector.shape_cast %156 : vector<16xf32> to vector<16x1xf32>
    %cst_50 = arith.constant 3.200000e+01 : f32
    %158 = vector.broadcast %cst_50 : f32 to vector<16x1xf32>
    %159 = arith.divf %157, %158 : vector<16x1xf32>
    %cst_51 = arith.constant 9.99999996E-13 : f32
    %160 = vector.broadcast %cst_51 : f32 to vector<16x1xf32>
    %161 = arith.addf %159, %160 : vector<16x1xf32>
    %162 = math.rsqrt %161 : vector<16x1xf32>
    %163 = vector.broadcast %162 : vector<16x1xf32> to vector<16x32xf32>
    %164 = arith.mulf %154, %163 : vector<16x32xf32>
    %165 = vector.broadcast %8 : vector<1x32xf32> to vector<16x32xf32>
    %166 = arith.mulf %164, %165 : vector<16x32xf32>
    %167 = vector.broadcast %9 : vector<1x32xf32> to vector<16x32xf32>
    %168 = arith.addf %166, %167 : vector<16x32xf32>
    %c0_52 = arith.constant 0 : index
    %c0_53 = arith.constant 0 : index
    %169 = vector.load %arg8[%c0_52, %c0_53] : memref<16x32xf32, #tpu.memory_space<vmem>>, vector<16x32xf32>
    tpu.vector_store %arg8[%c0_52, %c0_53], %168 {strides = array<i32>} : memref<16x32xf32, #tpu.memory_space<vmem>>, vector<16x32xf32>,
    return
  }
  func.func @transform_0(%arg0: i32) -> (i32, i32) {
    %c0_i32 = arith.constant 0 : i32
    %c0_i32_0 = arith.constant 0 : i32
    return %arg0, %c0_i32 : i32, i32
  }
  func.func @transform_1(%arg0: i32) -> (i32, i32) {
    %c0_i32 = arith.constant 0 : i32
    %c0_i32_0 = arith.constant 0 : i32
    return %arg0, %c0_i32 : i32, i32
  }
  func.func @transform_2(%arg0: i32) -> (i32, i32) {
    %c0_i32 = arith.constant 0 : i32
    %c0_i32_0 = arith.constant 0 : i32
    %c0_i32_1 = arith.constant 0 : i32
    return %c0_i32, %c0_i32_0 : i32, i32
  }
  func.func @transform_3(%arg0: i32) -> (i32, i32) {
    %c0_i32 = arith.constant 0 : i32
    %c0_i32_0 = arith.constant 0 : i32
    %c0_i32_1 = arith.constant 0 : i32
    return %c0_i32, %c0_i32_0 : i32, i32
  }
  func.func @transform_4(%arg0: i32) -> (i32, i32) {
    %c0_i32 = arith.constant 0 : i32
    %c0_i32_0 = arith.constant 0 : i32
    %c0_i32_1 = arith.constant 0 : i32
    return %c0_i32, %c0_i32_0 : i32, i32
  }
  func.func @transform_5(%arg0: i32) -> (i32, i32) {
    %c0_i32 = arith.constant 0 : i32
    %c0_i32_0 = arith.constant 0 : i32
    %c0_i32_1 = arith.constant 0 : i32
    return %c0_i32, %c0_i32_0 : i32, i32
  }
  func.func @transform_6(%arg0: i32) -> (i32, i32) {
    %c0_i32 = arith.constant 0 : i32
    %c0_i32_0 = arith.constant 0 : i32
    %c0_i32_1 = arith.constant 0 : i32
    return %c0_i32, %c0_i32_0 : i32, i32
  }
  func.func @transform_7(%arg0: i32) -> (i32, i32) {
    %c0_i32 = arith.constant 0 : i32
    %c0_i32_0 = arith.constant 0 : i32
    return %arg0, %c0_i32 : i32, i32
  }
}

</mosaic_0001>

<llo_original>
// kernel: bert_encoder.2
$region0: #{bert_encoder.2}
  #allocation0 [shape = 'u32[]', space=smem, size = 0x4, offset = 0x4, fixed_abs, tag = 'smem constant byte address 0x4 - core index']
  #allocation1 [shape = 'u32[144,128]{1,0:T(1,128)}', space=vmem, size = 0x12000, scoped, tag = 'internal scratch']
  %s0 = inlined_call_operand.vmem [shape: f32[16,32], index: 0, kind: input, shape index: {}]
  %s1 = inlined_call_operand.vmem [shape: f32[16,8], index: 1, kind: input, shape index: {}]
  %s2 = inlined_call_operand.vmem [shape: f32[32,96], index: 2, kind: input, shape index: {}]
  %s3 = inlined_call_operand.vmem [shape: f32[32,32], index: 3, kind: input, shape index: {}]
  %s4 = inlined_call_operand.vmem [shape: f32[32,128], index: 4, kind: input, shape index: {}]
  %s5 = inlined_call_operand.vmem [shape: f32[128,32], index: 5, kind: input, shape index: {}]
  %s6 = inlined_call_operand.vmem [shape: f32[8,128], index: 6, kind: input, shape index: {}]
  %s7 = inlined_call_operand.vmem [shape: f32[16,32], index: 7, kind: output, shape index: {}]
  %s8 = sld [smem:[#allocation0]]
  $region38: #{bert_encoder.2} parent=0
    _
  %s10 = ssub.s32 1, %s8
  %s11 = scalar_select 0, %s10, %s8
  // Predicated region
  $region2: #{bert_encoder.2} parent=0 // pred_check
    _
  $region3: #{bert_encoder.2} parent=0 // pred_check_branch
    %13 = sbr.rel (0) target = $region5
  $region4: #{bert_encoder.2} parent=0 // pred_region
    _
  $region5: #{bert_encoder.2} parent=0 // pred_fallthru
    _
  // Predicated region
  $region6: #{bert_encoder.2} parent=0 // pred_check
    _
  $region7: #{bert_encoder.2} parent=0 // pred_check_branch
    %15 = sbr.rel (0) target = $region9
  $region8: #{bert_encoder.2} parent=0 // pred_region
    _
  $region9: #{bert_encoder.2} parent=0 // pred_fallthru
    _
  // Predicated region
  $region10: #{bert_encoder.2} parent=0 // pred_check
    _
  $region11: #{bert_encoder.2} parent=0 // pred_check_branch
    %17 = sbr.rel (0) target = $region13
  $region12: #{bert_encoder.2} parent=0 // pred_region
    _
  $region13: #{bert_encoder.2} parent=0 // pred_fallthru
    _
  // Predicated region
  $region14: #{bert_encoder.2} parent=0 // pred_check
    _
  $region15: #{bert_encoder.2} parent=0 // pred_check_branch
    %19 = sbr.rel (0) target = $region17
  $region16: #{bert_encoder.2} parent=0 // pred_region
    _
  $region17: #{bert_encoder.2} parent=0 // pred_fallthru
    _
  // Predicated region
  $region18: #{bert_encoder.2} parent=0 // pred_check
    _
  $region19: #{bert_encoder.2} parent=0 // pred_check_branch
    %21 = sbr.rel (0) target = $region21
  $region20: #{bert_encoder.2} parent=0 // pred_region
    _
  $region21: #{bert_encoder.2} parent=0 // pred_fallthru
    _
  // Predicated region
  $region22: #{bert_encoder.2} parent=0 // pred_check
    _
  $region23: #{bert_encoder.2} parent=0 // pred_check_branch
    %23 = sbr.rel (0) target = $region25
  $region24: #{bert_encoder.2} parent=0 // pred_region
    _
  $region25: #{bert_encoder.2} parent=0 // pred_fallthru
    _
  // Predicated region
  $region26: #{bert_encoder.2} parent=0 // pred_check
    _
  $region27: #{bert_encoder.2} parent=0 // pred_check_branch
    %25 = sbr.rel (0) target = $region29
  $region28: #{bert_encoder.2} parent=0 // pred_region
    _
  $region29: #{bert_encoder.2} parent=0 // pred_fallthru
    _
  %v26 = vld [vmem:[%s0] sm:$0xff]
  %v27 = vld [vmem:[%s0 + $0x8] sm:$0xff]
  %v28 = vld [vmem:[%s1] sm:$0xff]
  %v29 = vld [vmem:[%s1 + $0x8] sm:$0xff]
  %v30 = vld [vmem:[%s6] sm:$0x1]
  %v31 = vld [vmem:[%s6 + $0x1] sm:$0x1]
  %v32 = vld [vmem:[%s6 + $0x2] sm:$0x1]
  %v33 = vld [vmem:[%s6 + $0x3] sm:$0x1]
  %v34 = vld [vmem:[%s6 + $0x4] sm:$0x1]
  %v35 = vld [vmem:[%s6 + $0x5] sm:$0x1]
  %v36 = vld [vmem:[%s6 + $0x6] sm:$0x1]
  %v37 = vld [vmem:[%s6 + $0x7] sm:$0x1]
  %v38 = vld [vmem:[%s2] sm:$0xff]
  %v39 = vld [vmem:[%s2 + $0x8] sm:$0xff]
  %v40 = vld [vmem:[%s2 + $0x10] sm:$0xff]
  %v41 = vld [vmem:[%s2 + $0x18] sm:$0xff]
  %v42 = vlaneseq
  %v43 = vshrl.u32 %v42, 7
  %v44 = vsub.s32 0, %v43
  %v45 = vrot.slane %v30, %v44
  %vm46 = vcmask 261120
  %v48 = vsel %vm46, %v26, 0
  %v51 = vsel %vm46, %v27, 0
  %53 = vmatprep.subr.mxu0 0.0
  %54 = vmatpush1.msra.mxu0 %v38
  %55 = vmatprep.subr.mxu0 0.0
  %56 = vmatpush1.msra.mxu0 %v39
  %57 = vmatprep.subr.mxu0 0.0
  %58 = vmatpush1.msra.mxu0 %v40
  %59 = vmatprep.subr.mxu0 0.0
  %60 = vmatpush1.msra.mxu0 %v41
  %61 = vmatprep.subr.mxu0 0.0
  %62 = vmatpush1.msra.mxu0 0.0
  %63 = vmatprep.subr.mxu0 0.0
  %64 = vmatpush1.msra.mxu0 0.0
  %65 = vmatprep.subr.mxu0 0.0
  %66 = vmatpush1.msra.mxu0 0.0
  %67 = vmatprep.subr.mxu0 0.0
  %68 = vmatpush1.msra.mxu0 0.0
  %69 = vmatprep.subr.mxu0 0.0
  %70 = vmatpush1.msra.mxu0 0.0
  %71 = vmatprep.subr.mxu0 0.0
  %72 = vmatpush1.msra.mxu0 0.0
  %73 = vmatprep.subr.mxu0 0.0
  %74 = vmatpush1.msra.mxu0 0.0
  %75 = vmatprep.subr.mxu0 0.0
  %76 = vmatpush1.msra.mxu0 0.0
  %77 = vmatprep.subr.mxu0 0.0
  %78 = vmatpush1.msra.mxu0 0.0
  %79 = vmatprep.subr.mxu0 0.0
  %80 = vmatpush1.msra.mxu0 0.0
  %81 = vmatprep.subr.mxu0 0.0
  %82 = vmatpush1.msra.mxu0 0.0
  %83 = vmatprep.subr.mxu0 0.0
  %84 = vmatpush1.msra.mxu0 0.0
  %85 = vmatprep.subr.mxu0 0.0
  %86 = vmatpush1.msra.mxu0 0.0
  %87 = vmatprep.subr.mxu0 0.0
  %88 = vmatpush1.msra.mxu0 0.0
  %89 = vmatprep.subr.mxu0 0.0
  %90 = vmatpush1.msra.mxu0 0.0
  %91 = vmatprep.subr.mxu0 0.0
  %92 = vmatpush1.msra.mxu0 0.0
  %93 = vmatprep.subr.mxu0 0.0
  %94 = vmatpush1.msra.mxu0 0.0
  %95 = vmatprep.subr.mxu0 0.0
  %96 = vmatpush1.msra.mxu0 0.0
  %97 = vmatprep.subr.mxu0 0.0
  %98 = vmatpush1.msra.mxu0 0.0
  %99 = vmatprep.subr.mxu0 0.0
  %100 = vmatpush1.msra.mxu0 0.0
  %101 = vmatprep.subr.mxu0 0.0
  %102 = vmatpush1.msra.mxu0 0.0
  %103 = vmatprep.subr.mxu0 0.0
  %104 = vmatpush1.msra.mxu0 0.0
  %105 = vmatprep.subr.mxu0 0.0
  %106 = vmatpush1.msra.mxu0 0.0
  %107 = vmatprep.subr.mxu0 0.0
  %108 = vmatpush1.msra.mxu0 0.0
  %109 = vmatprep.subr.mxu0 0.0
  %110 = vmatpush1.msra.mxu0 0.0
  %111 = vmatprep.subr.mxu0 0.0
  %112 = vmatpush1.msra.mxu0 0.0
  %113 = vmatprep.subr.mxu0 0.0
  %114 = vmatpush1.msra.mxu0 0.0
  %115 = vmatprep.subr.mxu0 0.0
  %116 = vmatpush1.msra.mxu0 0.0
  %117 = vmatprep.mubr.f32.mxu0 0.0
  %118 = vmatmul.mubr.f32.gmra.mrb[0].mxu0 %v48
  %v119 = vpop.f32.mrb[0].mxu0
  %v120 = vadd.f32 %v45, %v119
  %v121 = vpop.f32.mrb[0].mxu0
  %122 = vmatprep.mubr.f32.mxu0 0.0
  %123 = vmatmul.mubr.f32.gmra.mrb[0].mxu0 %v51
  %v124 = vpop.f32.mrb[0].mxu0
  %v125 = vadd.f32 %v45, %v124
  %v126 = vpop.f32.mrb[0].mxu0
  %127 = vdwg.mxu0
  %130 = vrot.lane.b32.xlu0 %v120, 120
  %v131 = vpop.permute.xlu0 %130
  %132 = vrot.lane.b32.xlu0 %v125, 120
  %v133 = vpop.permute.xlu0 %132
  %134 = vrot.lane.b32.xlu0 %v120, 112
  %v135 = vpop.permute.xlu0 %134
  %136 = vrot.lane.b32.xlu0 %v125, 112
  %v137 = vpop.permute.xlu0 %136
  %138 = vrot.lane.b32.xlu0 %v120, 104
  %v139 = vpop.permute.xlu0 %138
  %140 = vrot.lane.b32.xlu0 %v125, 104
  %v141 = vpop.permute.xlu0 %140
  %142 = vrot.lane.b32.xlu0 %v120, 96
  %v143 = vpop.permute.xlu0 %142
  %vm144 = vcmask 64512
  %v145 = vsel %vm144, %v120, 0
  %v147 = vsel %vm144, %v143, 0
  %149 = vmatprep.subr.mxu0 0.0
  %150 = vmatpush1.xpose.msra.mxu0 %v147
  %151 = vmatprep.subr.mxu0 0.0
  %152 = vmatpush1.xpose.msra.mxu0 0.0
  %153 = vmatprep.subr.mxu0 0.0
  %154 = vmatpush1.xpose.msra.mxu0 0.0
  %155 = vmatprep.subr.mxu0 0.0
  %156 = vmatpush1.xpose.msra.mxu0 0.0
  %157 = vmatprep.subr.mxu0 0.0
  %158 = vmatpush1.xpose.msra.mxu0 0.0
  %159 = vmatprep.subr.mxu0 0.0
  %160 = vmatpush1.xpose.msra.mxu0 0.0
  %161 = vmatprep.subr.mxu0 0.0
  %162 = vmatpush1.xpose.msra.mxu0 0.0
  %163 = vmatprep.subr.mxu0 0.0
  %164 = vmatpush1.xpose.msra.mxu0 0.0
  %165 = vmatprep.subr.mxu0 0.0
  %166 = vmatpush1.xpose.msra.mxu0 0.0
  %167 = vmatprep.subr.mxu0 0.0
  %168 = vmatpush1.xpose.msra.mxu0 0.0
  %169 = vmatprep.subr.mxu0 0.0
  %170 = vmatpush1.xpose.msra.mxu0 0.0
  %171 = vmatprep.subr.mxu0 0.0
  %172 = vmatpush1.xpose.msra.mxu0 0.0
  %173 = vmatprep.subr.mxu0 0.0
  %174 = vmatpush1.xpose.msra.mxu0 0.0
  %175 = vmatprep.subr.mxu0 0.0
  %176 = vmatpush1.xpose.msra.mxu0 0.0
  %177 = vmatprep.subr.mxu0 0.0
  %178 = vmatpush1.xpose.msra.mxu0 0.0
  %179 = vmatprep.subr.mxu0 0.0
  %180 = vmatpush1.xpose.msra.mxu0 0.0
  %181 = vmatprep.subr.mxu0 0.0
  %182 = vmatpush1.xpose.msra.mxu0 0.0
  %183 = vmatprep.subr.mxu0 0.0
  %184 = vmatpush1.xpose.msra.mxu0 0.0
  %185 = vmatprep.subr.mxu0 0.0
  %186 = vmatpush1.xpose.msra.mxu0 0.0
  %187 = vmatprep.subr.mxu0 0.0
  %188 = vmatpush1.xpose.msra.mxu0 0.0
  %189 = vmatprep.subr.mxu0 0.0
  %190 = vmatpush1.xpose.msra.mxu0 0.0
  %191 = vmatprep.subr.mxu0 0.0
  %192 = vmatpush1.xpose.msra.mxu0 0.0
  %193 = vmatprep.subr.mxu0 0.0
  %194 = vmatpush1.xpose.msra.mxu0 0.0
  %195 = vmatprep.subr.mxu0 0.0
  %196 = vmatpush1.xpose.msra.mxu0 0.0
  %197 = vmatprep.subr.mxu0 0.0
  %198 = vmatpush1.xpose.msra.mxu0 0.0
  %199 = vmatprep.subr.mxu0 0.0
  %200 = vmatpush1.xpose.msra.mxu0 0.0
  %201 = vmatprep.subr.mxu0 0.0
  %202 = vmatpush1.xpose.msra.mxu0 0.0
  %203 = vmatprep.subr.mxu0 0.0
  %204 = vmatpush1.xpose.msra.mxu0 0.0
  %205 = vmatprep.subr.mxu0 0.0
  %206 = vmatpush1.xpose.msra.mxu0 0.0
  %207 = vmatprep.subr.mxu0 0.0
  %208 = vmatpush1.xpose.msra.mxu0 0.0
  %209 = vmatprep.subr.mxu0 0.0
  %210 = vmatpush1.xpose.msra.mxu0 0.0
  %211 = vmatprep.subr.mxu0 0.0
  %212 = vmatpush1.xpose.msra.mxu0 0.0
  %213 = vmatprep.mubr.f32.mxu0 0.0
  %214 = vmatmul.mubr.f32.gmra.mrb[0].mxu0 %v145
  %v215 = vpop.f32.mrb[0].mxu0
  %v216 = vadd.f32 %v28, %v215
  %v217 = vpop.f32.mrb[0].mxu0
  %218 = vdwg.mxu0
  %219 = vrot.lane.b32.xlu0 %v131, 96
  %v220 = vpop.permute.xlu0 %219
  %v221 = vsel %vm144, %v131, 0
  %v223 = vsel %vm144, %v220, 0
  %225 = vmatprep.subr.mxu0 0.0
  %226 = vmatpush1.xpose.msra.mxu0 %v223
  %227 = vmatprep.subr.mxu0 0.0
  %228 = vmatpush1.xpose.msra.mxu0 0.0
  %229 = vmatprep.subr.mxu0 0.0
  %230 = vmatpush1.xpose.msra.mxu0 0.0
  %231 = vmatprep.subr.mxu0 0.0
  %232 = vmatpush1.xpose.msra.mxu0 0.0
  %233 = vmatprep.subr.mxu0 0.0
  %234 = vmatpush1.xpose.msra.mxu0 0.0
  %235 = vmatprep.subr.mxu0 0.0
  %236 = vmatpush1.xpose.msra.mxu0 0.0
  %237 = vmatprep.subr.mxu0 0.0
  %238 = vmatpush1.xpose.msra.mxu0 0.0
  %239 = vmatprep.subr.mxu0 0.0
  %240 = vmatpush1.xpose.msra.mxu0 0.0
  %241 = vmatprep.subr.mxu0 0.0
  %242 = vmatpush1.xpose.msra.mxu0 0.0
  %243 = vmatprep.subr.mxu0 0.0
  %244 = vmatpush1.xpose.msra.mxu0 0.0
  %245 = vmatprep.subr.mxu0 0.0
  %246 = vmatpush1.xpose.msra.mxu0 0.0
  %247 = vmatprep.subr.mxu0 0.0
  %248 = vmatpush1.xpose.msra.mxu0 0.0
  %249 = vmatprep.subr.mxu0 0.0
  %250 = vmatpush1.xpose.msra.mxu0 0.0
  %251 = vmatprep.subr.mxu0 0.0
  %252 = vmatpush1.xpose.msra.mxu0 0.0
  %253 = vmatprep.subr.mxu0 0.0
  %254 = vmatpush1.xpose.msra.mxu0 0.0
  %255 = vmatprep.subr.mxu0 0.0
  %256 = vmatpush1.xpose.msra.mxu0 0.0
  %257 = vmatprep.subr.mxu0 0.0
  %258 = vmatpush1.xpose.msra.mxu0 0.0
  %259 = vmatprep.subr.mxu0 0.0
  %260 = vmatpush1.xpose.msra.mxu0 0.0
  %261 = vmatprep.subr.mxu0 0.0
  %262 = vmatpush1.xpose.msra.mxu0 0.0
  %263 = vmatprep.subr.mxu0 0.0
  %264 = vmatpush1.xpose.msra.mxu0 0.0
  %265 = vmatprep.subr.mxu0 0.0
  %266 = vmatpush1.xpose.msra.mxu0 0.0
  %267 = vmatprep.subr.mxu0 0.0
  %268 = vmatpush1.xpose.msra.mxu0 0.0
  %269 = vmatprep.subr.mxu0 0.0
  %270 = vmatpush1.xpose.msra.mxu0 0.0
  %271 = vmatprep.subr.mxu0 0.0
  %272 = vmatpush1.xpose.msra.mxu0 0.0
  %273 = vmatprep.subr.mxu0 0.0
  %274 = vmatpush1.xpose.msra.mxu0 0.0
  %275 = vmatprep.subr.mxu0 0.0
  %276 = vmatpush1.xpose.msra.mxu0 0.0
  %277 = vmatprep.subr.mxu0 0.0
  %278 = vmatpush1.xpose.msra.mxu0 0.0
  %279 = vmatprep.subr.mxu0 0.0
  %280 = vmatpush1.xpose.msra.mxu0 0.0
  %281 = vmatprep.subr.mxu0 0.0
  %282 = vmatpush1.xpose.msra.mxu0 0.0
  %283 = vmatprep.subr.mxu0 0.0
  %284 = vmatpush1.xpose.msra.mxu0 0.0
  %285 = vmatprep.subr.mxu0 0.0
  %286 = vmatpush1.xpose.msra.mxu0 0.0
  %287 = vmatprep.subr.mxu0 0.0
  %288 = vmatpush1.xpose.msra.mxu0 0.0
  %289 = vmatprep.mubr.f32.mxu0 0.0
  %290 = vmatmul.mubr.f32.gmra.mrb[0].mxu0 %v221
  %v291 = vpop.f32.mrb[0].mxu0
  %v292 = vadd.f32 %v28, %v291
  %v293 = vpop.f32.mrb[0].mxu0
  %294 = vdwg.mxu0
  %295 = vrot.lane.b32.xlu0 %v135, 96
  %v296 = vpop.permute.xlu0 %295
  %v297 = vsel %vm144, %v135, 0
  %v299 = vsel %vm144, %v296, 0
  %301 = vmatprep.subr.mxu0 0.0
  %302 = vmatpush1.xpose.msra.mxu0 %v299
  %303 = vmatprep.subr.mxu0 0.0
  %304 = vmatpush1.xpose.msra.mxu0 0.0
  %305 = vmatprep.subr.mxu0 0.0
  %306 = vmatpush1.xpose.msra.mxu0 0.0
  %307 = vmatprep.subr.mxu0 0.0
  %308 = vmatpush1.xpose.msra.mxu0 0.0
  %309 = vmatprep.subr.mxu0 0.0
  %310 = vmatpush1.xpose.msra.mxu0 0.0
  %311 = vmatprep.subr.mxu0 0.0
  %312 = vmatpush1.xpose.msra.mxu0 0.0
  %313 = vmatprep.subr.mxu0 0.0
  %314 = vmatpush1.xpose.msra.mxu0 0.0
  %315 = vmatprep.subr.mxu0 0.0
  %316 = vmatpush1.xpose.msra.mxu0 0.0
  %317 = vmatprep.subr.mxu0 0.0
  %318 = vmatpush1.xpose.msra.mxu0 0.0
  %319 = vmatprep.subr.mxu0 0.0
  %320 = vmatpush1.xpose.msra.mxu0 0.0
  %321 = vmatprep.subr.mxu0 0.0
  %322 = vmatpush1.xpose.msra.mxu0 0.0
  %323 = vmatprep.subr.mxu0 0.0
  %324 = vmatpush1.xpose.msra.mxu0 0.0
  %325 = vmatprep.subr.mxu0 0.0
  %326 = vmatpush1.xpose.msra.mxu0 0.0
  %327 = vmatprep.subr.mxu0 0.0
  %328 = vmatpush1.xpose.msra.mxu0 0.0
  %329 = vmatprep.subr.mxu0 0.0
  %330 = vmatpush1.xpose.msra.mxu0 0.0
  %331 = vmatprep.subr.mxu0 0.0
  %332 = vmatpush1.xpose.msra.mxu0 0.0
  %333 = vmatprep.subr.mxu0 0.0
  %334 = vmatpush1.xpose.msra.mxu0 0.0
  %335 = vmatprep.subr.mxu0 0.0
  %336 = vmatpush1.xpose.msra.mxu0 0.0
  %337 = vmatprep.subr.mxu0 0.0
  %338 = vmatpush1.xpose.msra.mxu0 0.0
  %339 = vmatprep.subr.mxu0 0.0
  %340 = vmatpush1.xpose.msra.mxu0 0.0
  %341 = vmatprep.subr.mxu0 0.0
  %342 = vmatpush1.xpose.msra.mxu0 0.0
  %343 = vmatprep.subr.mxu0 0.0
  %344 = vmatpush1.xpose.msra.mxu0 0.0
  %345 = vmatprep.subr.mxu0 0.0
  %346 = vmatpush1.xpose.msra.mxu0 0.0
  %347 = vmatprep.subr.mxu0 0.0
  %348 = vmatpush1.xpose.msra.mxu0 0.0
  %349 = vmatprep.subr.mxu0 0.0
  %350 = vmatpush1.xpose.msra.mxu0 0.0
  %351 = vmatprep.subr.mxu0 0.0
  %352 = vmatpush1.xpose.msra.mxu0 0.0
  %353 = vmatprep.subr.mxu0 0.0
  %354 = vmatpush1.xpose.msra.mxu0 0.0
  %355 = vmatprep.subr.mxu0 0.0
  %356 = vmatpush1.xpose.msra.mxu0 0.0
  %357 = vmatprep.subr.mxu0 0.0
  %358 = vmatpush1.xpose.msra.mxu0 0.0
  %359 = vmatprep.subr.mxu0 0.0
  %360 = vmatpush1.xpose.msra.mxu0 0.0
  %361 = vmatprep.subr.mxu0 0.0
  %362 = vmatpush1.xpose.msra.mxu0 0.0
  %363 = vmatprep.subr.mxu0 0.0
  %364 = vmatpush1.xpose.msra.mxu0 0.0
  %365 = vmatprep.mubr.f32.mxu0 0.0
  %366 = vmatmul.mubr.f32.gmra.mrb[0].mxu0 %v297
  %v367 = vpop.f32.mrb[0].mxu0
  %v368 = vadd.f32 %v28, %v367
  %v369 = vpop.f32.mrb[0].mxu0
  %370 = vdwg.mxu0
  %371 = vrot.lane.b32.xlu0 %v139, 96
  %v372 = vpop.permute.xlu0 %371
  %v373 = vsel %vm144, %v139, 0
  %v375 = vsel %vm144, %v372, 0
  %377 = vmatprep.subr.mxu0 0.0
  %378 = vmatpush1.xpose.msra.mxu0 %v375
  %379 = vmatprep.subr.mxu0 0.0
  %380 = vmatpush1.xpose.msra.mxu0 0.0
  %381 = vmatprep.subr.mxu0 0.0
  %382 = vmatpush1.xpose.msra.mxu0 0.0
  %383 = vmatprep.subr.mxu0 0.0
  %384 = vmatpush1.xpose.msra.mxu0 0.0
  %385 = vmatprep.subr.mxu0 0.0
  %386 = vmatpush1.xpose.msra.mxu0 0.0
  %387 = vmatprep.subr.mxu0 0.0
  %388 = vmatpush1.xpose.msra.mxu0 0.0
  %389 = vmatprep.subr.mxu0 0.0
  %390 = vmatpush1.xpose.msra.mxu0 0.0
  %391 = vmatprep.subr.mxu0 0.0
  %392 = vmatpush1.xpose.msra.mxu0 0.0
  %393 = vmatprep.subr.mxu0 0.0
  %394 = vmatpush1.xpose.msra.mxu0 0.0
  %395 = vmatprep.subr.mxu0 0.0
  %396 = vmatpush1.xpose.msra.mxu0 0.0
  %397 = vmatprep.subr.mxu0 0.0
  %398 = vmatpush1.xpose.msra.mxu0 0.0
  %399 = vmatprep.subr.mxu0 0.0
  %400 = vmatpush1.xpose.msra.mxu0 0.0
  %401 = vmatprep.subr.mxu0 0.0
  %402 = vmatpush1.xpose.msra.mxu0 0.0
  %403 = vmatprep.subr.mxu0 0.0
  %404 = vmatpush1.xpose.msra.mxu0 0.0
  %405 = vmatprep.subr.mxu0 0.0
  %406 = vmatpush1.xpose.msra.mxu0 0.0
  %407 = vmatprep.subr.mxu0 0.0
  %408 = vmatpush1.xpose.msra.mxu0 0.0
  %409 = vmatprep.subr.mxu0 0.0
  %410 = vmatpush1.xpose.msra.mxu0 0.0
  %411 = vmatprep.subr.mxu0 0.0
  %412 = vmatpush1.xpose.msra.mxu0 0.0
  %413 = vmatprep.subr.mxu0 0.0
  %414 = vmatpush1.xpose.msra.mxu0 0.0
  %415 = vmatprep.subr.mxu0 0.0
  %416 = vmatpush1.xpose.msra.mxu0 0.0
  %417 = vmatprep.subr.mxu0 0.0
  %418 = vmatpush1.xpose.msra.mxu0 0.0
  %419 = vmatprep.subr.mxu0 0.0
  %420 = vmatpush1.xpose.msra.mxu0 0.0
  %421 = vmatprep.subr.mxu0 0.0
  %422 = vmatpush1.xpose.msra.mxu0 0.0
  %423 = vmatprep.subr.mxu0 0.0
  %424 = vmatpush1.xpose.msra.mxu0 0.0
  %425 = vmatprep.subr.mxu0 0.0
  %426 = vmatpush1.xpose.msra.mxu0 0.0
  %427 = vmatprep.subr.mxu0 0.0
  %428 = vmatpush1.xpose.msra.mxu0 0.0
  %429 = vmatprep.subr.mxu0 0.0
  %430 = vmatpush1.xpose.msra.mxu0 0.0
  %431 = vmatprep.subr.mxu0 0.0
  %432 = vmatpush1.xpose.msra.mxu0 0.0
  %433 = vmatprep.subr.mxu0 0.0
  %434 = vmatpush1.xpose.msra.mxu0 0.0
  %435 = vmatprep.subr.mxu0 0.0
  %436 = vmatpush1.xpose.msra.mxu0 0.0
  %437 = vmatprep.subr.mxu0 0.0
  %438 = vmatpush1.xpose.msra.mxu0 0.0
  %439 = vmatprep.subr.mxu0 0.0
  %440 = vmatpush1.xpose.msra.mxu0 0.0
  %441 = vmatprep.mubr.f32.mxu0 0.0
  %442 = vmatmul.mubr.f32.gmra.mrb[0].mxu0 %v373
  %v443 = vpop.f32.mrb[0].mxu0
  %v444 = vadd.f32 %v28, %v443
  %v445 = vpop.f32.mrb[0].mxu0
  %446 = vdwg.mxu0
  %447 = vrot.lane.b32.xlu0 %v125, 96
  %v448 = vpop.permute.xlu0 %447
  %v449 = vsel %vm144, %v125, 0
  %v451 = vsel %vm144, %v448, 0
  %453 = vmatprep.subr.mxu0 0.0
  %454 = vmatpush1.xpose.msra.mxu0 %v451
  %455 = vmatprep.subr.mxu0 0.0
  %456 = vmatpush1.xpose.msra.mxu0 0.0
  %457 = vmatprep.subr.mxu0 0.0
  %458 = vmatpush1.xpose.msra.mxu0 0.0
  %459 = vmatprep.subr.mxu0 0.0
  %460 = vmatpush1.xpose.msra.mxu0 0.0
  %461 = vmatprep.subr.mxu0 0.0
  %462 = vmatpush1.xpose.msra.mxu0 0.0
  %463 = vmatprep.subr.mxu0 0.0
  %464 = vmatpush1.xpose.msra.mxu0 0.0
  %465 = vmatprep.subr.mxu0 0.0
  %466 = vmatpush1.xpose.msra.mxu0 0.0
  %467 = vmatprep.subr.mxu0 0.0
  %468 = vmatpush1.xpose.msra.mxu0 0.0
  %469 = vmatprep.subr.mxu0 0.0
  %470 = vmatpush1.xpose.msra.mxu0 0.0
  %471 = vmatprep.subr.mxu0 0.0
  %472 = vmatpush1.xpose.msra.mxu0 0.0
  %473 = vmatprep.subr.mxu0 0.0
  %474 = vmatpush1.xpose.msra.mxu0 0.0
  %475 = vmatprep.subr.mxu0 0.0
  %476 = vmatpush1.xpose.msra.mxu0 0.0
  %477 = vmatprep.subr.mxu0 0.0
  %478 = vmatpush1.xpose.msra.mxu0 0.0
  %479 = vmatprep.subr.mxu0 0.0
  %480 = vmatpush1.xpose.msra.mxu0 0.0
  %481 = vmatprep.subr.mxu0 0.0
  %482 = vmatpush1.xpose.msra.mxu0 0.0
  %483 = vmatprep.subr.mxu0 0.0
  %484 = vmatpush1.xpose.msra.mxu0 0.0
  %485 = vmatprep.subr.mxu0 0.0
  %486 = vmatpush1.xpose.msra.mxu0 0.0
  %487 = vmatprep.subr.mxu0 0.0
  %488 = vmatpush1.xpose.msra.mxu0 0.0
  %489 = vmatprep.subr.mxu0 0.0
  %490 = vmatpush1.xpose.msra.mxu0 0.0
  %491 = vmatprep.subr.mxu0 0.0
  %492 = vmatpush1.xpose.msra.mxu0 0.0
  %493 = vmatprep.subr.mxu0 0.0
  %494 = vmatpush1.xpose.msra.mxu0 0.0
  %495 = vmatprep.subr.mxu0 0.0
  %496 = vmatpush1.xpose.msra.mxu0 0.0
  %497 = vmatprep.subr.mxu0 0.0
  %498 = vmatpush1.xpose.msra.mxu0 0.0
  %499 = vmatprep.subr.mxu0 0.0
  %500 = vmatpush1.xpose.msra.mxu0 0.0
  %501 = vmatprep.subr.mxu0 0.0
  %502 = vmatpush1.xpose.msra.mxu0 0.0
  %503 = vmatprep.subr.mxu0 0.0
  %504 = vmatpush1.xpose.msra.mxu0 0.0
  %505 = vmatprep.subr.mxu0 0.0
  %506 = vmatpush1.xpose.msra.mxu0 0.0
  %507 = vmatprep.subr.mxu0 0.0
  %508 = vmatpush1.xpose.msra.mxu0 0.0
  %509 = vmatprep.subr.mxu0 0.0
  %510 = vmatpush1.xpose.msra.mxu0 0.0
  %511 = vmatprep.subr.mxu0 0.0
  %512 = vmatpush1.xpose.msra.mxu0 0.0
  %513 = vmatprep.subr.mxu0 0.0
  %514 = vmatpush1.xpose.msra.mxu0 0.0
  %515 = vmatprep.subr.mxu0 0.0
  %516 = vmatpush1.xpose.msra.mxu0 0.0
  %517 = vmatprep.mubr.f32.mxu0 0.0
  %518 = vmatmul.mubr.f32.gmra.mrb[0].mxu0 %v449
  %v519 = vpop.f32.mrb[0].mxu0
  %v520 = vadd.f32 %v29, %v519
  %v521 = vpop.f32.mrb[0].mxu0
  %522 = vdwg.mxu0
  %523 = vrot.lane.b32.xlu0 %v133, 96
  %v524 = vpop.permute.xlu0 %523
  %v525 = vsel %vm144, %v133, 0
  %v527 = vsel %vm144, %v524, 0
  %529 = vmatprep.subr.mxu0 0.0
  %530 = vmatpush1.xpose.msra.mxu0 %v527
  %531 = vmatprep.subr.mxu0 0.0
  %532 = vmatpush1.xpose.msra.mxu0 0.0
  %533 = vmatprep.subr.mxu0 0.0
  %534 = vmatpush1.xpose.msra.mxu0 0.0
  %535 = vmatprep.subr.mxu0 0.0
  %536 = vmatpush1.xpose.msra.mxu0 0.0
  %537 = vmatprep.subr.mxu0 0.0
  %538 = vmatpush1.xpose.msra.mxu0 0.0
  %539 = vmatprep.subr.mxu0 0.0
  %540 = vmatpush1.xpose.msra.mxu0 0.0
  %541 = vmatprep.subr.mxu0 0.0
  %542 = vmatpush1.xpose.msra.mxu0 0.0
  %543 = vmatprep.subr.mxu0 0.0
  %544 = vmatpush1.xpose.msra.mxu0 0.0
  %545 = vmatprep.subr.mxu0 0.0
  %546 = vmatpush1.xpose.msra.mxu0 0.0
  %547 = vmatprep.subr.mxu0 0.0
  %548 = vmatpush1.xpose.msra.mxu0 0.0
  %549 = vmatprep.subr.mxu0 0.0
  %550 = vmatpush1.xpose.msra.mxu0 0.0
  %551 = vmatprep.subr.mxu0 0.0
  %552 = vmatpush1.xpose.msra.mxu0 0.0
  %553 = vmatprep.subr.mxu0 0.0
  %554 = vmatpush1.xpose.msra.mxu0 0.0
  %555 = vmatprep.subr.mxu0 0.0
  %556 = vmatpush1.xpose.msra.mxu0 0.0
  %557 = vmatprep.subr.mxu0 0.0
  %558 = vmatpush1.xpose.msra.mxu0 0.0
  %559 = vmatprep.subr.mxu0 0.0
  %560 = vmatpush1.xpose.msra.mxu0 0.0
  %561 = vmatprep.subr.mxu0 0.0
  %562 = vmatpush1.xpose.msra.mxu0 0.0
  %563 = vmatprep.subr.mxu0 0.0
  %564 = vmatpush1.xpose.msra.mxu0 0.0
  %565 = vmatprep.subr.mxu0 0.0
  %566 = vmatpush1.xpose.msra.mxu0 0.0
  %567 = vmatprep.subr.mxu0 0.0
  %568 = vmatpush1.xpose.msra.mxu0 0.0
  %569 = vmatprep.subr.mxu0 0.0
  %570 = vmatpush1.xpose.msra.mxu0 0.0
  %571 = vmatprep.subr.mxu0 0.0
  %572 = vmatpush1.xpose.msra.mxu0 0.0
  %573 = vmatprep.subr.mxu0 0.0
  %574 = vmatpush1.xpose.msra.mxu0 0.0
  %575 = vmatprep.subr.mxu0 0.0
  %576 = vmatpush1.xpose.msra.mxu0 0.0
  %577 = vmatprep.subr.mxu0 0.0
  %578 = vmatpush1.xpose.msra.mxu0 0.0
  %579 = vmatprep.subr.mxu0 0.0
  %580 = vmatpush1.xpose.msra.mxu0 0.0
  %581 = vmatprep.subr.mxu0 0.0
  %582 = vmatpush1.xpose.msra.mxu0 0.0
  %583 = vmatprep.subr.mxu0 0.0
  %584 = vmatpush1.xpose.msra.mxu0 0.0
  %585 = vmatprep.subr.mxu0 0.0
  %586 = vmatpush1.xpose.msra.mxu0 0.0
  %587 = vmatprep.subr.mxu0 0.0
  %588 = vmatpush1.xpose.msra.mxu0 0.0
  %589 = vmatprep.subr.mxu0 0.0
  %590 = vmatpush1.xpose.msra.mxu0 0.0
  %591 = vmatprep.subr.mxu0 0.0
  %592 = vmatpush1.xpose.msra.mxu0 0.0
  %593 = vmatprep.mubr.f32.mxu0 0.0
  %594 = vmatmul.mubr.f32.gmra.mrb[0].mxu0 %v525
  %v595 = vpop.f32.mrb[0].mxu0
  %v596 = vadd.f32 %v29, %v595
  %v597 = vpop.f32.mrb[0].mxu0
  %598 = vdwg.mxu0
  %599 = vrot.lane.b32.xlu0 %v137, 96
  %v600 = vpop.permute.xlu0 %599
  %v601 = vsel %vm144, %v137, 0
  %v603 = vsel %vm144, %v600, 0
  %605 = vmatprep.subr.mxu0 0.0
  %606 = vmatpush1.xpose.msra.mxu0 %v603
  %607 = vmatprep.subr.mxu0 0.0
  %608 = vmatpush1.xpose.msra.mxu0 0.0
  %609 = vmatprep.subr.mxu0 0.0
  %610 = vmatpush1.xpose.msra.mxu0 0.0
  %611 = vmatprep.subr.mxu0 0.0
  %612 = vmatpush1.xpose.msra.mxu0 0.0
  %613 = vmatprep.subr.mxu0 0.0
  %614 = vmatpush1.xpose.msra.mxu0 0.0
  %615 = vmatprep.subr.mxu0 0.0
  %616 = vmatpush1.xpose.msra.mxu0 0.0
  %617 = vmatprep.subr.mxu0 0.0
  %618 = vmatpush1.xpose.msra.mxu0 0.0
  %619 = vmatprep.subr.mxu0 0.0
  %620 = vmatpush1.xpose.msra.mxu0 0.0
  %621 = vmatprep.subr.mxu0 0.0
  %622 = vmatpush1.xpose.msra.mxu0 0.0
  %623 = vmatprep.subr.mxu0 0.0
  %624 = vmatpush1.xpose.msra.mxu0 0.0
  %625 = vmatprep.subr.mxu0 0.0
  %626 = vmatpush1.xpose.msra.mxu0 0.0
  %627 = vmatprep.subr.mxu0 0.0
  %628 = vmatpush1.xpose.msra.mxu0 0.0
  %629 = vmatprep.subr.mxu0 0.0
  %630 = vmatpush1.xpose.msra.mxu0 0.0
  %631 = vmatprep.subr.mxu0 0.0
  %632 = vmatpush1.xpose.msra.mxu0 0.0
  %633 = vmatprep.subr.mxu0 0.0
  %634 = vmatpush1.xpose.msra.mxu0 0.0
  %635 = vmatprep.subr.mxu0 0.0
  %636 = vmatpush1.xpose.msra.mxu0 0.0
  %637 = vmatprep.subr.mxu0 0.0
  %638 = vmatpush1.xpose.msra.mxu0 0.0
  %639 = vmatprep.subr.mxu0 0.0
  %640 = vmatpush1.xpose.msra.mxu0 0.0
  %641 = vmatprep.subr.mxu0 0.0
  %642 = vmatpush1.xpose.msra.mxu0 0.0
  %643 = vmatprep.subr.mxu0 0.0
  %644 = vmatpush1.xpose.msra.mxu0 0.0
  %645 = vmatprep.subr.mxu0 0.0
  %646 = vmatpush1.xpose.msra.mxu0 0.0
  %647 = vmatprep.subr.mxu0 0.0
  %648 = vmatpush1.xpose.msra.mxu0 0.0
  %649 = vmatprep.subr.mxu0 0.0
  %650 = vmatpush1.xpose.msra.mxu0 0.0
  %651 = vmatprep.subr.mxu0 0.0
  %652 = vmatpush1.xpose.msra.mxu0 0.0
  %653 = vmatprep.subr.mxu0 0.0
  %654 = vmatpush1.xpose.msra.mxu0 0.0
  %655 = vmatprep.subr.mxu0 0.0
  %656 = vmatpush1.xpose.msra.mxu0 0.0
  %657 = vmatprep.subr.mxu0 0.0
  %658 = vmatpush1.xpose.msra.mxu0 0.0
  %659 = vmatprep.subr.mxu0 0.0
  %660 = vmatpush1.xpose.msra.mxu0 0.0
  %661 = vmatprep.subr.mxu0 0.0
  %662 = vmatpush1.xpose.msra.mxu0 0.0
  %663 = vmatprep.subr.mxu0 0.0
  %664 = vmatpush1.xpose.msra.mxu0 0.0
  %665 = vmatprep.subr.mxu0 0.0
  %666 = vmatpush1.xpose.msra.mxu0 0.0
  %667 = vmatprep.subr.mxu0 0.0
  %668 = vmatpush1.xpose.msra.mxu0 0.0
  %669 = vmatprep.mubr.f32.mxu0 0.0
  %670 = vmatmul.mubr.f32.gmra.mrb[0].mxu0 %v601
  %v671 = vpop.f32.mrb[0].mxu0
  %v672 = vadd.f32 %v29, %v671
  %v673 = vpop.f32.mrb[0].mxu0
  %674 = vdwg.mxu0
  %675 = vrot.lane.b32.xlu0 %v141, 96
  %v676 = vpop.permute.xlu0 %675
  %v677 = vsel %vm144, %v141, 0
  %v679 = vsel %vm144, %v676, 0
  %681 = vmatprep.subr.mxu0 0.0
  %682 = vmatpush1.xpose.msra.mxu0 %v679
  %683 = vmatprep.subr.mxu0 0.0
  %684 = vmatpush1.xpose.msra.mxu0 0.0
  %685 = vmatprep.subr.mxu0 0.0
  %686 = vmatpush1.xpose.msra.mxu0 0.0
  %687 = vmatprep.subr.mxu0 0.0
  %688 = vmatpush1.xpose.msra.mxu0 0.0
  %689 = vmatprep.subr.mxu0 0.0
  %690 = vmatpush1.xpose.msra.mxu0 0.0
  %691 = vmatprep.subr.mxu0 0.0
  %692 = vmatpush1.xpose.msra.mxu0 0.0
  %693 = vmatprep.subr.mxu0 0.0
  %694 = vmatpush1.xpose.msra.mxu0 0.0
  %695 = vmatprep.subr.mxu0 0.0
  %696 = vmatpush1.xpose.msra.mxu0 0.0
  %697 = vmatprep.subr.mxu0 0.0
  %698 = vmatpush1.xpose.msra.mxu0 0.0
  %699 = vmatprep.subr.mxu0 0.0
  %700 = vmatpush1.xpose.msra.mxu0 0.0
  %701 = vmatprep.subr.mxu0 0.0
  %702 = vmatpush1.xpose.msra.mxu0 0.0
  %703 = vmatprep.subr.mxu0 0.0
  %704 = vmatpush1.xpose.msra.mxu0 0.0
  %705 = vmatprep.subr.mxu0 0.0
  %706 = vmatpush1.xpose.msra.mxu0 0.0
  %707 = vmatprep.subr.mxu0 0.0
  %708 = vmatpush1.xpose.msra.mxu0 0.0
  %709 = vmatprep.subr.mxu0 0.0
  %710 = vmatpush1.xpose.msra.mxu0 0.0
  %711 = vmatprep.subr.mxu0 0.0
  %712 = vmatpush1.xpose.msra.mxu0 0.0
  %713 = vmatprep.subr.mxu0 0.0
  %714 = vmatpush1.xpose.msra.mxu0 0.0
  %715 = vmatprep.subr.mxu0 0.0
  %716 = vmatpush1.xpose.msra.mxu0 0.0
  %717 = vmatprep.subr.mxu0 0.0
  %718 = vmatpush1.xpose.msra.mxu0 0.0
  %719 = vmatprep.subr.mxu0 0.0
  %720 = vmatpush1.xpose.msra.mxu0 0.0
  %721 = vmatprep.subr.mxu0 0.0
  %722 = vmatpush1.xpose.msra.mxu0 0.0
  %723 = vmatprep.subr.mxu0 0.0
  %724 = vmatpush1.xpose.msra.mxu0 0.0
  %725 = vmatprep.subr.mxu0 0.0
  %726 = vmatpush1.xpose.msra.mxu0 0.0
  %727 = vmatprep.subr.mxu0 0.0
  %728 = vmatpush1.xpose.msra.mxu0 0.0
  %729 = vmatprep.subr.mxu0 0.0
  %730 = vmatpush1.xpose.msra.mxu0 0.0
  %731 = vmatprep.subr.mxu0 0.0
  %732 = vmatpush1.xpose.msra.mxu0 0.0
  %733 = vmatprep.subr.mxu0 0.0
  %734 = vmatpush1.xpose.msra.mxu0 0.0
  %735 = vmatprep.subr.mxu0 0.0
  %736 = vmatpush1.xpose.msra.mxu0 0.0
  %737 = vmatprep.subr.mxu0 0.0
  %738 = vmatpush1.xpose.msra.mxu0 0.0
  %739 = vmatprep.subr.mxu0 0.0
  %740 = vmatpush1.xpose.msra.mxu0 0.0
  %741 = vmatprep.subr.mxu0 0.0
  %742 = vmatpush1.xpose.msra.mxu0 0.0
  %743 = vmatprep.subr.mxu0 0.0
  %744 = vmatpush1.xpose.msra.mxu0 0.0
  %745 = vmatprep.mubr.f32.mxu0 0.0
  %746 = vmatmul.mubr.f32.gmra.mrb[0].mxu0 %v677
  %v747 = vpop.f32.mrb[0].mxu0
  %v748 = vadd.f32 %v29, %v747
  %v749 = vpop.f32.mrb[0].mxu0
  %750 = vdwg.mxu0
  %v751 = vsel %vm144, %v216, -inf
  %752 = vmax.xlane.f32.xlu0 %v751
  %v753 = vpop.xlane.xlu0 %752
  %v754 = vsel %vm144, %v292, -inf
  %755 = vmax.xlane.f32.xlu0 %v754
  %v756 = vpop.xlane.xlu0 %755
  %v757 = vsel %vm144, %v368, -inf
  %758 = vmax.xlane.f32.xlu0 %v757
  %v759 = vpop.xlane.xlu0 %758
  %v760 = vsel %vm144, %v444, -inf
  %761 = vmax.xlane.f32.xlu0 %v760
  %v762 = vpop.xlane.xlu0 %761
  %v763 = vsel %vm144, %v520, -inf
  %764 = vmax.xlane.f32.xlu0 %v763
  %v765 = vpop.xlane.xlu0 %764
  %v766 = vsel %vm144, %v596, -inf
  %767 = vmax.xlane.f32.xlu0 %v766
  %v768 = vpop.xlane.xlu0 %767
  %v769 = vsel %vm144, %v672, -inf
  %770 = vmax.xlane.f32.xlu0 %v769
  %v771 = vpop.xlane.xlu0 %770
  %v772 = vsel %vm144, %v748, -inf
  %773 = vmax.xlane.f32.xlu0 %v772
  %v774 = vpop.xlane.xlu0 %773
  %v775 = vsub.f32 %v216, %v753
  %v776 = vsub.f32 %v292, %v756
  %v777 = vsub.f32 %v368, %v759
  %v778 = vsub.f32 %v444, %v762
  %v779 = vsub.f32 %v520, %v765
  %v780 = vsub.f32 %v596, %v768
  %v781 = vsub.f32 %v672, %v771
  %v782 = vsub.f32 %v748, %v774
  %v783 = vmul.f32 %v775, 1.442695
  %v784 = vpow.pop %v783
  %v785 = vmul.f32 %v776, 1.442695
  %v786 = vpow.pop %v785
  %v787 = vmul.f32 %v777, 1.442695
  %v788 = vpow.pop %v787
  %v789 = vmul.f32 %v778, 1.442695
  %v790 = vpow.pop %v789
  %v791 = vmul.f32 %v779, 1.442695
  %v792 = vpow.pop %v791
  %v793 = vmul.f32 %v780, 1.442695
  %v794 = vpow.pop %v793
  %v795 = vmul.f32 %v781, 1.442695
  %v796 = vpow.pop %v795
  %v797 = vmul.f32 %v782, 1.442695
  %v798 = vpow.pop %v797
  %v799 = vsel %vm144, %v784, 0.0
  %800 = vadd.xlane.f32.xlu0 %v799
  %v801 = vpop.xlane.xlu0 %800
  %v802 = vsel %vm144, %v786, 0.0
  %803 = vadd.xlane.f32.xlu0 %v802
  %v804 = vpop.xlane.xlu0 %803
  %v805 = vsel %vm144, %v788, 0.0
  %806 = vadd.xlane.f32.xlu0 %v805
  %v807 = vpop.xlane.xlu0 %806
  %v808 = vsel %vm144, %v790, 0.0
  %809 = vadd.xlane.f32.xlu0 %v808
  %v810 = vpop.xlane.xlu0 %809
  %v811 = vsel %vm144, %v792, 0.0
  %812 = vadd.xlane.f32.xlu0 %v811
  %v813 = vpop.xlane.xlu0 %812
  %v814 = vsel %vm144, %v794, 0.0
  %815 = vadd.xlane.f32.xlu0 %v814
  %v816 = vpop.xlane.xlu0 %815
  %v817 = vsel %vm144, %v796, 0.0
  %818 = vadd.xlane.f32.xlu0 %v817
  %v819 = vpop.xlane.xlu0 %818
  %v820 = vsel %vm144, %v798, 0.0
  %821 = vadd.xlane.f32.xlu0 %v820
  %v822 = vpop.xlane.xlu0 %821
  %v823 = vrcp.pop %v801
  %v824 = vrcp.pop %v804
  %v825 = vrcp.pop %v807
  %v826 = vrcp.pop %v810
  %v827 = vrcp.pop %v813
  %v828 = vrcp.pop %v816
  %v829 = vrcp.pop %v819
  %v830 = vrcp.pop %v822
  %v831 = vmul.f32 %v784, %v823
  %v832 = vmul.f32 %v786, %v824
  %v833 = vmul.f32 %v788, %v825
  %v834 = vmul.f32 %v790, %v826
  %v835 = vmul.f32 %v792, %v827
  %v836 = vmul.f32 %v794, %v828
  %v837 = vmul.f32 %v796, %v829
  %v838 = vmul.f32 %v798, %v830
  %839 = vrot.lane.b32.xlu0 %v120, 64
  %v840 = vpop.permute.xlu0 %839
  %v843 = vsel %vm144, %v831, 0
  %845 = vmatprep.subr.mxu0 0.0
  %846 = vmatpush1.msra.mxu0 %v840
  %847 = vmatprep.subr.mxu0 0.0
  %848 = vmatpush1.msra.mxu0 0.0
  %849 = vmatprep.subr.mxu0 0.0
  %850 = vmatpush1.msra.mxu0 0.0
  %851 = vmatprep.subr.mxu0 0.0
  %852 = vmatpush1.msra.mxu0 0.0
  %853 = vmatprep.subr.mxu0 0.0
  %854 = vmatpush1.msra.mxu0 0.0
  %855 = vmatprep.subr.mxu0 0.0
  %856 = vmatpush1.msra.mxu0 0.0
  %857 = vmatprep.subr.mxu0 0.0
  %858 = vmatpush1.msra.mxu0 0.0
  %859 = vmatprep.subr.mxu0 0.0
  %860 = vmatpush1.msra.mxu0 0.0
  %861 = vmatprep.subr.mxu0 0.0
  %862 = vmatpush1.msra.mxu0 0.0
  %863 = vmatprep.subr.mxu0 0.0
  %864 = vmatpush1.msra.mxu0 0.0
  %865 = vmatprep.subr.mxu0 0.0
  %866 = vmatpush1.msra.mxu0 0.0
  %867 = vmatprep.subr.mxu0 0.0
  %868 = vmatpush1.msra.mxu0 0.0
  %869 = vmatprep.subr.mxu0 0.0
  %870 = vmatpush1.msra.mxu0 0.0
  %871 = vmatprep.subr.mxu0 0.0
  %872 = vmatpush1.msra.mxu0 0.0
  %873 = vmatprep.subr.mxu0 0.0
  %874 = vmatpush1.msra.mxu0 0.0
  %875 = vmatprep.subr.mxu0 0.0
  %876 = vmatpush1.msra.mxu0 0.0
  %877 = vmatprep.subr.mxu0 0.0
  %878 = vmatpush1.msra.mxu0 0.0
  %879 = vmatprep.subr.mxu0 0.0
  %880 = vmatpush1.msra.mxu0 0.0
  %881 = vmatprep.subr.mxu0 0.0
  %882 = vmatpush1.msra.mxu0 0.0
  %883 = vmatprep.subr.mxu0 0.0
  %884 = vmatpush1.msra.mxu0 0.0
  %885 = vmatprep.subr.mxu0 0.0
  %886 = vmatpush1.msra.mxu0 0.0
  %887 = vmatprep.subr.mxu0 0.0
  %888 = vmatpush1.msra.mxu0 0.0
  %889 = vmatprep.subr.mxu0 0.0
  %890 = vmatpush1.msra.mxu0 0.0
  %891 = vmatprep.subr.mxu0 0.0
  %892 = vmatpush1.msra.mxu0 0.0
  %893 = vmatprep.subr.mxu0 0.0
  %894 = vmatpush1.msra.mxu0 0.0
  %895 = vmatprep.subr.mxu0 0.0
  %896 = vmatpush1.msra.mxu0 0.0
  %897 = vmatprep.subr.mxu0 0.0
  %898 = vmatpush1.msra.mxu0 0.0
  %899 = vmatprep.subr.mxu0 0.0
  %900 = vmatpush1.msra.mxu0 0.0
  %901 = vmatprep.subr.mxu0 0.0
  %902 = vmatpush1.msra.mxu0 0.0
  %903 = vmatprep.subr.mxu0 0.0
  %904 = vmatpush1.msra.mxu0 0.0
  %905 = vmatprep.subr.mxu0 0.0
  %906 = vmatpush1.msra.mxu0 0.0
  %907 = vmatprep.subr.mxu0 0.0
  %908 = vmatpush1.msra.mxu0 0.0
  %909 = vmatprep.mubr.f32.mxu0 0.0
  %910 = vmatmul.mubr.f32.gmra.mrb[0].mxu0 %v843
  %v911 = vpop.f32.mrb[0].mxu0
  %v912 = vadd.f32 0.0, %v911
  %v913 = vpop.f32.mrb[0].mxu0
  %914 = vdwg.mxu0
  %915 = vrot.lane.b32.xlu0 %v131, 64
  %v916 = vpop.permute.xlu0 %915
  %v919 = vsel %vm144, %v832, 0
  %921 = vmatprep.subr.mxu0 0.0
  %922 = vmatpush1.msra.mxu0 %v916
  %923 = vmatprep.subr.mxu0 0.0
  %924 = vmatpush1.msra.mxu0 0.0
  %925 = vmatprep.subr.mxu0 0.0
  %926 = vmatpush1.msra.mxu0 0.0
  %927 = vmatprep.subr.mxu0 0.0
  %928 = vmatpush1.msra.mxu0 0.0
  %929 = vmatprep.subr.mxu0 0.0
  %930 = vmatpush1.msra.mxu0 0.0
  %931 = vmatprep.subr.mxu0 0.0
  %932 = vmatpush1.msra.mxu0 0.0
  %933 = vmatprep.subr.mxu0 0.0
  %934 = vmatpush1.msra.mxu0 0.0
  %935 = vmatprep.subr.mxu0 0.0
  %936 = vmatpush1.msra.mxu0 0.0
  %937 = vmatprep.subr.mxu0 0.0
  %938 = vmatpush1.msra.mxu0 0.0
  %939 = vmatprep.subr.mxu0 0.0
  %940 = vmatpush1.msra.mxu0 0.0
  %941 = vmatprep.subr.mxu0 0.0
  %942 = vmatpush1.msra.mxu0 0.0
  %943 = vmatprep.subr.mxu0 0.0
  %944 = vmatpush1.msra.mxu0 0.0
  %945 = vmatprep.subr.mxu0 0.0
  %946 = vmatpush1.msra.mxu0 0.0
  %947 = vmatprep.subr.mxu0 0.0
  %948 = vmatpush1.msra.mxu0 0.0
  %949 = vmatprep.subr.mxu0 0.0
  %950 = vmatpush1.msra.mxu0 0.0
  %951 = vmatprep.subr.mxu0 0.0
  %952 = vmatpush1.msra.mxu0 0.0
  %953 = vmatprep.subr.mxu0 0.0
  %954 = vmatpush1.msra.mxu0 0.0
  %955 = vmatprep.subr.mxu0 0.0
  %956 = vmatpush1.msra.mxu0 0.0
  %957 = vmatprep.subr.mxu0 0.0
  %958 = vmatpush1.msra.mxu0 0.0
  %959 = vmatprep.subr.mxu0 0.0
  %960 = vmatpush1.msra.mxu0 0.0
  %961 = vmatprep.subr.mxu0 0.0
  %962 = vmatpush1.msra.mxu0 0.0
  %963 = vmatprep.subr.mxu0 0.0
  %964 = vmatpush1.msra.mxu0 0.0
  %965 = vmatprep.subr.mxu0 0.0
  %966 = vmatpush1.msra.mxu0 0.0
  %967 = vmatprep.subr.mxu0 0.0
  %968 = vmatpush1.msra.mxu0 0.0
  %969 = vmatprep.subr.mxu0 0.0
  %970 = vmatpush1.msra.mxu0 0.0
  %971 = vmatprep.subr.mxu0 0.0
  %972 = vmatpush1.msra.mxu0 0.0
  %973 = vmatprep.subr.mxu0 0.0
  %974 = vmatpush1.msra.mxu0 0.0
  %975 = vmatprep.subr.mxu0 0.0
  %976 = vmatpush1.msra.mxu0 0.0
  %977 = vmatprep.subr.mxu0 0.0
  %978 = vmatpush1.msra.mxu0 0.0
  %979 = vmatprep.subr.mxu0 0.0
  %980 = vmatpush1.msra.mxu0 0.0
  %981 = vmatprep.subr.mxu0 0.0
  %982 = vmatpush1.msra.mxu0 0.0
  %983 = vmatprep.subr.mxu0 0.0
  %984 = vmatpush1.msra.mxu0 0.0
  %985 = vmatprep.mubr.f32.mxu0 0.0
  %986 = vmatmul.mubr.f32.gmra.mrb[0].mxu0 %v919
  %v987 = vpop.f32.mrb[0].mxu0
  %v988 = vadd.f32 0.0, %v987
  %v989 = vpop.f32.mrb[0].mxu0
  %990 = vdwg.mxu0
  %991 = vrot.lane.b32.xlu0 %v135, 64
  %v992 = vpop.permute.xlu0 %991
  %v995 = vsel %vm144, %v833, 0
  %997 = vmatprep.subr.mxu0 0.0
  %998 = vmatpush1.msra.mxu0 %v992
  %999 = vmatprep.subr.mxu0 0.0
  %1000 = vmatpush1.msra.mxu0 0.0
  %1001 = vmatprep.subr.mxu0 0.0
  %1002 = vmatpush1.msra.mxu0 0.0
  %1003 = vmatprep.subr.mxu0 0.0
  %1004 = vmatpush1.msra.mxu0 0.0
  %1005 = vmatprep.subr.mxu0 0.0
  %1006 = vmatpush1.msra.mxu0 0.0
  %1007 = vmatprep.subr.mxu0 0.0
  %1008 = vmatpush1.msra.mxu0 0.0
  %1009 = vmatprep.subr.mxu0 0.0
  %1010 = vmatpush1.msra.mxu0 0.0
  %1011 = vmatprep.subr.mxu0 0.0
  %1012 = vmatpush1.msra.mxu0 0.0
  %1013 = vmatprep.subr.mxu0 0.0
  %1014 = vmatpush1.msra.mxu0 0.0
  %1015 = vmatprep.subr.mxu0 0.0
  %1016 = vmatpush1.msra.mxu0 0.0
  %1017 = vmatprep.subr.mxu0 0.0
  %1018 = vmatpush1.msra.mxu0 0.0
  %1019 = vmatprep.subr.mxu0 0.0
  %1020 = vmatpush1.msra.mxu0 0.0
  %1021 = vmatprep.subr.mxu0 0.0
  %1022 = vmatpush1.msra.mxu0 0.0
  %1023 = vmatprep.subr.mxu0 0.0
  %1024 = vmatpush1.msra.mxu0 0.0
  %1025 = vmatprep.subr.mxu0 0.0
  %1026 = vmatpush1.msra.mxu0 0.0
  %1027 = vmatprep.subr.mxu0 0.0
  %1028 = vmatpush1.msra.mxu0 0.0
  %1029 = vmatprep.subr.mxu0 0.0
  %1030 = vmatpush1.msra.mxu0 0.0
  %1031 = vmatprep.subr.mxu0 0.0
  %1032 = vmatpush1.msra.mxu0 0.0
  %1033 = vmatprep.subr.mxu0 0.0
  %1034 = vmatpush1.msra.mxu0 0.0
  %1035 = vmatprep.subr.mxu0 0.0
  %1036 = vmatpush1.msra.mxu0 0.0
  %1037 = vmatprep.subr.mxu0 0.0
  %1038 = vmatpush1.msra.mxu0 0.0
  %1039 = vmatprep.subr.mxu0 0.0
  %1040 = vmatpush1.msra.mxu0 0.0
  %1041 = vmatprep.subr.mxu0 0.0
  %1042 = vmatpush1.msra.mxu0 0.0
  %1043 = vmatprep.subr.mxu0 0.0
  %1044 = vmatpush1.msra.mxu0 0.0
  %1045 = vmatprep.subr.mxu0 0.0
  %1046 = vmatpush1.msra.mxu0 0.0
  %1047 = vmatprep.subr.mxu0 0.0
  %1048 = vmatpush1.msra.mxu0 0.0
  %1049 = vmatprep.subr.mxu0 0.0
  %1050 = vmatpush1.msra.mxu0 0.0
  %1051 = vmatprep.subr.mxu0 0.0
  %1052 = vmatpush1.msra.mxu0 0.0
  %1053 = vmatprep.subr.mxu0 0.0
  %1054 = vmatpush1.msra.mxu0 0.0
  %1055 = vmatprep.subr.mxu0 0.0
  %1056 = vmatpush1.msra.mxu0 0.0
  %1057 = vmatprep.subr.mxu0 0.0
  %1058 = vmatpush1.msra.mxu0 0.0
  %1059 = vmatprep.subr.mxu0 0.0
  %1060 = vmatpush1.msra.mxu0 0.0
  %1061 = vmatprep.mubr.f32.mxu0 0.0
  %1062 = vmatmul.mubr.f32.gmra.mrb[0].mxu0 %v995
  %v1063 = vpop.f32.mrb[0].mxu0
  %v1064 = vadd.f32 0.0, %v1063
  %v1065 = vpop.f32.mrb[0].mxu0
  %1066 = vdwg.mxu0
  %1067 = vrot.lane.b32.xlu0 %v139, 64
  %v1068 = vpop.permute.xlu0 %1067
  %v1071 = vsel %vm144, %v834, 0
  %1073 = vmatprep.subr.mxu0 0.0
  %1074 = vmatpush1.msra.mxu0 %v1068
  %1075 = vmatprep.subr.mxu0 0.0
  %1076 = vmatpush1.msra.mxu0 0.0
  %1077 = vmatprep.subr.mxu0 0.0
  %1078 = vmatpush1.msra.mxu0 0.0
  %1079 = vmatprep.subr.mxu0 0.0
  %1080 = vmatpush1.msra.mxu0 0.0
  %1081 = vmatprep.subr.mxu0 0.0
  %1082 = vmatpush1.msra.mxu0 0.0
  %1083 = vmatprep.subr.mxu0 0.0
  %1084 = vmatpush1.msra.mxu0 0.0
  %1085 = vmatprep.subr.mxu0 0.0
  %1086 = vmatpush1.msra.mxu0 0.0
  %1087 = vmatprep.subr.mxu0 0.0
  %1088 = vmatpush1.msra.mxu0 0.0
  %1089 = vmatprep.subr.mxu0 0.0
  %1090 = vmatpush1.msra.mxu0 0.0
  %1091 = vmatprep.subr.mxu0 0.0
  %1092 = vmatpush1.msra.mxu0 0.0
  %1093 = vmatprep.subr.mxu0 0.0
  %1094 = vmatpush1.msra.mxu0 0.0
  %1095 = vmatprep.subr.mxu0 0.0
  %1096 = vmatpush1.msra.mxu0 0.0
  %1097 = vmatprep.subr.mxu0 0.0
  %1098 = vmatpush1.msra.mxu0 0.0
  %1099 = vmatprep.subr.mxu0 0.0
  %1100 = vmatpush1.msra.mxu0 0.0
  %1101 = vmatprep.subr.mxu0 0.0
  %1102 = vmatpush1.msra.mxu0 0.0
  %1103 = vmatprep.subr.mxu0 0.0
  %1104 = vmatpush1.msra.mxu0 0.0
  %1105 = vmatprep.subr.mxu0 0.0
  %1106 = vmatpush1.msra.mxu0 0.0
  %1107 = vmatprep.subr.mxu0 0.0
  %1108 = vmatpush1.msra.mxu0 0.0
  %1109 = vmatprep.subr.mxu0 0.0
  %1110 = vmatpush1.msra.mxu0 0.0
  %1111 = vmatprep.subr.mxu0 0.0
  %1112 = vmatpush1.msra.mxu0 0.0
  %1113 = vmatprep.subr.mxu0 0.0
  %1114 = vmatpush1.msra.mxu0 0.0
  %1115 = vmatprep.subr.mxu0 0.0
  %1116 = vmatpush1.msra.mxu0 0.0
  %1117 = vmatprep.subr.mxu0 0.0
  %1118 = vmatpush1.msra.mxu0 0.0
  %1119 = vmatprep.subr.mxu0 0.0
  %1120 = vmatpush1.msra.mxu0 0.0
  %1121 = vmatprep.subr.mxu0 0.0
  %1122 = vmatpush1.msra.mxu0 0.0
  %1123 = vmatprep.subr.mxu0 0.0
  %1124 = vmatpush1.msra.mxu0 0.0
  %1125 = vmatprep.subr.mxu0 0.0
  %1126 = vmatpush1.msra.mxu0 0.0
  %1127 = vmatprep.subr.mxu0 0.0
  %1128 = vmatpush1.msra.mxu0 0.0
  %1129 = vmatprep.subr.mxu0 0.0
  %1130 = vmatpush1.msra.mxu0 0.0
  %1131 = vmatprep.subr.mxu0 0.0
  %1132 = vmatpush1.msra.mxu0 0.0
  %1133 = vmatprep.subr.mxu0 0.0
  %1134 = vmatpush1.msra.mxu0 0.0
  %1135 = vmatprep.subr.mxu0 0.0
  %1136 = vmatpush1.msra.mxu0 0.0
  %1137 = vmatprep.mubr.f32.mxu0 0.0
  %1138 = vmatmul.mubr.f32.gmra.mrb[0].mxu0 %v1071
  %v1139 = vpop.f32.mrb[0].mxu0
  %v1140 = vadd.f32 0.0, %v1139
  %v1141 = vpop.f32.mrb[0].mxu0
  %1142 = vdwg.mxu0
  %1143 = vrot.lane.b32.xlu0 %v125, 64
  %v1144 = vpop.permute.xlu0 %1143
  %v1147 = vsel %vm144, %v835, 0
  %1149 = vmatprep.subr.mxu0 0.0
  %1150 = vmatpush1.msra.mxu0 %v1144
  %1151 = vmatprep.subr.mxu0 0.0
  %1152 = vmatpush1.msra.mxu0 0.0
  %1153 = vmatprep.subr.mxu0 0.0
  %1154 = vmatpush1.msra.mxu0 0.0
  %1155 = vmatprep.subr.mxu0 0.0
  %1156 = vmatpush1.msra.mxu0 0.0
  %1157 = vmatprep.subr.mxu0 0.0
  %1158 = vmatpush1.msra.mxu0 0.0
  %1159 = vmatprep.subr.mxu0 0.0
  %1160 = vmatpush1.msra.mxu0 0.0
  %1161 = vmatprep.subr.mxu0 0.0
  %1162 = vmatpush1.msra.mxu0 0.0
  %1163 = vmatprep.subr.mxu0 0.0
  %1164 = vmatpush1.msra.mxu0 0.0
  %1165 = vmatprep.subr.mxu0 0.0
  %1166 = vmatpush1.msra.mxu0 0.0
  %1167 = vmatprep.subr.mxu0 0.0
  %1168 = vmatpush1.msra.mxu0 0.0
  %1169 = vmatprep.subr.mxu0 0.0
  %1170 = vmatpush1.msra.mxu0 0.0
  %1171 = vmatprep.subr.mxu0 0.0
  %1172 = vmatpush1.msra.mxu0 0.0
  %1173 = vmatprep.subr.mxu0 0.0
  %1174 = vmatpush1.msra.mxu0 0.0
  %1175 = vmatprep.subr.mxu0 0.0
  %1176 = vmatpush1.msra.mxu0 0.0
  %1177 = vmatprep.subr.mxu0 0.0
  %1178 = vmatpush1.msra.mxu0 0.0
  %1179 = vmatprep.subr.mxu0 0.0
  %1180 = vmatpush1.msra.mxu0 0.0
  %1181 = vmatprep.subr.mxu0 0.0
  %1182 = vmatpush1.msra.mxu0 0.0
  %1183 = vmatprep.subr.mxu0 0.0
  %1184 = vmatpush1.msra.mxu0 0.0
  %1185 = vmatprep.subr.mxu0 0.0
  %1186 = vmatpush1.msra.mxu0 0.0
  %1187 = vmatprep.subr.mxu0 0.0
  %1188 = vmatpush1.msra.mxu0 0.0
  %1189 = vmatprep.subr.mxu0 0.0
  %1190 = vmatpush1.msra.mxu0 0.0
  %1191 = vmatprep.subr.mxu0 0.0
  %1192 = vmatpush1.msra.mxu0 0.0
  %1193 = vmatprep.subr.mxu0 0.0
  %1194 = vmatpush1.msra.mxu0 0.0
  %1195 = vmatprep.subr.mxu0 0.0
  %1196 = vmatpush1.msra.mxu0 0.0
  %1197 = vmatprep.subr.mxu0 0.0
  %1198 = vmatpush1.msra.mxu0 0.0
  %1199 = vmatprep.subr.mxu0 0.0
  %1200 = vmatpush1.msra.mxu0 0.0
  %1201 = vmatprep.subr.mxu0 0.0
  %1202 = vmatpush1.msra.mxu0 0.0
  %1203 = vmatprep.subr.mxu0 0.0
  %1204 = vmatpush1.msra.mxu0 0.0
  %1205 = vmatprep.subr.mxu0 0.0
  %1206 = vmatpush1.msra.mxu0 0.0
  %1207 = vmatprep.subr.mxu0 0.0
  %1208 = vmatpush1.msra.mxu0 0.0
  %1209 = vmatprep.subr.mxu0 0.0
  %1210 = vmatpush1.msra.mxu0 0.0
  %1211 = vmatprep.subr.mxu0 0.0
  %1212 = vmatpush1.msra.mxu0 0.0
  %1213 = vmatprep.mubr.f32.mxu0 0.0
  %1214 = vmatmul.mubr.f32.gmra.mrb[0].mxu0 %v1147
  %v1215 = vpop.f32.mrb[0].mxu0
  %v1216 = vadd.f32 0.0, %v1215
  %v1217 = vpop.f32.mrb[0].mxu0
  %1218 = vdwg.mxu0
  %1219 = vrot.lane.b32.xlu0 %v133, 64
  %v1220 = vpop.permute.xlu0 %1219
  %v1223 = vsel %vm144, %v836, 0
  %1225 = vmatprep.subr.mxu0 0.0
  %1226 = vmatpush1.msra.mxu0 %v1220
  %1227 = vmatprep.subr.mxu0 0.0
  %1228 = vmatpush1.msra.mxu0 0.0
  %1229 = vmatprep.subr.mxu0 0.0
  %1230 = vmatpush1.msra.mxu0 0.0
  %1231 = vmatprep.subr.mxu0 0.0
  %1232 = vmatpush1.msra.mxu0 0.0
  %1233 = vmatprep.subr.mxu0 0.0
  %1234 = vmatpush1.msra.mxu0 0.0
  %1235 = vmatprep.subr.mxu0 0.0
  %1236 = vmatpush1.msra.mxu0 0.0
  %1237 = vmatprep.subr.mxu0 0.0
  %1238 = vmatpush1.msra.mxu0 0.0
  %1239 = vmatprep.subr.mxu0 0.0
  %1240 = vmatpush1.msra.mxu0 0.0
  %1241 = vmatprep.subr.mxu0 0.0
  %1242 = vmatpush1.msra.mxu0 0.0
  %1243 = vmatprep.subr.mxu0 0.0
  %1244 = vmatpush1.msra.mxu0 0.0
  %1245 = vmatprep.subr.mxu0 0.0
  %1246 = vmatpush1.msra.mxu0 0.0
  %1247 = vmatprep.subr.mxu0 0.0
  %1248 = vmatpush1.msra.mxu0 0.0
  %1249 = vmatprep.subr.mxu0 0.0
  %1250 = vmatpush1.msra.mxu0 0.0
  %1251 = vmatprep.subr.mxu0 0.0
  %1252 = vmatpush1.msra.mxu0 0.0
  %1253 = vmatprep.subr.mxu0 0.0
  %1254 = vmatpush1.msra.mxu0 0.0
  %1255 = vmatprep.subr.mxu0 0.0
  %1256 = vmatpush1.msra.mxu0 0.0
  %1257 = vmatprep.subr.mxu0 0.0
  %1258 = vmatpush1.msra.mxu0 0.0
  %1259 = vmatprep.subr.mxu0 0.0
  %1260 = vmatpush1.msra.mxu0 0.0
  %1261 = vmatprep.subr.mxu0 0.0
  %1262 = vmatpush1.msra.mxu0 0.0
  %1263 = vmatprep.subr.mxu0 0.0
  %1264 = vmatpush1.msra.mxu0 0.0
  %1265 = vmatprep.subr.mxu0 0.0
  %1266 = vmatpush1.msra.mxu0 0.0
  %1267 = vmatprep.subr.mxu0 0.0
  %1268 = vmatpush1.msra.mxu0 0.0
  %1269 = vmatprep.subr.mxu0 0.0
  %1270 = vmatpush1.msra.mxu0 0.0
  %1271 = vmatprep.subr.mxu0 0.0
  %1272 = vmatpush1.msra.mxu0 0.0
  %1273 = vmatprep.subr.mxu0 0.0
  %1274 = vmatpush1.msra.mxu0 0.0
  %1275 = vmatprep.subr.mxu0 0.0
  %1276 = vmatpush1.msra.mxu0 0.0
  %1277 = vmatprep.subr.mxu0 0.0
  %1278 = vmatpush1.msra.mxu0 0.0
  %1279 = vmatprep.subr.mxu0 0.0
  %1280 = vmatpush1.msra.mxu0 0.0
  %1281 = vmatprep.subr.mxu0 0.0
  %1282 = vmatpush1.msra.mxu0 0.0
  %1283 = vmatprep.subr.mxu0 0.0
  %1284 = vmatpush1.msra.mxu0 0.0
  %1285 = vmatprep.subr.mxu0 0.0
  %1286 = vmatpush1.msra.mxu0 0.0
  %1287 = vmatprep.subr.mxu0 0.0
  %1288 = vmatpush1.msra.mxu0 0.0
  %1289 = vmatprep.mubr.f32.mxu0 0.0
  %1290 = vmatmul.mubr.f32.gmra.mrb[0].mxu0 %v1223
  %v1291 = vpop.f32.mrb[0].mxu0
  %v1292 = vadd.f32 0.0, %v1291
  %v1293 = vpop.f32.mrb[0].mxu0
  %1294 = vdwg.mxu0
  %1295 = vrot.lane.b32.xlu0 %v137, 64
  %v1296 = vpop.permute.xlu0 %1295
  %v1299 = vsel %vm144, %v837, 0
  %1301 = vmatprep.subr.mxu0 0.0
  %1302 = vmatpush1.msra.mxu0 %v1296
  %1303 = vmatprep.subr.mxu0 0.0
  %1304 = vmatpush1.msra.mxu0 0.0
  %1305 = vmatprep.subr.mxu0 0.0
  %1306 = vmatpush1.msra.mxu0 0.0
  %1307 = vmatprep.subr.mxu0 0.0
  %1308 = vmatpush1.msra.mxu0 0.0
  %1309 = vmatprep.subr.mxu0 0.0
  %1310 = vmatpush1.msra.mxu0 0.0
  %1311 = vmatprep.subr.mxu0 0.0
  %1312 = vmatpush1.msra.mxu0 0.0
  %1313 = vmatprep.subr.mxu0 0.0
  %1314 = vmatpush1.msra.mxu0 0.0
  %1315 = vmatprep.subr.mxu0 0.0
  %1316 = vmatpush1.msra.mxu0 0.0
  %1317 = vmatprep.subr.mxu0 0.0
  %1318 = vmatpush1.msra.mxu0 0.0
  %1319 = vmatprep.subr.mxu0 0.0
  %1320 = vmatpush1.msra.mxu0 0.0
  %1321 = vmatprep.subr.mxu0 0.0
  %1322 = vmatpush1.msra.mxu0 0.0
  %1323 = vmatprep.subr.mxu0 0.0
  %1324 = vmatpush1.msra.mxu0 0.0
  %1325 = vmatprep.subr.mxu0 0.0
  %1326 = vmatpush1.msra.mxu0 0.0
  %1327 = vmatprep.subr.mxu0 0.0
  %1328 = vmatpush1.msra.mxu0 0.0
  %1329 = vmatprep.subr.mxu0 0.0
  %1330 = vmatpush1.msra.mxu0 0.0
  %1331 = vmatprep.subr.mxu0 0.0
  %1332 = vmatpush1.msra.mxu0 0.0
  %1333 = vmatprep.subr.mxu0 0.0
  %1334 = vmatpush1.msra.mxu0 0.0
  %1335 = vmatprep.subr.mxu0 0.0
  %1336 = vmatpush1.msra.mxu0 0.0
  %1337 = vmatprep.subr.mxu0 0.0
  %1338 = vmatpush1.msra.mxu0 0.0
  %1339 = vmatprep.subr.mxu0 0.0
  %1340 = vmatpush1.msra.mxu0 0.0
  %1341 = vmatprep.subr.mxu0 0.0
  %1342 = vmatpush1.msra.mxu0 0.0
  %1343 = vmatprep.subr.mxu0 0.0
  %1344 = vmatpush1.msra.mxu0 0.0
  %1345 = vmatprep.subr.mxu0 0.0
  %1346 = vmatpush1.msra.mxu0 0.0
  %1347 = vmatprep.subr.mxu0 0.0
  %1348 = vmatpush1.msra.mxu0 0.0
  %1349 = vmatprep.subr.mxu0 0.0
  %1350 = vmatpush1.msra.mxu0 0.0
  %1351 = vmatprep.subr.mxu0 0.0
  %1352 = vmatpush1.msra.mxu0 0.0
  %1353 = vmatprep.subr.mxu0 0.0
  %1354 = vmatpush1.msra.mxu0 0.0
  %1355 = vmatprep.subr.mxu0 0.0
  %1356 = vmatpush1.msra.mxu0 0.0
  %1357 = vmatprep.subr.mxu0 0.0
  %1358 = vmatpush1.msra.mxu0 0.0
  %1359 = vmatprep.subr.mxu0 0.0
  %1360 = vmatpush1.msra.mxu0 0.0
  %1361 = vmatprep.subr.mxu0 0.0
  %1362 = vmatpush1.msra.mxu0 0.0
  %1363 = vmatprep.subr.mxu0 0.0
  %1364 = vmatpush1.msra.mxu0 0.0
  %1365 = vmatprep.mubr.f32.mxu0 0.0
  %1366 = vmatmul.mubr.f32.gmra.mrb[0].mxu0 %v1299
  %v1367 = vpop.f32.mrb[0].mxu0
  %v1368 = vadd.f32 0.0, %v1367
  %v1369 = vpop.f32.mrb[0].mxu0
  %1370 = vdwg.mxu0
  %1371 = vrot.lane.b32.xlu0 %v141, 64
  %v1372 = vpop.permute.xlu0 %1371
  %v1375 = vsel %vm144, %v838, 0
  %1377 = vmatprep.subr.mxu0 0.0
  %1378 = vmatpush1.msra.mxu0 %v1372
  %1379 = vmatprep.subr.mxu0 0.0
  %1380 = vmatpush1.msra.mxu0 0.0
  %1381 = vmatprep.subr.mxu0 0.0
  %1382 = vmatpush1.msra.mxu0 0.0
  %1383 = vmatprep.subr.mxu0 0.0
  %1384 = vmatpush1.msra.mxu0 0.0
  %1385 = vmatprep.subr.mxu0 0.0
  %1386 = vmatpush1.msra.mxu0 0.0
  %1387 = vmatprep.subr.mxu0 0.0
  %1388 = vmatpush1.msra.mxu0 0.0
  %1389 = vmatprep.subr.mxu0 0.0
  %1390 = vmatpush1.msra.mxu0 0.0
  %1391 = vmatprep.subr.mxu0 0.0
  %1392 = vmatpush1.msra.mxu0 0.0
  %1393 = vmatprep.subr.mxu0 0.0
  %1394 = vmatpush1.msra.mxu0 0.0
  %1395 = vmatprep.subr.mxu0 0.0
  %1396 = vmatpush1.msra.mxu0 0.0
  %1397 = vmatprep.subr.mxu0 0.0
  %1398 = vmatpush1.msra.mxu0 0.0
  %1399 = vmatprep.subr.mxu0 0.0
  %1400 = vmatpush1.msra.mxu0 0.0
  %1401 = vmatprep.subr.mxu0 0.0
  %1402 = vmatpush1.msra.mxu0 0.0
  %1403 = vmatprep.subr.mxu0 0.0
  %1404 = vmatpush1.msra.mxu0 0.0
  %1405 = vmatprep.subr.mxu0 0.0
  %1406 = vmatpush1.msra.mxu0 0.0
  %1407 = vmatprep.subr.mxu0 0.0
  %1408 = vmatpush1.msra.mxu0 0.0
  %1409 = vmatprep.subr.mxu0 0.0
  %1410 = vmatpush1.msra.mxu0 0.0
  %1411 = vmatprep.subr.mxu0 0.0
  %1412 = vmatpush1.msra.mxu0 0.0
  %1413 = vmatprep.subr.mxu0 0.0
  %1414 = vmatpush1.msra.mxu0 0.0
  %1415 = vmatprep.subr.mxu0 0.0
  %1416 = vmatpush1.msra.mxu0 0.0
  %1417 = vmatprep.subr.mxu0 0.0
  %1418 = vmatpush1.msra.mxu0 0.0
  %1419 = vmatprep.subr.mxu0 0.0
  %1420 = vmatpush1.msra.mxu0 0.0
  %1421 = vmatprep.subr.mxu0 0.0
  %1422 = vmatpush1.msra.mxu0 0.0
  %1423 = vmatprep.subr.mxu0 0.0
  %1424 = vmatpush1.msra.mxu0 0.0
  %1425 = vmatprep.subr.mxu0 0.0
  %1426 = vmatpush1.msra.mxu0 0.0
  %1427 = vmatprep.subr.mxu0 0.0
  %1428 = vmatpush1.msra.mxu0 0.0
  %1429 = vmatprep.subr.mxu0 0.0
  %1430 = vmatpush1.msra.mxu0 0.0
  %1431 = vmatprep.subr.mxu0 0.0
  %1432 = vmatpush1.msra.mxu0 0.0
  %1433 = vmatprep.subr.mxu0 0.0
  %1434 = vmatpush1.msra.mxu0 0.0
  %1435 = vmatprep.subr.mxu0 0.0
  %1436 = vmatpush1.msra.mxu0 0.0
  %1437 = vmatprep.subr.mxu0 0.0
  %1438 = vmatpush1.msra.mxu0 0.0
  %1439 = vmatprep.subr.mxu0 0.0
  %1440 = vmatpush1.msra.mxu0 0.0
  %1441 = vmatprep.mubr.f32.mxu0 0.0
  %1442 = vmatmul.mubr.f32.gmra.mrb[0].mxu0 %v1375
  %v1443 = vpop.f32.mrb[0].mxu0
  %v1444 = vadd.f32 0.0, %v1443
  %v1445 = vpop.f32.mrb[0].mxu0
  %1446 = vdwg.mxu0
  %1449 = vrot.lane.b32.xlu0 %v988, 8
  %v1450 = vpop.permute.xlu0 %1449
  %1451 = vrot.lane.b32.xlu0 %v1292, 8
  %v1452 = vpop.permute.xlu0 %1451
  %1457 = vrot.lane.b32.xlu0 %v1064, 16
  %v1458 = vpop.permute.xlu0 %1457
  %1459 = vrot.lane.b32.xlu0 %v1368, 16
  %v1460 = vpop.permute.xlu0 %1459
  %1465 = vrot.lane.b32.xlu0 %v1140, 24
  %v1466 = vpop.permute.xlu0 %1465
  %1467 = vrot.lane.b32.xlu0 %v1444, 24
  %v1468 = vpop.permute.xlu0 %1467
  %v1471 = vsel %vm144, %v912, %v1450
  %v1472 = vsel %vm144, %v1216, %v1452
  %vm1473 = vcmask 130048
  %v1474 = vsel %vm1473, %v1471, %v1458
  %v1475 = vsel %vm1473, %v1472, %v1460
  %vm1476 = vcmask 195584
  %v1477 = vsel %vm1476, %v1474, %v1466
  %v1478 = vsel %vm1476, %v1475, %v1468
  %v1479 = vld [vmem:[%s3] sm:$0xff]
  %v1480 = vld [vmem:[%s3 + $0x8] sm:$0xff]
  %v1481 = vld [vmem:[%s3 + $0x10] sm:$0xff]
  %v1482 = vld [vmem:[%s3 + $0x18] sm:$0xff]
  %v1483 = vlaneseq
  %v1484 = vshrl.u32 %v1483, 7
  %v1485 = vsub.s32 0, %v1484
  %v1486 = vrot.slane %v31, %v1485
  %v1488 = vsel %vm46, %v1477, 0
  %v1491 = vsel %vm46, %v1478, 0
  %1493 = vmatprep.subr.mxu0 0.0
  %1494 = vmatpush1.msra.mxu0 %v1479
  %1495 = vmatprep.subr.mxu0 0.0
  %1496 = vmatpush1.msra.mxu0 %v1480
  %1497 = vmatprep.subr.mxu0 0.0
  %1498 = vmatpush1.msra.mxu0 %v1481
  %1499 = vmatprep.subr.mxu0 0.0
  %1500 = vmatpush1.msra.mxu0 %v1482
  %1501 = vmatprep.subr.mxu0 0.0
  %1502 = vmatpush1.msra.mxu0 0.0
  %1503 = vmatprep.subr.mxu0 0.0
  %1504 = vmatpush1.msra.mxu0 0.0
  %1505 = vmatprep.subr.mxu0 0.0
  %1506 = vmatpush1.msra.mxu0 0.0
  %1507 = vmatprep.subr.mxu0 0.0
  %1508 = vmatpush1.msra.mxu0 0.0
  %1509 = vmatprep.subr.mxu0 0.0
  %1510 = vmatpush1.msra.mxu0 0.0
  %1511 = vmatprep.subr.mxu0 0.0
  %1512 = vmatpush1.msra.mxu0 0.0
  %1513 = vmatprep.subr.mxu0 0.0
  %1514 = vmatpush1.msra.mxu0 0.0
  %1515 = vmatprep.subr.mxu0 0.0
  %1516 = vmatpush1.msra.mxu0 0.0
  %1517 = vmatprep.subr.mxu0 0.0
  %1518 = vmatpush1.msra.mxu0 0.0
  %1519 = vmatprep.subr.mxu0 0.0
  %1520 = vmatpush1.msra.mxu0 0.0
  %1521 = vmatprep.subr.mxu0 0.0
  %1522 = vmatpush1.msra.mxu0 0.0
  %1523 = vmatprep.subr.mxu0 0.0
  %1524 = vmatpush1.msra.mxu0 0.0
  %1525 = vmatprep.subr.mxu0 0.0
  %1526 = vmatpush1.msra.mxu0 0.0
  %1527 = vmatprep.subr.mxu0 0.0
  %1528 = vmatpush1.msra.mxu0 0.0
  %1529 = vmatprep.subr.mxu0 0.0
  %1530 = vmatpush1.msra.mxu0 0.0
  %1531 = vmatprep.subr.mxu0 0.0
  %1532 = vmatpush1.msra.mxu0 0.0
  %1533 = vmatprep.subr.mxu0 0.0
  %1534 = vmatpush1.msra.mxu0 0.0
  %1535 = vmatprep.subr.mxu0 0.0
  %1536 = vmatpush1.msra.mxu0 0.0
  %1537 = vmatprep.subr.mxu0 0.0
  %1538 = vmatpush1.msra.mxu0 0.0
  %1539 = vmatprep.subr.mxu0 0.0
  %1540 = vmatpush1.msra.mxu0 0.0
  %1541 = vmatprep.subr.mxu0 0.0
  %1542 = vmatpush1.msra.mxu0 0.0
  %1543 = vmatprep.subr.mxu0 0.0
  %1544 = vmatpush1.msra.mxu0 0.0
  %1545 = vmatprep.subr.mxu0 0.0
  %1546 = vmatpush1.msra.mxu0 0.0
  %1547 = vmatprep.subr.mxu0 0.0
  %1548 = vmatpush1.msra.mxu0 0.0
  %1549 = vmatprep.subr.mxu0 0.0
  %1550 = vmatpush1.msra.mxu0 0.0
  %1551 = vmatprep.subr.mxu0 0.0
  %1552 = vmatpush1.msra.mxu0 0.0
  %1553 = vmatprep.subr.mxu0 0.0
  %1554 = vmatpush1.msra.mxu0 0.0
  %1555 = vmatprep.subr.mxu0 0.0
  %1556 = vmatpush1.msra.mxu0 0.0
  %1557 = vmatprep.mubr.f32.mxu0 0.0
  %1558 = vmatmul.mubr.f32.gmra.mrb[0].mxu0 %v1488
  %v1559 = vpop.f32.mrb[0].mxu0
  %v1560 = vadd.f32 %v1486, %v1559
  %v1561 = vpop.f32.mrb[0].mxu0
  %1562 = vmatprep.mubr.f32.mxu0 0.0
  %1563 = vmatmul.mubr.f32.gmra.mrb[0].mxu0 %v1491
  %v1564 = vpop.f32.mrb[0].mxu0
  %v1565 = vadd.f32 %v1486, %v1564
  %v1566 = vpop.f32.mrb[0].mxu0
  %1567 = vdwg.mxu0
  %v1568 = vadd.f32 %v1560, %v26
  %v1569 = vadd.f32 %v1565, %v27
  %v1570 = vsel %vm46, %v1568, 0.0
  %1571 = vadd.xlane.f32.xlu0 %v1570
  %v1572 = vpop.xlane.xlu0 %1571
  %v1573 = vsel %vm46, %v1569, 0.0
  %1574 = vadd.xlane.f32.xlu0 %v1573
  %v1575 = vpop.xlane.xlu0 %1574
  %v1576 = vrcp.pop 32.0
  %v1577 = vmul.f32 %v1572, %v1576
  %v1578 = vmul.f32 %v1575, %v1576
  %v1579 = vsub.f32 %v1568, %v1577
  %v1580 = vsub.f32 %v1569, %v1578
  %v1581 = vmul.f32 %v1579, %v1579
  %v1582 = vmul.f32 %v1580, %v1580
  %v1583 = vsel %vm46, %v1581, 0.0
  %1584 = vadd.xlane.f32.xlu0 %v1583
  %v1585 = vpop.xlane.xlu0 %1584
  %v1586 = vsel %vm46, %v1582, 0.0
  %1587 = vadd.xlane.f32.xlu0 %v1586
  %v1588 = vpop.xlane.xlu0 %1587
  %v1589 = vmul.f32 %v1585, %v1576
  %v1590 = vmul.f32 %v1588, %v1576
  %v1591 = vadd.f32 %v1589, 1e-12
  %v1592 = vadd.f32 %v1590, 1e-12
  %v1593 = vrsqrt.pop %v1591
  %v1594 = vrsqrt.pop %v1592
  %v1595 = vmul.f32 %v1579, %v1593
  %v1596 = vmul.f32 %v1580, %v1594
  %v1597 = vlaneseq
  %v1598 = vshrl.u32 %v1597, 7
  %v1599 = vsub.s32 0, %v1598
  %v1600 = vrot.slane %v32, %v1599
  %v1601 = vmul.f32 %v1595, %v1600
  %v1602 = vmul.f32 %v1596, %v1600
  %v1603 = vlaneseq
  %v1604 = vshrl.u32 %v1603, 7
  %v1605 = vsub.s32 0, %v1604
  %v1606 = vrot.slane %v33, %v1605
  %v1607 = vadd.f32 %v1601, %v1606
  %v1608 = vadd.f32 %v1602, %v1606
  %v1609 = vld [vmem:[%s4] sm:$0xff]
  %v1610 = vld [vmem:[%s4 + $0x8] sm:$0xff]
  %v1611 = vld [vmem:[%s4 + $0x10] sm:$0xff]
  %v1612 = vld [vmem:[%s4 + $0x18] sm:$0xff]
  %v1613 = vlaneseq
  %v1614 = vshrl.u32 %v1613, 7
  %v1615 = vsub.s32 0, %v1614
  %v1616 = vrot.slane %v34, %v1615
  %v1618 = vsel %vm46, %v1607, 0
  %v1621 = vsel %vm46, %v1608, 0
  %1623 = vmatprep.subr.mxu0 0.0
  %1624 = vmatpush1.msra.mxu0 %v1609
  %1625 = vmatprep.subr.mxu0 0.0
  %1626 = vmatpush1.msra.mxu0 %v1610
  %1627 = vmatprep.subr.mxu0 0.0
  %1628 = vmatpush1.msra.mxu0 %v1611
  %1629 = vmatprep.subr.mxu0 0.0
  %1630 = vmatpush1.msra.mxu0 %v1612
  %1631 = vmatprep.subr.mxu0 0.0
  %1632 = vmatpush1.msra.mxu0 0.0
  %1633 = vmatprep.subr.mxu0 0.0
  %1634 = vmatpush1.msra.mxu0 0.0
  %1635 = vmatprep.subr.mxu0 0.0
  %1636 = vmatpush1.msra.mxu0 0.0
  %1637 = vmatprep.subr.mxu0 0.0
  %1638 = vmatpush1.msra.mxu0 0.0
  %1639 = vmatprep.subr.mxu0 0.0
  %1640 = vmatpush1.msra.mxu0 0.0
  %1641 = vmatprep.subr.mxu0 0.0
  %1642 = vmatpush1.msra.mxu0 0.0
  %1643 = vmatprep.subr.mxu0 0.0
  %1644 = vmatpush1.msra.mxu0 0.0
  %1645 = vmatprep.subr.mxu0 0.0
  %1646 = vmatpush1.msra.mxu0 0.0
  %1647 = vmatprep.subr.mxu0 0.0
  %1648 = vmatpush1.msra.mxu0 0.0
  %1649 = vmatprep.subr.mxu0 0.0
  %1650 = vmatpush1.msra.mxu0 0.0
  %1651 = vmatprep.subr.mxu0 0.0
  %1652 = vmatpush1.msra.mxu0 0.0
  %1653 = vmatprep.subr.mxu0 0.0
  %1654 = vmatpush1.msra.mxu0 0.0
  %1655 = vmatprep.subr.mxu0 0.0
  %1656 = vmatpush1.msra.mxu0 0.0
  %1657 = vmatprep.subr.mxu0 0.0
  %1658 = vmatpush1.msra.mxu0 0.0
  %1659 = vmatprep.subr.mxu0 0.0
  %1660 = vmatpush1.msra.mxu0 0.0
  %1661 = vmatprep.subr.mxu0 0.0
  %1662 = vmatpush1.msra.mxu0 0.0
  %1663 = vmatprep.subr.mxu0 0.0
  %1664 = vmatpush1.msra.mxu0 0.0
  %1665 = vmatprep.subr.mxu0 0.0
  %1666 = vmatpush1.msra.mxu0 0.0
  %1667 = vmatprep.subr.mxu0 0.0
  %1668 = vmatpush1.msra.mxu0 0.0
  %1669 = vmatprep.subr.mxu0 0.0
  %1670 = vmatpush1.msra.mxu0 0.0
  %1671 = vmatprep.subr.mxu0 0.0
  %1672 = vmatpush1.msra.mxu0 0.0
  %1673 = vmatprep.subr.mxu0 0.0
  %1674 = vmatpush1.msra.mxu0 0.0
  %1675 = vmatprep.subr.mxu0 0.0
  %1676 = vmatpush1.msra.mxu0 0.0
  %1677 = vmatprep.subr.mxu0 0.0
  %1678 = vmatpush1.msra.mxu0 0.0
  %1679 = vmatprep.subr.mxu0 0.0
  %1680 = vmatpush1.msra.mxu0 0.0
  %1681 = vmatprep.subr.mxu0 0.0
  %1682 = vmatpush1.msra.mxu0 0.0
  %1683 = vmatprep.subr.mxu0 0.0
  %1684 = vmatpush1.msra.mxu0 0.0
  %1685 = vmatprep.subr.mxu0 0.0
  %1686 = vmatpush1.msra.mxu0 0.0
  %1687 = vmatprep.mubr.f32.mxu0 0.0
  %1688 = vmatmul.mubr.f32.gmra.mrb[0].mxu0 %v1618
  %v1689 = vpop.f32.mrb[0].mxu0
  %v1690 = vadd.f32 %v1616, %v1689
  %v1691 = vpop.f32.mrb[0].mxu0
  %1692 = vmatprep.mubr.f32.mxu0 0.0
  %1693 = vmatmul.mubr.f32.gmra.mrb[0].mxu0 %v1621
  %v1694 = vpop.f32.mrb[0].mxu0
  %v1695 = vadd.f32 %v1616, %v1694
  %v1696 = vpop.f32.mrb[0].mxu0
  %1697 = vdwg.mxu0
  %v1698 = vmul.f32 %v1690, 0.5
  %v1699 = vmul.f32 %v1695, 0.5
  %v1700 = vmul.f32 %v1690, 0.70710677
  %v1701 = vmul.f32 %v1695, 0.70710677
  %vm1702 = vcmp.ge.f32.partialorder %v1700, 0.0
  %vm1703 = vcmp.ge.f32.partialorder %v1701, 0.0
  %v1704 = vsel %vm1702, 1.0, -1.0
  %v1705 = vsel %vm1703, 1.0, -1.0
  %v1706 = vand.u32 2147483647, %v1700
  %v1707 = vand.u32 2147483647, %v1701
  %v1708 = vmul.f32 %v1706, 0.3275911
  %v1709 = vmul.f32 %v1707, 0.3275911
  %v1710 = vadd.f32 %v1708, 1.0
  %v1711 = vadd.f32 %v1709, 1.0
  %v1712 = vrcp.pop %v1710
  %v1713 = vrcp.pop %v1711
  %v1714 = vmul.f32 %v1712, 1.0614054
  %v1715 = vmul.f32 %v1713, 1.0614054
  %v1716 = vadd.f32 %v1714, -1.4531521
  %v1717 = vadd.f32 %v1715, -1.4531521
  %v1718 = vmul.f32 %v1716, %v1712
  %v1719 = vmul.f32 %v1717, %v1713
  %v1720 = vadd.f32 %v1718, 1.4214138
  %v1721 = vadd.f32 %v1719, 1.4214138
  %v1722 = vmul.f32 %v1720, %v1712
  %v1723 = vmul.f32 %v1721, %v1713
  %v1724 = vadd.f32 %v1722, -0.28449672
  %v1725 = vadd.f32 %v1723, -0.28449672
  %v1726 = vmul.f32 %v1724, %v1712
  %v1727 = vmul.f32 %v1725, %v1713
  %v1728 = vadd.f32 %v1726, 0.2548296
  %v1729 = vadd.f32 %v1727, 0.2548296
  %v1730 = vmul.f32 %v1728, %v1712
  %v1731 = vmul.f32 %v1729, %v1713
  %v1732 = vsub.f32 0.0, %v1706
  %v1733 = vsub.f32 0.0, %v1707
  %v1734 = vmul.f32 %v1732, %v1706
  %v1735 = vmul.f32 %v1733, %v1707
  %v1736 = vmul.f32 %v1734, 1.442695
  %v1737 = vpow.pop %v1736
  %v1738 = vmul.f32 %v1735, 1.442695
  %v1739 = vpow.pop %v1738
  %v1740 = vmul.f32 %v1730, %v1737
  %v1741 = vmul.f32 %v1731, %v1739
  %v1742 = vsub.f32 1.0, %v1740
  %v1743 = vsub.f32 1.0, %v1741
  %v1744 = vmul.f32 %v1704, %v1742
  %v1745 = vmul.f32 %v1705, %v1743
  %v1746 = vadd.f32 %v1744, 1.0
  %v1747 = vadd.f32 %v1745, 1.0
  %v1748 = vmul.f32 %v1698, %v1746
  %v1749 = vmul.f32 %v1699, %v1747
  %v1750 = vld [vmem:[%s5] sm:$0xff]
  %v1751 = vld [vmem:[%s5 + $0x8] sm:$0xff]
  %v1752 = vld [vmem:[%s5 + $0x10] sm:$0xff]
  %v1753 = vld [vmem:[%s5 + $0x18] sm:$0xff]
  %v1754 = vld [vmem:[%s5 + $0x20] sm:$0xff]
  %v1755 = vld [vmem:[%s5 + $0x28] sm:$0xff]
  %v1756 = vld [vmem:[%s5 + $0x30] sm:$0xff]
  %v1757 = vld [vmem:[%s5 + $0x38] sm:$0xff]
  %v1758 = vld [vmem:[%s5 + $0x40] sm:$0xff]
  %v1759 = vld [vmem:[%s5 + $0x48] sm:$0xff]
  %v1760 = vld [vmem:[%s5 + $0x50] sm:$0xff]
  %v1761 = vld [vmem:[%s5 + $0x58] sm:$0xff]
  %v1762 = vld [vmem:[%s5 + $0x60] sm:$0xff]
  %v1763 = vld [vmem:[%s5 + $0x68] sm:$0xff]
  %v1764 = vld [vmem:[%s5 + $0x70] sm:$0xff]
  %v1765 = vld [vmem:[%s5 + $0x78] sm:$0xff]
  %v1766 = vlaneseq
  %v1767 = vshrl.u32 %v1766, 7
  %v1768 = vsub.s32 0, %v1767
  %v1769 = vrot.slane %v35, %v1768
  %1770 = vmatprep.subr.mxu0 0.0
  %1771 = vmatpush1.msra.mxu0 %v1750
  %1772 = vmatprep.subr.mxu0 0.0
  %1773 = vmatpush1.msra.mxu0 %v1751
  %1774 = vmatprep.subr.mxu0 0.0
  %1775 = vmatpush1.msra.mxu0 %v1752
  %1776 = vmatprep.subr.mxu0 0.0
  %1777 = vmatpush1.msra.mxu0 %v1753
  %1778 = vmatprep.subr.mxu0 0.0
  %1779 = vmatpush1.msra.mxu0 %v1754
  %1780 = vmatprep.subr.mxu0 0.0
  %1781 = vmatpush1.msra.mxu0 %v1755
  %1782 = vmatprep.subr.mxu0 0.0
  %1783 = vmatpush1.msra.mxu0 %v1756
  %1784 = vmatprep.subr.mxu0 0.0
  %1785 = vmatpush1.msra.mxu0 %v1757
  %1786 = vmatprep.subr.mxu0 0.0
  %1787 = vmatpush1.msra.mxu0 %v1758
  %1788 = vmatprep.subr.mxu0 0.0
  %1789 = vmatpush1.msra.mxu0 %v1759
  %1790 = vmatprep.subr.mxu0 0.0
  %1791 = vmatpush1.msra.mxu0 %v1760
  %1792 = vmatprep.subr.mxu0 0.0
  %1793 = vmatpush1.msra.mxu0 %v1761
  %1794 = vmatprep.subr.mxu0 0.0
  %1795 = vmatpush1.msra.mxu0 %v1762
  %1796 = vmatprep.subr.mxu0 0.0
  %1797 = vmatpush1.msra.mxu0 %v1763
  %1798 = vmatprep.subr.mxu0 0.0
  %1799 = vmatpush1.msra.mxu0 %v1764
  %1800 = vmatprep.subr.mxu0 0.0
  %1801 = vmatpush1.msra.mxu0 %v1765
  %1802 = vmatprep.subr.mxu0 0.0
  %1803 = vmatpush1.msra.mxu0 0.0
  %1804 = vmatprep.subr.mxu0 0.0
  %1805 = vmatpush1.msra.mxu0 0.0
  %1806 = vmatprep.subr.mxu0 0.0
  %1807 = vmatpush1.msra.mxu0 0.0
  %1808 = vmatprep.subr.mxu0 0.0
  %1809 = vmatpush1.msra.mxu0 0.0
  %1810 = vmatprep.subr.mxu0 0.0
  %1811 = vmatpush1.msra.mxu0 0.0
  %1812 = vmatprep.subr.mxu0 0.0
  %1813 = vmatpush1.msra.mxu0 0.0
  %1814 = vmatprep.subr.mxu0 0.0
  %1815 = vmatpush1.msra.mxu0 0.0
  %1816 = vmatprep.subr.mxu0 0.0
  %1817 = vmatpush1.msra.mxu0 0.0
  %1818 = vmatprep.subr.mxu0 0.0
  %1819 = vmatpush1.msra.mxu0 0.0
  %1820 = vmatprep.subr.mxu0 0.0
  %1821 = vmatpush1.msra.mxu0 0.0
  %1822 = vmatprep.subr.mxu0 0.0
  %1823 = vmatpush1.msra.mxu0 0.0
  %1824 = vmatprep.subr.mxu0 0.0
  %1825 = vmatpush1.msra.mxu0 0.0
  %1826 = vmatprep.subr.mxu0 0.0
  %1827 = vmatpush1.msra.mxu0 0.0
  %1828 = vmatprep.subr.mxu0 0.0
  %1829 = vmatpush1.msra.mxu0 0.0
  %1830 = vmatprep.subr.mxu0 0.0
  %1831 = vmatpush1.msra.mxu0 0.0
  %1832 = vmatprep.subr.mxu0 0.0
  %1833 = vmatpush1.msra.mxu0 0.0
  %1834 = vmatprep.mubr.f32.mxu0 0.0
  %1835 = vmatmul.mubr.f32.gmra.mrb[0].mxu0 %v1748
  %v1836 = vpop.f32.mrb[0].mxu0
  %v1837 = vadd.f32 %v1769, %v1836
  %v1838 = vpop.f32.mrb[0].mxu0
  %1839 = vmatprep.mubr.f32.mxu0 0.0
  %1840 = vmatmul.mubr.f32.gmra.mrb[0].mxu0 %v1749
  %v1841 = vpop.f32.mrb[0].mxu0
  %v1842 = vadd.f32 %v1769, %v1841
  %v1843 = vpop.f32.mrb[0].mxu0
  %1844 = vdwg.mxu0
  %v1845 = vadd.f32 %v1837, %v1607
  %v1846 = vadd.f32 %v1842, %v1608
  %v1847 = vsel %vm46, %v1845, 0.0
  %1848 = vadd.xlane.f32.xlu0 %v1847
  %v1849 = vpop.xlane.xlu0 %1848
  %v1850 = vsel %vm46, %v1846, 0.0
  %1851 = vadd.xlane.f32.xlu0 %v1850
  %v1852 = vpop.xlane.xlu0 %1851
  %v1853 = vmul.f32 %v1849, %v1576
  %v1854 = vmul.f32 %v1852, %v1576
  %v1855 = vsub.f32 %v1845, %v1853
  %v1856 = vsub.f32 %v1846, %v1854
  %v1857 = vmul.f32 %v1855, %v1855
  %v1858 = vmul.f32 %v1856, %v1856
  %v1859 = vsel %vm46, %v1857, 0.0
  %1860 = vadd.xlane.f32.xlu0 %v1859
  %v1861 = vpop.xlane.xlu0 %1860
  %v1862 = vsel %vm46, %v1858, 0.0
  %1863 = vadd.xlane.f32.xlu0 %v1862
  %v1864 = vpop.xlane.xlu0 %1863
  %v1865 = vmul.f32 %v1861, %v1576
  %v1866 = vmul.f32 %v1864, %v1576
  %v1867 = vadd.f32 %v1865, 1e-12
  %v1868 = vadd.f32 %v1866, 1e-12
  %v1869 = vrsqrt.pop %v1867
  %v1870 = vrsqrt.pop %v1868
  %v1871 = vmul.f32 %v1855, %v1869
  %v1872 = vmul.f32 %v1856, %v1870
  %v1873 = vlaneseq
  %v1874 = vshrl.u32 %v1873, 7
  %v1875 = vsub.s32 0, %v1874
  %v1876 = vrot.slane %v36, %v1875
  %v1877 = vmul.f32 %v1871, %v1876
  %v1878 = vmul.f32 %v1872, %v1876
  %v1879 = vlaneseq
  %v1880 = vshrl.u32 %v1879, 7
  %v1881 = vsub.s32 0, %v1880
  %v1882 = vrot.slane %v37, %v1881
  %v1883 = vadd.f32 %v1877, %v1882
  %v1884 = vadd.f32 %v1878, %v1882
  %1885 = vst.msk [vmem:[%s7] sm:$0xff] %vm46, %v1883
  %1886 = vst.msk [vmem:[%s7 + $0x8] sm:$0xff] %vm46, %v1884
  // Predicated region
  $region30: #{bert_encoder.2} parent=0 // pred_check
    _
  $region31: #{bert_encoder.2} parent=0 // pred_check_branch
    %1888 = sbr.rel (0) target = $region33
  $region32: #{bert_encoder.2} parent=0 // pred_region
    _
  $region33: #{bert_encoder.2} parent=0 // pred_fallthru
    _
  // Predicated region
  $region34: #{bert_encoder.2} parent=0 // pred_check
    _
  $region35: #{bert_encoder.2} parent=0 // pred_check_branch
    %1890 = sbr.rel (0) target = $region37
  $region36: #{bert_encoder.2} parent=0 // pred_region
    _
  $region37: #{bert_encoder.2} parent=0 // pred_fallthru
    _

// kernel: bert_encoder.3
$region0: #{bert_encoder.3}
  #allocation0 [shape = 'u32[]', space=smem, size = 0x4, offset = 0x4, fixed_abs, tag = 'smem constant byte address 0x4 - core index']
  #allocation1 [shape = 'u32[144,128]{1,0:T(1,128)}', space=vmem, size = 0x12000, scoped, tag = 'internal scratch']
  %s0 = inlined_call_operand.vmem [shape: f32[16,32], index: 0, kind: input, shape index: {}]
  %s1 = inlined_call_operand.vmem [shape: f32[16,8], index: 1, kind: input, shape index: {}]
  %s2 = inlined_call_operand.vmem [shape: f32[32,96], index: 2, kind: input, shape index: {}]
  %s3 = inlined_call_operand.vmem [shape: f32[32,32], index: 3, kind: input, shape index: {}]
  %s4 = inlined_call_operand.vmem [shape: f32[32,128], index: 4, kind: input, shape index: {}]
  %s5 = inlined_call_operand.vmem [shape: f32[128,32], index: 5, kind: input, shape index: {}]
  %s6 = inlined_call_operand.vmem [shape: f32[8,128], index: 6, kind: input, shape index: {}]
  %s7 = inlined_call_operand.hbm [shape: f32[16,32], index: 7, kind: output, shape index: {}]
  %s8 = sld [smem:[#allocation0]]
  $region38: #{bert_encoder.3} parent=0
    _
  %s10 = ssub.s32 1, %s8
  %s11 = scalar_select 0, %s10, %s8
  $region1: #{bert_encoder.3} parent=0
    #allocation2 [shape = 'u8[8192]{0}', space=vmem, size = 0x2000, scoped, tag = 'output window, operand 0, single buffered']
    #allocation3 [shape = 's32[1]{0}', space=sflag, size = 0x4, scoped, tag = 'scoped memory for bert_encoder.3']
    %12 = vsyncpa [#allocation3], 0
    // Predicated region
    $region2: #{bert_encoder.3} parent=1 // pred_check
      _
    $region3: #{bert_encoder.3} parent=1 // pred_check_branch
      %14 = sbr.rel (0) target = $region5
    $region4: #{bert_encoder.3} parent=1 // pred_region
      _
    $region5: #{bert_encoder.3} parent=1 // pred_fallthru
      _
    // Predicated region
    $region6: #{bert_encoder.3} parent=1 // pred_check
      _
    $region7: #{bert_encoder.3} parent=1 // pred_check_branch
      %16 = sbr.rel (0) target = $region9
    $region8: #{bert_encoder.3} parent=1 // pred_region
      _
    $region9: #{bert_encoder.3} parent=1 // pred_fallthru
      _
    // Predicated region
    $region10: #{bert_encoder.3} parent=1 // pred_check
      _
    $region11: #{bert_encoder.3} parent=1 // pred_check_branch
      %18 = sbr.rel (0) target = $region13
    $region12: #{bert_encoder.3} parent=1 // pred_region
      _
    $region13: #{bert_encoder.3} parent=1 // pred_fallthru
      _
    // Predicated region
    $region14: #{bert_encoder.3} parent=1 // pred_check
      _
    $region15: #{bert_encoder.3} parent=1 // pred_check_branch
      %20 = sbr.rel (0) target = $region17
    $region16: #{bert_encoder.3} parent=1 // pred_region
      _
    $region17: #{bert_encoder.3} parent=1 // pred_fallthru
      _
    // Predicated region
    $region18: #{bert_encoder.3} parent=1 // pred_check
      _
    $region19: #{bert_encoder.3} parent=1 // pred_check_branch
      %22 = sbr.rel (0) target = $region21
    $region20: #{bert_encoder.3} parent=1 // pred_region
      _
    $region21: #{bert_encoder.3} parent=1 // pred_fallthru
      _
    // Predicated region
    $region22: #{bert_encoder.3} parent=1 // pred_check
      _
    $region23: #{bert_encoder.3} parent=1 // pred_check_branch
      %24 = sbr.rel (0) target = $region25
    $region24: #{bert_encoder.3} parent=1 // pred_region
      _
    $region25: #{bert_encoder.3} parent=1 // pred_fallthru
      _
    // Predicated region
    $region26: #{bert_encoder.3} parent=1 // pred_check
      _
    $region27: #{bert_encoder.3} parent=1 // pred_check_branch
      %26 = sbr.rel (0) target = $region29
    $region28: #{bert_encoder.3} parent=1 // pred_region
      _
    $region29: #{bert_encoder.3} parent=1 // pred_fallthru
      _
    %v27 = vld [vmem:[%s0] sm:$0xff]
    %v28 = vld [vmem:[%s0 + $0x8] sm:$0xff]
    %v29 = vld [vmem:[%s1] sm:$0xff]
    %v30 = vld [vmem:[%s1 + $0x8] sm:$0xff]
    %v31 = vld [vmem:[%s6] sm:$0x1]
    %v32 = vld [vmem:[%s6 + $0x1] sm:$0x1]
    %v33 = vld [vmem:[%s6 + $0x2] sm:$0x1]
    %v34 = vld [vmem:[%s6 + $0x3] sm:$0x1]
    %v35 = vld [vmem:[%s6 + $0x4] sm:$0x1]
    %v36 = vld [vmem:[%s6 + $0x5] sm:$0x1]
    %v37 = vld [vmem:[%s6 + $0x6] sm:$0x1]
    %v38 = vld [vmem:[%s6 + $0x7] sm:$0x1]
    %v39 = vld [vmem:[%s2] sm:$0xff]
    %v40 = vld [vmem:[%s2 + $0x8] sm:$0xff]
    %v41 = vld [vmem:[%s2 + $0x10] sm:$0xff]
    %v42 = vld [vmem:[%s2 + $0x18] sm:$0xff]
    %v43 = vlaneseq
    %v44 = vshrl.u32 %v43, 7
    %v45 = vsub.s32 0, %v44
    %v46 = vrot.slane %v31, %v45
    %vm47 = vcmask 261120
    %v49 = vsel %vm47, %v27, 0
    %v52 = vsel %vm47, %v28, 0
    %54 = vmatprep.subr.mxu0 0.0
    %55 = vmatpush1.msra.mxu0 %v39
    %56 = vmatprep.subr.mxu0 0.0
    %57 = vmatpush1.msra.mxu0 %v40
    %58 = vmatprep.subr.mxu0 0.0
    %59 = vmatpush1.msra.mxu0 %v41
    %60 = vmatprep.subr.mxu0 0.0
    %61 = vmatpush1.msra.mxu0 %v42
    %62 = vmatprep.subr.mxu0 0.0
    %63 = vmatpush1.msra.mxu0 0.0
    %64 = vmatprep.subr.mxu0 0.0
    %65 = vmatpush1.msra.mxu0 0.0
    %66 = vmatprep.subr.mxu0 0.0
    %67 = vmatpush1.msra.mxu0 0.0
    %68 = vmatprep.subr.mxu0 0.0
    %69 = vmatpush1.msra.mxu0 0.0
    %70 = vmatprep.subr.mxu0 0.0
    %71 = vmatpush1.msra.mxu0 0.0
    %72 = vmatprep.subr.mxu0 0.0
    %73 = vmatpush1.msra.mxu0 0.0
    %74 = vmatprep.subr.mxu0 0.0
    %75 = vmatpush1.msra.mxu0 0.0
    %76 = vmatprep.subr.mxu0 0.0
    %77 = vmatpush1.msra.mxu0 0.0
    %78 = vmatprep.subr.mxu0 0.0
    %79 = vmatpush1.msra.mxu0 0.0
    %80 = vmatprep.subr.mxu0 0.0
    %81 = vmatpush1.msra.mxu0 0.0
    %82 = vmatprep.subr.mxu0 0.0
    %83 = vmatpush1.msra.mxu0 0.0
    %84 = vmatprep.subr.mxu0 0.0
    %85 = vmatpush1.msra.mxu0 0.0
    %86 = vmatprep.subr.mxu0 0.0
    %87 = vmatpush1.msra.mxu0 0.0
    %88 = vmatprep.subr.mxu0 0.0
    %89 = vmatpush1.msra.mxu0 0.0
    %90 = vmatprep.subr.mxu0 0.0
    %91 = vmatpush1.msra.mxu0 0.0
    %92 = vmatprep.subr.mxu0 0.0
    %93 = vmatpush1.msra.mxu0 0.0
    %94 = vmatprep.subr.mxu0 0.0
    %95 = vmatpush1.msra.mxu0 0.0
    %96 = vmatprep.subr.mxu0 0.0
    %97 = vmatpush1.msra.mxu0 0.0
    %98 = vmatprep.subr.mxu0 0.0
    %99 = vmatpush1.msra.mxu0 0.0
    %100 = vmatprep.subr.mxu0 0.0
    %101 = vmatpush1.msra.mxu0 0.0
    %102 = vmatprep.subr.mxu0 0.0
    %103 = vmatpush1.msra.mxu0 0.0
    %104 = vmatprep.subr.mxu0 0.0
    %105 = vmatpush1.msra.mxu0 0.0
    %106 = vmatprep.subr.mxu0 0.0
    %107 = vmatpush1.msra.mxu0 0.0
    %108 = vmatprep.subr.mxu0 0.0
    %109 = vmatpush1.msra.mxu0 0.0
    %110 = vmatprep.subr.mxu0 0.0
    %111 = vmatpush1.msra.mxu0 0.0
    %112 = vmatprep.subr.mxu0 0.0
    %113 = vmatpush1.msra.mxu0 0.0
    %114 = vmatprep.subr.mxu0 0.0
    %115 = vmatpush1.msra.mxu0 0.0
    %116 = vmatprep.subr.mxu0 0.0
    %117 = vmatpush1.msra.mxu0 0.0
    %118 = vmatprep.mubr.f32.mxu0 0.0
    %119 = vmatmul.mubr.f32.gmra.mrb[0].mxu0 %v49
    %v120 = vpop.f32.mrb[0].mxu0
    %v121 = vadd.f32 %v46, %v120
    %v122 = vpop.f32.mrb[0].mxu0
    %123 = vmatprep.mubr.f32.mxu0 0.0
    %124 = vmatmul.mubr.f32.gmra.mrb[0].mxu0 %v52
    %v125 = vpop.f32.mrb[0].mxu0
    %v126 = vadd.f32 %v46, %v125
    %v127 = vpop.f32.mrb[0].mxu0
    %128 = vdwg.mxu0
    %131 = vrot.lane.b32.xlu0 %v121, 120
    %v132 = vpop.permute.xlu0 %131
    %133 = vrot.lane.b32.xlu0 %v126, 120
    %v134 = vpop.permute.xlu0 %133
    %135 = vrot.lane.b32.xlu0 %v121, 112
    %v136 = vpop.permute.xlu0 %135
    %137 = vrot.lane.b32.xlu0 %v126, 112
    %v138 = vpop.permute.xlu0 %137
    %139 = vrot.lane.b32.xlu0 %v121, 104
    %v140 = vpop.permute.xlu0 %139
    %141 = vrot.lane.b32.xlu0 %v126, 104
    %v142 = vpop.permute.xlu0 %141
    %143 = vrot.lane.b32.xlu0 %v121, 96
    %v144 = vpop.permute.xlu0 %143
    %vm145 = vcmask 64512
    %v146 = vsel %vm145, %v121, 0
    %v148 = vsel %vm145, %v144, 0
    %150 = vmatprep.subr.mxu0 0.0
    %151 = vmatpush1.xpose.msra.mxu0 %v148
    %152 = vmatprep.subr.mxu0 0.0
    %153 = vmatpush1.xpose.msra.mxu0 0.0
    %154 = vmatprep.subr.mxu0 0.0
    %155 = vmatpush1.xpose.msra.mxu0 0.0
    %156 = vmatprep.subr.mxu0 0.0
    %157 = vmatpush1.xpose.msra.mxu0 0.0
    %158 = vmatprep.subr.mxu0 0.0
    %159 = vmatpush1.xpose.msra.mxu0 0.0
    %160 = vmatprep.subr.mxu0 0.0
    %161 = vmatpush1.xpose.msra.mxu0 0.0
    %162 = vmatprep.subr.mxu0 0.0
    %163 = vmatpush1.xpose.msra.mxu0 0.0
    %164 = vmatprep.subr.mxu0 0.0
    %165 = vmatpush1.xpose.msra.mxu0 0.0
    %166 = vmatprep.subr.mxu0 0.0
    %167 = vmatpush1.xpose.msra.mxu0 0.0
    %168 = vmatprep.subr.mxu0 0.0
    %169 = vmatpush1.xpose.msra.mxu0 0.0
    %170 = vmatprep.subr.mxu0 0.0
    %171 = vmatpush1.xpose.msra.mxu0 0.0
    %172 = vmatprep.subr.mxu0 0.0
    %173 = vmatpush1.xpose.msra.mxu0 0.0
    %174 = vmatprep.subr.mxu0 0.0
    %175 = vmatpush1.xpose.msra.mxu0 0.0
    %176 = vmatprep.subr.mxu0 0.0
    %177 = vmatpush1.xpose.msra.mxu0 0.0
    %178 = vmatprep.subr.mxu0 0.0
    %179 = vmatpush1.xpose.msra.mxu0 0.0
    %180 = vmatprep.subr.mxu0 0.0
    %181 = vmatpush1.xpose.msra.mxu0 0.0
    %182 = vmatprep.subr.mxu0 0.0
    %183 = vmatpush1.xpose.msra.mxu0 0.0
    %184 = vmatprep.subr.mxu0 0.0
    %185 = vmatpush1.xpose.msra.mxu0 0.0
    %186 = vmatprep.subr.mxu0 0.0
    %187 = vmatpush1.xpose.msra.mxu0 0.0
    %188 = vmatprep.subr.mxu0 0.0
    %189 = vmatpush1.xpose.msra.mxu0 0.0
    %190 = vmatprep.subr.mxu0 0.0
    %191 = vmatpush1.xpose.msra.mxu0 0.0
    %192 = vmatprep.subr.mxu0 0.0
    %193 = vmatpush1.xpose.msra.mxu0 0.0
    %194 = vmatprep.subr.mxu0 0.0
    %195 = vmatpush1.xpose.msra.mxu0 0.0
    %196 = vmatprep.subr.mxu0 0.0
    %197 = vmatpush1.xpose.msra.mxu0 0.0
    %198 = vmatprep.subr.mxu0 0.0
    %199 = vmatpush1.xpose.msra.mxu0 0.0
    %200 = vmatprep.subr.mxu0 0.0
    %201 = vmatpush1.xpose.msra.mxu0 0.0
    %202 = vmatprep.subr.mxu0 0.0
    %203 = vmatpush1.xpose.msra.mxu0 0.0
    %204 = vmatprep.subr.mxu0 0.0
    %205 = vmatpush1.xpose.msra.mxu0 0.0
    %206 = vmatprep.subr.mxu0 0.0
    %207 = vmatpush1.xpose.msra.mxu0 0.0
    %208 = vmatprep.subr.mxu0 0.0
    %209 = vmatpush1.xpose.msra.mxu0 0.0
    %210 = vmatprep.subr.mxu0 0.0
    %211 = vmatpush1.xpose.msra.mxu0 0.0
    %212 = vmatprep.subr.mxu0 0.0
    %213 = vmatpush1.xpose.msra.mxu0 0.0
    %214 = vmatprep.mubr.f32.mxu0 0.0
    %215 = vmatmul.mubr.f32.gmra.mrb[0].mxu0 %v146
    %v216 = vpop.f32.mrb[0].mxu0
    %v217 = vadd.f32 %v29, %v216
    %v218 = vpop.f32.mrb[0].mxu0
    %219 = vdwg.mxu0
    %220 = vrot.lane.b32.xlu0 %v132, 96
    %v221 = vpop.permute.xlu0 %220
    %v222 = vsel %vm145, %v132, 0
    %v224 = vsel %vm145, %v221, 0
    %226 = vmatprep.subr.mxu0 0.0
    %227 = vmatpush1.xpose.msra.mxu0 %v224
    %228 = vmatprep.subr.mxu0 0.0
    %229 = vmatpush1.xpose.msra.mxu0 0.0
    %230 = vmatprep.subr.mxu0 0.0
    %231 = vmatpush1.xpose.msra.mxu0 0.0
    %232 = vmatprep.subr.mxu0 0.0
    %233 = vmatpush1.xpose.msra.mxu0 0.0
    %234 = vmatprep.subr.mxu0 0.0
    %235 = vmatpush1.xpose.msra.mxu0 0.0
    %236 = vmatprep.subr.mxu0 0.0
    %237 = vmatpush1.xpose.msra.mxu0 0.0
    %238 = vmatprep.subr.mxu0 0.0
    %239 = vmatpush1.xpose.msra.mxu0 0.0
    %240 = vmatprep.subr.mxu0 0.0
    %241 = vmatpush1.xpose.msra.mxu0 0.0
    %242 = vmatprep.subr.mxu0 0.0
    %243 = vmatpush1.xpose.msra.mxu0 0.0
    %244 = vmatprep.subr.mxu0 0.0
    %245 = vmatpush1.xpose.msra.mxu0 0.0
    %246 = vmatprep.subr.mxu0 0.0
    %247 = vmatpush1.xpose.msra.mxu0 0.0
    %248 = vmatprep.subr.mxu0 0.0
    %249 = vmatpush1.xpose.msra.mxu0 0.0
    %250 = vmatprep.subr.mxu0 0.0
    %251 = vmatpush1.xpose.msra.mxu0 0.0
    %252 = vmatprep.subr.mxu0 0.0
    %253 = vmatpush1.xpose.msra.mxu0 0.0
    %254 = vmatprep.subr.mxu0 0.0
    %255 = vmatpush1.xpose.msra.mxu0 0.0
    %256 = vmatprep.subr.mxu0 0.0
    %257 = vmatpush1.xpose.msra.mxu0 0.0
    %258 = vmatprep.subr.mxu0 0.0
    %259 = vmatpush1.xpose.msra.mxu0 0.0
    %260 = vmatprep.subr.mxu0 0.0
    %261 = vmatpush1.xpose.msra.mxu0 0.0
    %262 = vmatprep.subr.mxu0 0.0
    %263 = vmatpush1.xpose.msra.mxu0 0.0
    %264 = vmatprep.subr.mxu0 0.0
    %265 = vmatpush1.xpose.msra.mxu0 0.0
    %266 = vmatprep.subr.mxu0 0.0
    %267 = vmatpush1.xpose.msra.mxu0 0.0
    %268 = vmatprep.subr.mxu0 0.0
    %269 = vmatpush1.xpose.msra.mxu0 0.0
    %270 = vmatprep.subr.mxu0 0.0
    %271 = vmatpush1.xpose.msra.mxu0 0.0
    %272 = vmatprep.subr.mxu0 0.0
    %273 = vmatpush1.xpose.msra.mxu0 0.0
    %274 = vmatprep.subr.mxu0 0.0
    %275 = vmatpush1.xpose.msra.mxu0 0.0
    %276 = vmatprep.subr.mxu0 0.0
    %277 = vmatpush1.xpose.msra.mxu0 0.0
    %278 = vmatprep.subr.mxu0 0.0
    %279 = vmatpush1.xpose.msra.mxu0 0.0
    %280 = vmatprep.subr.mxu0 0.0
    %281 = vmatpush1.xpose.msra.mxu0 0.0
    %282 = vmatprep.subr.mxu0 0.0
    %283 = vmatpush1.xpose.msra.mxu0 0.0
    %284 = vmatprep.subr.mxu0 0.0
    %285 = vmatpush1.xpose.msra.mxu0 0.0
    %286 = vmatprep.subr.mxu0 0.0
    %287 = vmatpush1.xpose.msra.mxu0 0.0
    %288 = vmatprep.subr.mxu0 0.0
    %289 = vmatpush1.xpose.msra.mxu0 0.0
    %290 = vmatprep.mubr.f32.mxu0 0.0
    %291 = vmatmul.mubr.f32.gmra.mrb[0].mxu0 %v222
    %v292 = vpop.f32.mrb[0].mxu0
    %v293 = vadd.f32 %v29, %v292
    %v294 = vpop.f32.mrb[0].mxu0
    %295 = vdwg.mxu0
    %296 = vrot.lane.b32.xlu0 %v136, 96
    %v297 = vpop.permute.xlu0 %296
    %v298 = vsel %vm145, %v136, 0
    %v300 = vsel %vm145, %v297, 0
    %302 = vmatprep.subr.mxu0 0.0
    %303 = vmatpush1.xpose.msra.mxu0 %v300
    %304 = vmatprep.subr.mxu0 0.0
    %305 = vmatpush1.xpose.msra.mxu0 0.0
    %306 = vmatprep.subr.mxu0 0.0
    %307 = vmatpush1.xpose.msra.mxu0 0.0
    %308 = vmatprep.subr.mxu0 0.0
    %309 = vmatpush1.xpose.msra.mxu0 0.0
    %310 = vmatprep.subr.mxu0 0.0
    %311 = vmatpush1.xpose.msra.mxu0 0.0
    %312 = vmatprep.subr.mxu0 0.0
    %313 = vmatpush1.xpose.msra.mxu0 0.0
    %314 = vmatprep.subr.mxu0 0.0
    %315 = vmatpush1.xpose.msra.mxu0 0.0
    %316 = vmatprep.subr.mxu0 0.0
    %317 = vmatpush1.xpose.msra.mxu0 0.0
    %318 = vmatprep.subr.mxu0 0.0
    %319 = vmatpush1.xpose.msra.mxu0 0.0
    %320 = vmatprep.subr.mxu0 0.0
    %321 = vmatpush1.xpose.msra.mxu0 0.0
    %322 = vmatprep.subr.mxu0 0.0
    %323 = vmatpush1.xpose.msra.mxu0 0.0
    %324 = vmatprep.subr.mxu0 0.0
    %325 = vmatpush1.xpose.msra.mxu0 0.0
    %326 = vmatprep.subr.mxu0 0.0
    %327 = vmatpush1.xpose.msra.mxu0 0.0
    %328 = vmatprep.subr.mxu0 0.0
    %329 = vmatpush1.xpose.msra.mxu0 0.0
    %330 = vmatprep.subr.mxu0 0.0
    %331 = vmatpush1.xpose.msra.mxu0 0.0
    %332 = vmatprep.subr.mxu0 0.0
    %333 = vmatpush1.xpose.msra.mxu0 0.0
    %334 = vmatprep.subr.mxu0 0.0
    %335 = vmatpush1.xpose.msra.mxu0 0.0
    %336 = vmatprep.subr.mxu0 0.0
    %337 = vmatpush1.xpose.msra.mxu0 0.0
    %338 = vmatprep.subr.mxu0 0.0
    %339 = vmatpush1.xpose.msra.mxu0 0.0
    %340 = vmatprep.subr.mxu0 0.0
    %341 = vmatpush1.xpose.msra.mxu0 0.0
    %342 = vmatprep.subr.mxu0 0.0
    %343 = vmatpush1.xpose.msra.mxu0 0.0
    %344 = vmatprep.subr.mxu0 0.0
    %345 = vmatpush1.xpose.msra.mxu0 0.0
    %346 = vmatprep.subr.mxu0 0.0
    %347 = vmatpush1.xpose.msra.mxu0 0.0
    %348 = vmatprep.subr.mxu0 0.0
    %349 = vmatpush1.xpose.msra.mxu0 0.0
    %350 = vmatprep.subr.mxu0 0.0
    %351 = vmatpush1.xpose.msra.mxu0 0.0
    %352 = vmatprep.subr.mxu0 0.0
    %353 = vmatpush1.xpose.msra.mxu0 0.0
    %354 = vmatprep.subr.mxu0 0.0
    %355 = vmatpush1.xpose.msra.mxu0 0.0
    %356 = vmatprep.subr.mxu0 0.0
    %357 = vmatpush1.xpose.msra.mxu0 0.0
    %358 = vmatprep.subr.mxu0 0.0
    %359 = vmatpush1.xpose.msra.mxu0 0.0
    %360 = vmatprep.subr.mxu0 0.0
    %361 = vmatpush1.xpose.msra.mxu0 0.0
    %362 = vmatprep.subr.mxu0 0.0
    %363 = vmatpush1.xpose.msra.mxu0 0.0
    %364 = vmatprep.subr.mxu0 0.0
    %365 = vmatpush1.xpose.msra.mxu0 0.0
    %366 = vmatprep.mubr.f32.mxu0 0.0
    %367 = vmatmul.mubr.f32.gmra.mrb[0].mxu0 %v298
    %v368 = vpop.f32.mrb[0].mxu0
    %v369 = vadd.f32 %v29, %v368
    %v370 = vpop.f32.mrb[0].mxu0
    %371 = vdwg.mxu0
    %372 = vrot.lane.b32.xlu0 %v140, 96
    %v373 = vpop.permute.xlu0 %372
    %v374 = vsel %vm145, %v140, 0
    %v376 = vsel %vm145, %v373, 0
    %378 = vmatprep.subr.mxu0 0.0
    %379 = vmatpush1.xpose.msra.mxu0 %v376
    %380 = vmatprep.subr.mxu0 0.0
    %381 = vmatpush1.xpose.msra.mxu0 0.0
    %382 = vmatprep.subr.mxu0 0.0
    %383 = vmatpush1.xpose.msra.mxu0 0.0
    %384 = vmatprep.subr.mxu0 0.0
    %385 = vmatpush1.xpose.msra.mxu0 0.0
    %386 = vmatprep.subr.mxu0 0.0
    %387 = vmatpush1.xpose.msra.mxu0 0.0
    %388 = vmatprep.subr.mxu0 0.0
    %389 = vmatpush1.xpose.msra.mxu0 0.0
    %390 = vmatprep.subr.mxu0 0.0
    %391 = vmatpush1.xpose.msra.mxu0 0.0
    %392 = vmatprep.subr.mxu0 0.0
    %393 = vmatpush1.xpose.msra.mxu0 0.0
    %394 = vmatprep.subr.mxu0 0.0
    %395 = vmatpush1.xpose.msra.mxu0 0.0
    %396 = vmatprep.subr.mxu0 0.0
    %397 = vmatpush1.xpose.msra.mxu0 0.0
    %398 = vmatprep.subr.mxu0 0.0
    %399 = vmatpush1.xpose.msra.mxu0 0.0
    %400 = vmatprep.subr.mxu0 0.0
    %401 = vmatpush1.xpose.msra.mxu0 0.0
    %402 = vmatprep.subr.mxu0 0.0
    %403 = vmatpush1.xpose.msra.mxu0 0.0
    %404 = vmatprep.subr.mxu0 0.0
    %405 = vmatpush1.xpose.msra.mxu0 0.0
    %406 = vmatprep.subr.mxu0 0.0
    %407 = vmatpush1.xpose.msra.mxu0 0.0
    %408 = vmatprep.subr.mxu0 0.0
    %409 = vmatpush1.xpose.msra.mxu0 0.0
    %410 = vmatprep.subr.mxu0 0.0
    %411 = vmatpush1.xpose.msra.mxu0 0.0
    %412 = vmatprep.subr.mxu0 0.0
    %413 = vmatpush1.xpose.msra.mxu0 0.0
    %414 = vmatprep.subr.mxu0 0.0
    %415 = vmatpush1.xpose.msra.mxu0 0.0
    %416 = vmatprep.subr.mxu0 0.0
    %417 = vmatpush1.xpose.msra.mxu0 0.0
    %418 = vmatprep.subr.mxu0 0.0
    %419 = vmatpush1.xpose.msra.mxu0 0.0
    %420 = vmatprep.subr.mxu0 0.0
    %421 = vmatpush1.xpose.msra.mxu0 0.0
    %422 = vmatprep.subr.mxu0 0.0
    %423 = vmatpush1.xpose.msra.mxu0 0.0
    %424 = vmatprep.subr.mxu0 0.0
    %425 = vmatpush1.xpose.msra.mxu0 0.0
    %426 = vmatprep.subr.mxu0 0.0
    %427 = vmatpush1.xpose.msra.mxu0 0.0
    %428 = vmatprep.subr.mxu0 0.0
    %429 = vmatpush1.xpose.msra.mxu0 0.0
    %430 = vmatprep.subr.mxu0 0.0
    %431 = vmatpush1.xpose.msra.mxu0 0.0
    %432 = vmatprep.subr.mxu0 0.0
    %433 = vmatpush1.xpose.msra.mxu0 0.0
    %434 = vmatprep.subr.mxu0 0.0
    %435 = vmatpush1.xpose.msra.mxu0 0.0
    %436 = vmatprep.subr.mxu0 0.0
    %437 = vmatpush1.xpose.msra.mxu0 0.0
    %438 = vmatprep.subr.mxu0 0.0
    %439 = vmatpush1.xpose.msra.mxu0 0.0
    %440 = vmatprep.subr.mxu0 0.0
    %441 = vmatpush1.xpose.msra.mxu0 0.0
    %442 = vmatprep.mubr.f32.mxu0 0.0
    %443 = vmatmul.mubr.f32.gmra.mrb[0].mxu0 %v374
    %v444 = vpop.f32.mrb[0].mxu0
    %v445 = vadd.f32 %v29, %v444
    %v446 = vpop.f32.mrb[0].mxu0
    %447 = vdwg.mxu0
    %448 = vrot.lane.b32.xlu0 %v126, 96
    %v449 = vpop.permute.xlu0 %448
    %v450 = vsel %vm145, %v126, 0
    %v452 = vsel %vm145, %v449, 0
    %454 = vmatprep.subr.mxu0 0.0
    %455 = vmatpush1.xpose.msra.mxu0 %v452
    %456 = vmatprep.subr.mxu0 0.0
    %457 = vmatpush1.xpose.msra.mxu0 0.0
    %458 = vmatprep.subr.mxu0 0.0
    %459 = vmatpush1.xpose.msra.mxu0 0.0
    %460 = vmatprep.subr.mxu0 0.0
    %461 = vmatpush1.xpose.msra.mxu0 0.0
    %462 = vmatprep.subr.mxu0 0.0
    %463 = vmatpush1.xpose.msra.mxu0 0.0
    %464 = vmatprep.subr.mxu0 0.0
    %465 = vmatpush1.xpose.msra.mxu0 0.0
    %466 = vmatprep.subr.mxu0 0.0
    %467 = vmatpush1.xpose.msra.mxu0 0.0
    %468 = vmatprep.subr.mxu0 0.0
    %469 = vmatpush1.xpose.msra.mxu0 0.0
    %470 = vmatprep.subr.mxu0 0.0
    %471 = vmatpush1.xpose.msra.mxu0 0.0
    %472 = vmatprep.subr.mxu0 0.0
    %473 = vmatpush1.xpose.msra.mxu0 0.0
    %474 = vmatprep.subr.mxu0 0.0
    %475 = vmatpush1.xpose.msra.mxu0 0.0
    %476 = vmatprep.subr.mxu0 0.0
    %477 = vmatpush1.xpose.msra.mxu0 0.0
    %478 = vmatprep.subr.mxu0 0.0
    %479 = vmatpush1.xpose.msra.mxu0 0.0
    %480 = vmatprep.subr.mxu0 0.0
    %481 = vmatpush1.xpose.msra.mxu0 0.0
    %482 = vmatprep.subr.mxu0 0.0
    %483 = vmatpush1.xpose.msra.mxu0 0.0
    %484 = vmatprep.subr.mxu0 0.0
    %485 = vmatpush1.xpose.msra.mxu0 0.0
    %486 = vmatprep.subr.mxu0 0.0
    %487 = vmatpush1.xpose.msra.mxu0 0.0
    %488 = vmatprep.subr.mxu0 0.0
    %489 = vmatpush1.xpose.msra.mxu0 0.0
    %490 = vmatprep.subr.mxu0 0.0
    %491 = vmatpush1.xpose.msra.mxu0 0.0
    %492 = vmatprep.subr.mxu0 0.0
    %493 = vmatpush1.xpose.msra.mxu0 0.0
    %494 = vmatprep.subr.mxu0 0.0
    %495 = vmatpush1.xpose.msra.mxu0 0.0
    %496 = vmatprep.subr.mxu0 0.0
    %497 = vmatpush1.xpose.msra.mxu0 0.0
    %498 = vmatprep.subr.mxu0 0.0
    %499 = vmatpush1.xpose.msra.mxu0 0.0
    %500 = vmatprep.subr.mxu0 0.0
    %501 = vmatpush1.xpose.msra.mxu0 0.0
    %502 = vmatprep.subr.mxu0 0.0
    %503 = vmatpush1.xpose.msra.mxu0 0.0
    %504 = vmatprep.subr.mxu0 0.0
    %505 = vmatpush1.xpose.msra.mxu0 0.0
    %506 = vmatprep.subr.mxu0 0.0
    %507 = vmatpush1.xpose.msra.mxu0 0.0
    %508 = vmatprep.subr.mxu0 0.0
    %509 = vmatpush1.xpose.msra.mxu0 0.0
    %510 = vmatprep.subr.mxu0 0.0
    %511 = vmatpush1.xpose.msra.mxu0 0.0
    %512 = vmatprep.subr.mxu0 0.0
    %513 = vmatpush1.xpose.msra.mxu0 0.0
    %514 = vmatprep.subr.mxu0 0.0
    %515 = vmatpush1.xpose.msra.mxu0 0.0
    %516 = vmatprep.subr.mxu0 0.0
    %517 = vmatpush1.xpose.msra.mxu0 0.0
    %518 = vmatprep.mubr.f32.mxu0 0.0
    %519 = vmatmul.mubr.f32.gmra.mrb[0].mxu0 %v450
    %v520 = vpop.f32.mrb[0].mxu0
    %v521 = vadd.f32 %v30, %v520
    %v522 = vpop.f32.mrb[0].mxu0
    %523 = vdwg.mxu0
    %524 = vrot.lane.b32.xlu0 %v134, 96
    %v525 = vpop.permute.xlu0 %524
    %v526 = vsel %vm145, %v134, 0
    %v528 = vsel %vm145, %v525, 0
    %530 = vmatprep.subr.mxu0 0.0
    %531 = vmatpush1.xpose.msra.mxu0 %v528
    %532 = vmatprep.subr.mxu0 0.0
    %533 = vmatpush1.xpose.msra.mxu0 0.0
    %534 = vmatprep.subr.mxu0 0.0
    %535 = vmatpush1.xpose.msra.mxu0 0.0
    %536 = vmatprep.subr.mxu0 0.0
    %537 = vmatpush1.xpose.msra.mxu0 0.0
    %538 = vmatprep.subr.mxu0 0.0
    %539 = vmatpush1.xpose.msra.mxu0 0.0
    %540 = vmatprep.subr.mxu0 0.0
    %541 = vmatpush1.xpose.msra.mxu0 0.0
    %542 = vmatprep.subr.mxu0 0.0
    %543 = vmatpush1.xpose.msra.mxu0 0.0
    %544 = vmatprep.subr.mxu0 0.0
    %545 = vmatpush1.xpose.msra.mxu0 0.0
    %546 = vmatprep.subr.mxu0 0.0
    %547 = vmatpush1.xpose.msra.mxu0 0.0
    %548 = vmatprep.subr.mxu0 0.0
    %549 = vmatpush1.xpose.msra.mxu0 0.0
    %550 = vmatprep.subr.mxu0 0.0
    %551 = vmatpush1.xpose.msra.mxu0 0.0
    %552 = vmatprep.subr.mxu0 0.0
    %553 = vmatpush1.xpose.msra.mxu0 0.0
    %554 = vmatprep.subr.mxu0 0.0
    %555 = vmatpush1.xpose.msra.mxu0 0.0
    %556 = vmatprep.subr.mxu0 0.0
    %557 = vmatpush1.xpose.msra.mxu0 0.0
    %558 = vmatprep.subr.mxu0 0.0
    %559 = vmatpush1.xpose.msra.mxu0 0.0
    %560 = vmatprep.subr.mxu0 0.0
    %561 = vmatpush1.xpose.msra.mxu0 0.0
    %562 = vmatprep.subr.mxu0 0.0
    %563 = vmatpush1.xpose.msra.mxu0 0.0
    %564 = vmatprep.subr.mxu0 0.0
    %565 = vmatpush1.xpose.msra.mxu0 0.0
    %566 = vmatprep.subr.mxu0 0.0
    %567 = vmatpush1.xpose.msra.mxu0 0.0
    %568 = vmatprep.subr.mxu0 0.0
    %569 = vmatpush1.xpose.msra.mxu0 0.0
    %570 = vmatprep.subr.mxu0 0.0
    %571 = vmatpush1.xpose.msra.mxu0 0.0
    %572 = vmatprep.subr.mxu0 0.0
    %573 = vmatpush1.xpose.msra.mxu0 0.0
    %574 = vmatprep.subr.mxu0 0.0
    %575 = vmatpush1.xpose.msra.mxu0 0.0
    %576 = vmatprep.subr.mxu0 0.0
    %577 = vmatpush1.xpose.msra.mxu0 0.0
    %578 = vmatprep.subr.mxu0 0.0
    %579 = vmatpush1.xpose.msra.mxu0 0.0
    %580 = vmatprep.subr.mxu0 0.0
    %581 = vmatpush1.xpose.msra.mxu0 0.0
    %582 = vmatprep.subr.mxu0 0.0
    %583 = vmatpush1.xpose.msra.mxu0 0.0
    %584 = vmatprep.subr.mxu0 0.0
    %585 = vmatpush1.xpose.msra.mxu0 0.0
    %586 = vmatprep.subr.mxu0 0.0
    %587 = vmatpush1.xpose.msra.mxu0 0.0
    %588 = vmatprep.subr.mxu0 0.0
    %589 = vmatpush1.xpose.msra.mxu0 0.0
    %590 = vmatprep.subr.mxu0 0.0
    %591 = vmatpush1.xpose.msra.mxu0 0.0
    %592 = vmatprep.subr.mxu0 0.0
    %593 = vmatpush1.xpose.msra.mxu0 0.0
    %594 = vmatprep.mubr.f32.mxu0 0.0
    %595 = vmatmul.mubr.f32.gmra.mrb[0].mxu0 %v526
    %v596 = vpop.f32.mrb[0].mxu0
    %v597 = vadd.f32 %v30, %v596
    %v598 = vpop.f32.mrb[0].mxu0
    %599 = vdwg.mxu0
    %600 = vrot.lane.b32.xlu0 %v138, 96
    %v601 = vpop.permute.xlu0 %600
    %v602 = vsel %vm145, %v138, 0
    %v604 = vsel %vm145, %v601, 0
    %606 = vmatprep.subr.mxu0 0.0
    %607 = vmatpush1.xpose.msra.mxu0 %v604
    %608 = vmatprep.subr.mxu0 0.0
    %609 = vmatpush1.xpose.msra.mxu0 0.0
    %610 = vmatprep.subr.mxu0 0.0
    %611 = vmatpush1.xpose.msra.mxu0 0.0
    %612 = vmatprep.subr.mxu0 0.0
    %613 = vmatpush1.xpose.msra.mxu0 0.0
    %614 = vmatprep.subr.mxu0 0.0
    %615 = vmatpush1.xpose.msra.mxu0 0.0
    %616 = vmatprep.subr.mxu0 0.0
    %617 = vmatpush1.xpose.msra.mxu0 0.0
    %618 = vmatprep.subr.mxu0 0.0
    %619 = vmatpush1.xpose.msra.mxu0 0.0
    %620 = vmatprep.subr.mxu0 0.0
    %621 = vmatpush1.xpose.msra.mxu0 0.0
    %622 = vmatprep.subr.mxu0 0.0
    %623 = vmatpush1.xpose.msra.mxu0 0.0
    %624 = vmatprep.subr.mxu0 0.0
    %625 = vmatpush1.xpose.msra.mxu0 0.0
    %626 = vmatprep.subr.mxu0 0.0
    %627 = vmatpush1.xpose.msra.mxu0 0.0
    %628 = vmatprep.subr.mxu0 0.0
    %629 = vmatpush1.xpose.msra.mxu0 0.0
    %630 = vmatprep.subr.mxu0 0.0
    %631 = vmatpush1.xpose.msra.mxu0 0.0
    %632 = vmatprep.subr.mxu0 0.0
    %633 = vmatpush1.xpose.msra.mxu0 0.0
    %634 = vmatprep.subr.mxu0 0.0
    %635 = vmatpush1.xpose.msra.mxu0 0.0
    %636 = vmatprep.subr.mxu0 0.0
    %637 = vmatpush1.xpose.msra.mxu0 0.0
    %638 = vmatprep.subr.mxu0 0.0
    %639 = vmatpush1.xpose.msra.mxu0 0.0
    %640 = vmatprep.subr.mxu0 0.0
    %641 = vmatpush1.xpose.msra.mxu0 0.0
    %642 = vmatprep.subr.mxu0 0.0
    %643 = vmatpush1.xpose.msra.mxu0 0.0
    %644 = vmatprep.subr.mxu0 0.0
    %645 = vmatpush1.xpose.msra.mxu0 0.0
    %646 = vmatprep.subr.mxu0 0.0
    %647 = vmatpush1.xpose.msra.mxu0 0.0
    %648 = vmatprep.subr.mxu0 0.0
    %649 = vmatpush1.xpose.msra.mxu0 0.0
    %650 = vmatprep.subr.mxu0 0.0
    %651 = vmatpush1.xpose.msra.mxu0 0.0
    %652 = vmatprep.subr.mxu0 0.0
    %653 = vmatpush1.xpose.msra.mxu0 0.0
    %654 = vmatprep.subr.mxu0 0.0
    %655 = vmatpush1.xpose.msra.mxu0 0.0
    %656 = vmatprep.subr.mxu0 0.0
    %657 = vmatpush1.xpose.msra.mxu0 0.0
    %658 = vmatprep.subr.mxu0 0.0
    %659 = vmatpush1.xpose.msra.mxu0 0.0
    %660 = vmatprep.subr.mxu0 0.0
    %661 = vmatpush1.xpose.msra.mxu0 0.0
    %662 = vmatprep.subr.mxu0 0.0
    %663 = vmatpush1.xpose.msra.mxu0 0.0
    %664 = vmatprep.subr.mxu0 0.0
    %665 = vmatpush1.xpose.msra.mxu0 0.0
    %666 = vmatprep.subr.mxu0 0.0
    %667 = vmatpush1.xpose.msra.mxu0 0.0
    %668 = vmatprep.subr.mxu0 0.0
    %669 = vmatpush1.xpose.msra.mxu0 0.0
    %670 = vmatprep.mubr.f32.mxu0 0.0
    %671 = vmatmul.mubr.f32.gmra.mrb[0].mxu0 %v602
    %v672 = vpop.f32.mrb[0].mxu0
    %v673 = vadd.f32 %v30, %v672
    %v674 = vpop.f32.mrb[0].mxu0
    %675 = vdwg.mxu0
    %676 = vrot.lane.b32.xlu0 %v142, 96
    %v677 = vpop.permute.xlu0 %676
    %v678 = vsel %vm145, %v142, 0
    %v680 = vsel %vm145, %v677, 0
    %682 = vmatprep.subr.mxu0 0.0
    %683 = vmatpush1.xpose.msra.mxu0 %v680
    %684 = vmatprep.subr.mxu0 0.0
    %685 = vmatpush1.xpose.msra.mxu0 0.0
    %686 = vmatprep.subr.mxu0 0.0
    %687 = vmatpush1.xpose.msra.mxu0 0.0
    %688 = vmatprep.subr.mxu0 0.0
    %689 = vmatpush1.xpose.msra.mxu0 0.0
    %690 = vmatprep.subr.mxu0 0.0
    %691 = vmatpush1.xpose.msra.mxu0 0.0
    %692 = vmatprep.subr.mxu0 0.0
    %693 = vmatpush1.xpose.msra.mxu0 0.0
    %694 = vmatprep.subr.mxu0 0.0
    %695 = vmatpush1.xpose.msra.mxu0 0.0
    %696 = vmatprep.subr.mxu0 0.0
    %697 = vmatpush1.xpose.msra.mxu0 0.0
    %698 = vmatprep.subr.mxu0 0.0
    %699 = vmatpush1.xpose.msra.mxu0 0.0
    %700 = vmatprep.subr.mxu0 0.0
    %701 = vmatpush1.xpose.msra.mxu0 0.0
    %702 = vmatprep.subr.mxu0 0.0
    %703 = vmatpush1.xpose.msra.mxu0 0.0
    %704 = vmatprep.subr.mxu0 0.0
    %705 = vmatpush1.xpose.msra.mxu0 0.0
    %706 = vmatprep.subr.mxu0 0.0
    %707 = vmatpush1.xpose.msra.mxu0 0.0
    %708 = vmatprep.subr.mxu0 0.0
    %709 = vmatpush1.xpose.msra.mxu0 0.0
    %710 = vmatprep.subr.mxu0 0.0
    %711 = vmatpush1.xpose.msra.mxu0 0.0
    %712 = vmatprep.subr.mxu0 0.0
    %713 = vmatpush1.xpose.msra.mxu0 0.0
    %714 = vmatprep.subr.mxu0 0.0
    %715 = vmatpush1.xpose.msra.mxu0 0.0
    %716 = vmatprep.subr.mxu0 0.0
    %717 = vmatpush1.xpose.msra.mxu0 0.0
    %718 = vmatprep.subr.mxu0 0.0
    %719 = vmatpush1.xpose.msra.mxu0 0.0
    %720 = vmatprep.subr.mxu0 0.0
    %721 = vmatpush1.xpose.msra.mxu0 0.0
    %722 = vmatprep.subr.mxu0 0.0
    %723 = vmatpush1.xpose.msra.mxu0 0.0
    %724 = vmatprep.subr.mxu0 0.0
    %725 = vmatpush1.xpose.msra.mxu0 0.0
    %726 = vmatprep.subr.mxu0 0.0
    %727 = vmatpush1.xpose.msra.mxu0 0.0
    %728 = vmatprep.subr.mxu0 0.0
    %729 = vmatpush1.xpose.msra.mxu0 0.0
    %730 = vmatprep.subr.mxu0 0.0
    %731 = vmatpush1.xpose.msra.mxu0 0.0
    %732 = vmatprep.subr.mxu0 0.0
    %733 = vmatpush1.xpose.msra.mxu0 0.0
    %734 = vmatprep.subr.mxu0 0.0
    %735 = vmatpush1.xpose.msra.mxu0 0.0
    %736 = vmatprep.subr.mxu0 0.0
    %737 = vmatpush1.xpose.msra.mxu0 0.0
    %738 = vmatprep.subr.mxu0 0.0
    %739 = vmatpush1.xpose.msra.mxu0 0.0
    %740 = vmatprep.subr.mxu0 0.0
    %741 = vmatpush1.xpose.msra.mxu0 0.0
    %742 = vmatprep.subr.mxu0 0.0
    %743 = vmatpush1.xpose.msra.mxu0 0.0
    %744 = vmatprep.subr.mxu0 0.0
    %745 = vmatpush1.xpose.msra.mxu0 0.0
    %746 = vmatprep.mubr.f32.mxu0 0.0
    %747 = vmatmul.mubr.f32.gmra.mrb[0].mxu0 %v678
    %v748 = vpop.f32.mrb[0].mxu0
    %v749 = vadd.f32 %v30, %v748
    %v750 = vpop.f32.mrb[0].mxu0
    %751 = vdwg.mxu0
    %v752 = vsel %vm145, %v217, -inf
    %753 = vmax.xlane.f32.xlu0 %v752
    %v754 = vpop.xlane.xlu0 %753
    %v755 = vsel %vm145, %v293, -inf
    %756 = vmax.xlane.f32.xlu0 %v755
    %v757 = vpop.xlane.xlu0 %756
    %v758 = vsel %vm145, %v369, -inf
    %759 = vmax.xlane.f32.xlu0 %v758
    %v760 = vpop.xlane.xlu0 %759
    %v761 = vsel %vm145, %v445, -inf
    %762 = vmax.xlane.f32.xlu0 %v761
    %v763 = vpop.xlane.xlu0 %762
    %v764 = vsel %vm145, %v521, -inf
    %765 = vmax.xlane.f32.xlu0 %v764
    %v766 = vpop.xlane.xlu0 %765
    %v767 = vsel %vm145, %v597, -inf
    %768 = vmax.xlane.f32.xlu0 %v767
    %v769 = vpop.xlane.xlu0 %768
    %v770 = vsel %vm145, %v673, -inf
    %771 = vmax.xlane.f32.xlu0 %v770
    %v772 = vpop.xlane.xlu0 %771
    %v773 = vsel %vm145, %v749, -inf
    %774 = vmax.xlane.f32.xlu0 %v773
    %v775 = vpop.xlane.xlu0 %774
    %v776 = vsub.f32 %v217, %v754
    %v777 = vsub.f32 %v293, %v757
    %v778 = vsub.f32 %v369, %v760
    %v779 = vsub.f32 %v445, %v763
    %v780 = vsub.f32 %v521, %v766
    %v781 = vsub.f32 %v597, %v769
    %v782 = vsub.f32 %v673, %v772
    %v783 = vsub.f32 %v749, %v775
    %v784 = vmul.f32 %v776, 1.442695
    %v785 = vpow.pop %v784
    %v786 = vmul.f32 %v777, 1.442695
    %v787 = vpow.pop %v786
    %v788 = vmul.f32 %v778, 1.442695
    %v789 = vpow.pop %v788
    %v790 = vmul.f32 %v779, 1.442695
    %v791 = vpow.pop %v790
    %v792 = vmul.f32 %v780, 1.442695
    %v793 = vpow.pop %v792
    %v794 = vmul.f32 %v781, 1.442695
    %v795 = vpow.pop %v794
    %v796 = vmul.f32 %v782, 1.442695
    %v797 = vpow.pop %v796
    %v798 = vmul.f32 %v783, 1.442695
    %v799 = vpow.pop %v798
    %v800 = vsel %vm145, %v785, 0.0
    %801 = vadd.xlane.f32.xlu0 %v800
    %v802 = vpop.xlane.xlu0 %801
    %v803 = vsel %vm145, %v787, 0.0
    %804 = vadd.xlane.f32.xlu0 %v803
    %v805 = vpop.xlane.xlu0 %804
    %v806 = vsel %vm145, %v789, 0.0
    %807 = vadd.xlane.f32.xlu0 %v806
    %v808 = vpop.xlane.xlu0 %807
    %v809 = vsel %vm145, %v791, 0.0
    %810 = vadd.xlane.f32.xlu0 %v809
    %v811 = vpop.xlane.xlu0 %810
    %v812 = vsel %vm145, %v793, 0.0
    %813 = vadd.xlane.f32.xlu0 %v812
    %v814 = vpop.xlane.xlu0 %813
    %v815 = vsel %vm145, %v795, 0.0
    %816 = vadd.xlane.f32.xlu0 %v815
    %v817 = vpop.xlane.xlu0 %816
    %v818 = vsel %vm145, %v797, 0.0
    %819 = vadd.xlane.f32.xlu0 %v818
    %v820 = vpop.xlane.xlu0 %819
    %v821 = vsel %vm145, %v799, 0.0
    %822 = vadd.xlane.f32.xlu0 %v821
    %v823 = vpop.xlane.xlu0 %822
    %v824 = vrcp.pop %v802
    %v825 = vrcp.pop %v805
    %v826 = vrcp.pop %v808
    %v827 = vrcp.pop %v811
    %v828 = vrcp.pop %v814
    %v829 = vrcp.pop %v817
    %v830 = vrcp.pop %v820
    %v831 = vrcp.pop %v823
    %v832 = vmul.f32 %v785, %v824
    %v833 = vmul.f32 %v787, %v825
    %v834 = vmul.f32 %v789, %v826
    %v835 = vmul.f32 %v791, %v827
    %v836 = vmul.f32 %v793, %v828
    %v837 = vmul.f32 %v795, %v829
    %v838 = vmul.f32 %v797, %v830
    %v839 = vmul.f32 %v799, %v831
    %840 = vrot.lane.b32.xlu0 %v121, 64
    %v841 = vpop.permute.xlu0 %840
    %v844 = vsel %vm145, %v832, 0
    %846 = vmatprep.subr.mxu0 0.0
    %847 = vmatpush1.msra.mxu0 %v841
    %848 = vmatprep.subr.mxu0 0.0
    %849 = vmatpush1.msra.mxu0 0.0
    %850 = vmatprep.subr.mxu0 0.0
    %851 = vmatpush1.msra.mxu0 0.0
    %852 = vmatprep.subr.mxu0 0.0
    %853 = vmatpush1.msra.mxu0 0.0
    %854 = vmatprep.subr.mxu0 0.0
    %855 = vmatpush1.msra.mxu0 0.0
    %856 = vmatprep.subr.mxu0 0.0
    %857 = vmatpush1.msra.mxu0 0.0
    %858 = vmatprep.subr.mxu0 0.0
    %859 = vmatpush1.msra.mxu0 0.0
    %860 = vmatprep.subr.mxu0 0.0
    %861 = vmatpush1.msra.mxu0 0.0
    %862 = vmatprep.subr.mxu0 0.0
    %863 = vmatpush1.msra.mxu0 0.0
    %864 = vmatprep.subr.mxu0 0.0
    %865 = vmatpush1.msra.mxu0 0.0
    %866 = vmatprep.subr.mxu0 0.0
    %867 = vmatpush1.msra.mxu0 0.0
    %868 = vmatprep.subr.mxu0 0.0
    %869 = vmatpush1.msra.mxu0 0.0
    %870 = vmatprep.subr.mxu0 0.0
    %871 = vmatpush1.msra.mxu0 0.0
    %872 = vmatprep.subr.mxu0 0.0
    %873 = vmatpush1.msra.mxu0 0.0
    %874 = vmatprep.subr.mxu0 0.0
    %875 = vmatpush1.msra.mxu0 0.0
    %876 = vmatprep.subr.mxu0 0.0
    %877 = vmatpush1.msra.mxu0 0.0
    %878 = vmatprep.subr.mxu0 0.0
    %879 = vmatpush1.msra.mxu0 0.0
    %880 = vmatprep.subr.mxu0 0.0
    %881 = vmatpush1.msra.mxu0 0.0
    %882 = vmatprep.subr.mxu0 0.0
    %883 = vmatpush1.msra.mxu0 0.0
    %884 = vmatprep.subr.mxu0 0.0
    %885 = vmatpush1.msra.mxu0 0.0
    %886 = vmatprep.subr.mxu0 0.0
    %887 = vmatpush1.msra.mxu0 0.0
    %888 = vmatprep.subr.mxu0 0.0
    %889 = vmatpush1.msra.mxu0 0.0
    %890 = vmatprep.subr.mxu0 0.0
    %891 = vmatpush1.msra.mxu0 0.0
    %892 = vmatprep.subr.mxu0 0.0
    %893 = vmatpush1.msra.mxu0 0.0
    %894 = vmatprep.subr.mxu0 0.0
    %895 = vmatpush1.msra.mxu0 0.0
    %896 = vmatprep.subr.mxu0 0.0
    %897 = vmatpush1.msra.mxu0 0.0
    %898 = vmatprep.subr.mxu0 0.0
    %899 = vmatpush1.msra.mxu0 0.0
    %900 = vmatprep.subr.mxu0 0.0
    %901 = vmatpush1.msra.mxu0 0.0
    %902 = vmatprep.subr.mxu0 0.0
    %903 = vmatpush1.msra.mxu0 0.0
    %904 = vmatprep.subr.mxu0 0.0
    %905 = vmatpush1.msra.mxu0 0.0
    %906 = vmatprep.subr.mxu0 0.0
    %907 = vmatpush1.msra.mxu0 0.0
    %908 = vmatprep.subr.mxu0 0.0
    %909 = vmatpush1.msra.mxu0 0.0
    %910 = vmatprep.mubr.f32.mxu0 0.0
    %911 = vmatmul.mubr.f32.gmra.mrb[0].mxu0 %v844
    %v912 = vpop.f32.mrb[0].mxu0
    %v913 = vadd.f32 0.0, %v912
    %v914 = vpop.f32.mrb[0].mxu0
    %915 = vdwg.mxu0
    %916 = vrot.lane.b32.xlu0 %v132, 64
    %v917 = vpop.permute.xlu0 %916
    %v920 = vsel %vm145, %v833, 0
    %922 = vmatprep.subr.mxu0 0.0
    %923 = vmatpush1.msra.mxu0 %v917
    %924 = vmatprep.subr.mxu0 0.0
    %925 = vmatpush1.msra.mxu0 0.0
    %926 = vmatprep.subr.mxu0 0.0
    %927 = vmatpush1.msra.mxu0 0.0
    %928 = vmatprep.subr.mxu0 0.0
    %929 = vmatpush1.msra.mxu0 0.0
    %930 = vmatprep.subr.mxu0 0.0
    %931 = vmatpush1.msra.mxu0 0.0
    %932 = vmatprep.subr.mxu0 0.0
    %933 = vmatpush1.msra.mxu0 0.0
    %934 = vmatprep.subr.mxu0 0.0
    %935 = vmatpush1.msra.mxu0 0.0
    %936 = vmatprep.subr.mxu0 0.0
    %937 = vmatpush1.msra.mxu0 0.0
    %938 = vmatprep.subr.mxu0 0.0
    %939 = vmatpush1.msra.mxu0 0.0
    %940 = vmatprep.subr.mxu0 0.0
    %941 = vmatpush1.msra.mxu0 0.0
    %942 = vmatprep.subr.mxu0 0.0
    %943 = vmatpush1.msra.mxu0 0.0
    %944 = vmatprep.subr.mxu0 0.0
    %945 = vmatpush1.msra.mxu0 0.0
    %946 = vmatprep.subr.mxu0 0.0
    %947 = vmatpush1.msra.mxu0 0.0
    %948 = vmatprep.subr.mxu0 0.0
    %949 = vmatpush1.msra.mxu0 0.0
    %950 = vmatprep.subr.mxu0 0.0
    %951 = vmatpush1.msra.mxu0 0.0
    %952 = vmatprep.subr.mxu0 0.0
    %953 = vmatpush1.msra.mxu0 0.0
    %954 = vmatprep.subr.mxu0 0.0
    %955 = vmatpush1.msra.mxu0 0.0
    %956 = vmatprep.subr.mxu0 0.0
    %957 = vmatpush1.msra.mxu0 0.0
    %958 = vmatprep.subr.mxu0 0.0
    %959 = vmatpush1.msra.mxu0 0.0
    %960 = vmatprep.subr.mxu0 0.0
    %961 = vmatpush1.msra.mxu0 0.0
    %962 = vmatprep.subr.mxu0 0.0
    %963 = vmatpush1.msra.mxu0 0.0
    %964 = vmatprep.subr.mxu0 0.0
    %965 = vmatpush1.msra.mxu0 0.0
    %966 = vmatprep.subr.mxu0 0.0
    %967 = vmatpush1.msra.mxu0 0.0
    %968 = vmatprep.subr.mxu0 0.0
    %969 = vmatpush1.msra.mxu0 0.0
    %970 = vmatprep.subr.mxu0 0.0
    %971 = vmatpush1.msra.mxu0 0.0
    %972 = vmatprep.subr.mxu0 0.0
    %973 = vmatpush1.msra.mxu0 0.0
    %974 = vmatprep.subr.mxu0 0.0
    %975 = vmatpush1.msra.mxu0 0.0
    %976 = vmatprep.subr.mxu0 0.0
    %977 = vmatpush1.msra.mxu0 0.0
    %978 = vmatprep.subr.mxu0 0.0
    %979 = vmatpush1.msra.mxu0 0.0
    %980 = vmatprep.subr.mxu0 0.0
    %981 = vmatpush1.msra.mxu0 0.0
    %982 = vmatprep.subr.mxu0 0.0
    %983 = vmatpush1.msra.mxu0 0.0
    %984 = vmatprep.subr.mxu0 0.0
    %985 = vmatpush1.msra.mxu0 0.0
    %986 = vmatprep.mubr.f32.mxu0 0.0
    %987 = vmatmul.mubr.f32.gmra.mrb[0].mxu0 %v920
    %v988 = vpop.f32.mrb[0].mxu0
    %v989 = vadd.f32 0.0, %v988
    %v990 = vpop.f32.mrb[0].mxu0
    %991 = vdwg.mxu0
    %992 = vrot.lane.b32.xlu0 %v136, 64
    %v993 = vpop.permute.xlu0 %992
    %v996 = vsel %vm145, %v834, 0
    %998 = vmatprep.subr.mxu0 0.0
    %999 = vmatpush1.msra.mxu0 %v993
    %1000 = vmatprep.subr.mxu0 0.0
    %1001 = vmatpush1.msra.mxu0 0.0
    %1002 = vmatprep.subr.mxu0 0.0
    %1003 = vmatpush1.msra.mxu0 0.0
    %1004 = vmatprep.subr.mxu0 0.0
    %1005 = vmatpush1.msra.mxu0 0.0
    %1006 = vmatprep.subr.mxu0 0.0
    %1007 = vmatpush1.msra.mxu0 0.0
    %1008 = vmatprep.subr.mxu0 0.0
    %1009 = vmatpush1.msra.mxu0 0.0
    %1010 = vmatprep.subr.mxu0 0.0
    %1011 = vmatpush1.msra.mxu0 0.0
    %1012 = vmatprep.subr.mxu0 0.0
    %1013 = vmatpush1.msra.mxu0 0.0
    %1014 = vmatprep.subr.mxu0 0.0
    %1015 = vmatpush1.msra.mxu0 0.0
    %1016 = vmatprep.subr.mxu0 0.0
    %1017 = vmatpush1.msra.mxu0 0.0
    %1018 = vmatprep.subr.mxu0 0.0
    %1019 = vmatpush1.msra.mxu0 0.0
    %1020 = vmatprep.subr.mxu0 0.0
    %1021 = vmatpush1.msra.mxu0 0.0
    %1022 = vmatprep.subr.mxu0 0.0
    %1023 = vmatpush1.msra.mxu0 0.0
    %1024 = vmatprep.subr.mxu0 0.0
    %1025 = vmatpush1.msra.mxu0 0.0
    %1026 = vmatprep.subr.mxu0 0.0
    %1027 = vmatpush1.msra.mxu0 0.0
    %1028 = vmatprep.subr.mxu0 0.0
    %1029 = vmatpush1.msra.mxu0 0.0
    %1030 = vmatprep.subr.mxu0 0.0
    %1031 = vmatpush1.msra.mxu0 0.0
    %1032 = vmatprep.subr.mxu0 0.0
    %1033 = vmatpush1.msra.mxu0 0.0
    %1034 = vmatprep.subr.mxu0 0.0
    %1035 = vmatpush1.msra.mxu0 0.0
    %1036 = vmatprep.subr.mxu0 0.0
    %1037 = vmatpush1.msra.mxu0 0.0
    %1038 = vmatprep.subr.mxu0 0.0
    %1039 = vmatpush1.msra.mxu0 0.0
    %1040 = vmatprep.subr.mxu0 0.0
    %1041 = vmatpush1.msra.mxu0 0.0
    %1042 = vmatprep.subr.mxu0 0.0
    %1043 = vmatpush1.msra.mxu0 0.0
    %1044 = vmatprep.subr.mxu0 0.0
    %1045 = vmatpush1.msra.mxu0 0.0
    %1046 = vmatprep.subr.mxu0 0.0
    %1047 = vmatpush1.msra.mxu0 0.0
    %1048 = vmatprep.subr.mxu0 0.0
    %1049 = vmatpush1.msra.mxu0 0.0
    %1050 = vmatprep.subr.mxu0 0.0
    %1051 = vmatpush1.msra.mxu0 0.0
    %1052 = vmatprep.subr.mxu0 0.0
    %1053 = vmatpush1.msra.mxu0 0.0
    %1054 = vmatprep.subr.mxu0 0.0
    %1055 = vmatpush1.msra.mxu0 0.0
    %1056 = vmatprep.subr.mxu0 0.0
    %1057 = vmatpush1.msra.mxu0 0.0
    %1058 = vmatprep.subr.mxu0 0.0
    %1059 = vmatpush1.msra.mxu0 0.0
    %1060 = vmatprep.subr.mxu0 0.0
    %1061 = vmatpush1.msra.mxu0 0.0
    %1062 = vmatprep.mubr.f32.mxu0 0.0
    %1063 = vmatmul.mubr.f32.gmra.mrb[0].mxu0 %v996
    %v1064 = vpop.f32.mrb[0].mxu0
    %v1065 = vadd.f32 0.0, %v1064
    %v1066 = vpop.f32.mrb[0].mxu0
    %1067 = vdwg.mxu0
    %1068 = vrot.lane.b32.xlu0 %v140, 64
    %v1069 = vpop.permute.xlu0 %1068
    %v1072 = vsel %vm145, %v835, 0
    %1074 = vmatprep.subr.mxu0 0.0
    %1075 = vmatpush1.msra.mxu0 %v1069
    %1076 = vmatprep.subr.mxu0 0.0
    %1077 = vmatpush1.msra.mxu0 0.0
    %1078 = vmatprep.subr.mxu0 0.0
    %1079 = vmatpush1.msra.mxu0 0.0
    %1080 = vmatprep.subr.mxu0 0.0
    %1081 = vmatpush1.msra.mxu0 0.0
    %1082 = vmatprep.subr.mxu0 0.0
    %1083 = vmatpush1.msra.mxu0 0.0
    %1084 = vmatprep.subr.mxu0 0.0
    %1085 = vmatpush1.msra.mxu0 0.0
    %1086 = vmatprep.subr.mxu0 0.0
    %1087 = vmatpush1.msra.mxu0 0.0
    %1088 = vmatprep.subr.mxu0 0.0
    %1089 = vmatpush1.msra.mxu0 0.0
    %1090 = vmatprep.subr.mxu0 0.0
    %1091 = vmatpush1.msra.mxu0 0.0
    %1092 = vmatprep.subr.mxu0 0.0
    %1093 = vmatpush1.msra.mxu0 0.0
    %1094 = vmatprep.subr.mxu0 0.0
    %1095 = vmatpush1.msra.mxu0 0.0
    %1096 = vmatprep.subr.mxu0 0.0
    %1097 = vmatpush1.msra.mxu0 0.0
    %1098 = vmatprep.subr.mxu0 0.0
    %1099 = vmatpush1.msra.mxu0 0.0
    %1100 = vmatprep.subr.mxu0 0.0
    %1101 = vmatpush1.msra.mxu0 0.0
    %1102 = vmatprep.subr.mxu0 0.0
    %1103 = vmatpush1.msra.mxu0 0.0
    %1104 = vmatprep.subr.mxu0 0.0
    %1105 = vmatpush1.msra.mxu0 0.0
    %1106 = vmatprep.subr.mxu0 0.0
    %1107 = vmatpush1.msra.mxu0 0.0
    %1108 = vmatprep.subr.mxu0 0.0
    %1109 = vmatpush1.msra.mxu0 0.0
    %1110 = vmatprep.subr.mxu0 0.0
    %1111 = vmatpush1.msra.mxu0 0.0
    %1112 = vmatprep.subr.mxu0 0.0
    %1113 = vmatpush1.msra.mxu0 0.0
    %1114 = vmatprep.subr.mxu0 0.0
    %1115 = vmatpush1.msra.mxu0 0.0
    %1116 = vmatprep.subr.mxu0 0.0
    %1117 = vmatpush1.msra.mxu0 0.0
    %1118 = vmatprep.subr.mxu0 0.0
    %1119 = vmatpush1.msra.mxu0 0.0
    %1120 = vmatprep.subr.mxu0 0.0
    %1121 = vmatpush1.msra.mxu0 0.0
    %1122 = vmatprep.subr.mxu0 0.0
    %1123 = vmatpush1.msra.mxu0 0.0
    %1124 = vmatprep.subr.mxu0 0.0
    %1125 = vmatpush1.msra.mxu0 0.0
    %1126 = vmatprep.subr.mxu0 0.0
    %1127 = vmatpush1.msra.mxu0 0.0
    %1128 = vmatprep.subr.mxu0 0.0
    %1129 = vmatpush1.msra.mxu0 0.0
    %1130 = vmatprep.subr.mxu0 0.0
    %1131 = vmatpush1.msra.mxu0 0.0
    %1132 = vmatprep.subr.mxu0 0.0
    %1133 = vmatpush1.msra.mxu0 0.0
    %1134 = vmatprep.subr.mxu0 0.0
    %1135 = vmatpush1.msra.mxu0 0.0
    %1136 = vmatprep.subr.mxu0 0.0
    %1137 = vmatpush1.msra.mxu0 0.0
    %1138 = vmatprep.mubr.f32.mxu0 0.0
    %1139 = vmatmul.mubr.f32.gmra.mrb[0].mxu0 %v1072
    %v1140 = vpop.f32.mrb[0].mxu0
    %v1141 = vadd.f32 0.0, %v1140
    %v1142 = vpop.f32.mrb[0].mxu0
    %1143 = vdwg.mxu0
    %1144 = vrot.lane.b32.xlu0 %v126, 64
    %v1145 = vpop.permute.xlu0 %1144
    %v1148 = vsel %vm145, %v836, 0
    %1150 = vmatprep.subr.mxu0 0.0
    %1151 = vmatpush1.msra.mxu0 %v1145
    %1152 = vmatprep.subr.mxu0 0.0
    %1153 = vmatpush1.msra.mxu0 0.0
    %1154 = vmatprep.subr.mxu0 0.0
    %1155 = vmatpush1.msra.mxu0 0.0
    %1156 = vmatprep.subr.mxu0 0.0
    %1157 = vmatpush1.msra.mxu0 0.0
    %1158 = vmatprep.subr.mxu0 0.0
    %1159 = vmatpush1.msra.mxu0 0.0
    %1160 = vmatprep.subr.mxu0 0.0
    %1161 = vmatpush1.msra.mxu0 0.0
    %1162 = vmatprep.subr.mxu0 0.0
    %1163 = vmatpush1.msra.mxu0 0.0
    %1164 = vmatprep.subr.mxu0 0.0
    %1165 = vmatpush1.msra.mxu0 0.0
    %1166 = vmatprep.subr.mxu0 0.0
    %1167 = vmatpush1.msra.mxu0 0.0
    %1168 = vmatprep.subr.mxu0 0.0
    %1169 = vmatpush1.msra.mxu0 0.0
    %1170 = vmatprep.subr.mxu0 0.0
    %1171 = vmatpush1.msra.mxu0 0.0
    %1172 = vmatprep.subr.mxu0 0.0
    %1173 = vmatpush1.msra.mxu0 0.0
    %1174 = vmatprep.subr.mxu0 0.0
    %1175 = vmatpush1.msra.mxu0 0.0
    %1176 = vmatprep.subr.mxu0 0.0
    %1177 = vmatpush1.msra.mxu0 0.0
    %1178 = vmatprep.subr.mxu0 0.0
    %1179 = vmatpush1.msra.mxu0 0.0
    %1180 = vmatprep.subr.mxu0 0.0
    %1181 = vmatpush1.msra.mxu0 0.0
    %1182 = vmatprep.subr.mxu0 0.0
    %1183 = vmatpush1.msra.mxu0 0.0
    %1184 = vmatprep.subr.mxu0 0.0
    %1185 = vmatpush1.msra.mxu0 0.0
    %1186 = vmatprep.subr.mxu0 0.0
    %1187 = vmatpush1.msra.mxu0 0.0
    %1188 = vmatprep.subr.mxu0 0.0
    %1189 = vmatpush1.msra.mxu0 0.0
    %1190 = vmatprep.subr.mxu0 0.0
    %1191 = vmatpush1.msra.mxu0 0.0
    %1192 = vmatprep.subr.mxu0 0.0
    %1193 = vmatpush1.msra.mxu0 0.0
    %1194 = vmatprep.subr.mxu0 0.0
    %1195 = vmatpush1.msra.mxu0 0.0
    %1196 = vmatprep.subr.mxu0 0.0
    %1197 = vmatpush1.msra.mxu0 0.0
    %1198 = vmatprep.subr.mxu0 0.0
    %1199 = vmatpush1.msra.mxu0 0.0
    %1200 = vmatprep.subr.mxu0 0.0
    %1201 = vmatpush1.msra.mxu0 0.0
    %1202 = vmatprep.subr.mxu0 0.0
    %1203 = vmatpush1.msra.mxu0 0.0
    %1204 = vmatprep.subr.mxu0 0.0
    %1205 = vmatpush1.msra.mxu0 0.0
    %1206 = vmatprep.subr.mxu0 0.0
    %1207 = vmatpush1.msra.mxu0 0.0
    %1208 = vmatprep.subr.mxu0 0.0
    %1209 = vmatpush1.msra.mxu0 0.0
    %1210 = vmatprep.subr.mxu0 0.0
    %1211 = vmatpush1.msra.mxu0 0.0
    %1212 = vmatprep.subr.mxu0 0.0
    %1213 = vmatpush1.msra.mxu0 0.0
    %1214 = vmatprep.mubr.f32.mxu0 0.0
    %1215 = vmatmul.mubr.f32.gmra.mrb[0].mxu0 %v1148
    %v1216 = vpop.f32.mrb[0].mxu0
    %v1217 = vadd.f32 0.0, %v1216
    %v1218 = vpop.f32.mrb[0].mxu0
    %1219 = vdwg.mxu0
    %1220 = vrot.lane.b32.xlu0 %v134, 64
    %v1221 = vpop.permute.xlu0 %1220
    %v1224 = vsel %vm145, %v837, 0
    %1226 = vmatprep.subr.mxu0 0.0
    %1227 = vmatpush1.msra.mxu0 %v1221
    %1228 = vmatprep.subr.mxu0 0.0
    %1229 = vmatpush1.msra.mxu0 0.0
    %1230 = vmatprep.subr.mxu0 0.0
    %1231 = vmatpush1.msra.mxu0 0.0
    %1232 = vmatprep.subr.mxu0 0.0
    %1233 = vmatpush1.msra.mxu0 0.0
    %1234 = vmatprep.subr.mxu0 0.0
    %1235 = vmatpush1.msra.mxu0 0.0
    %1236 = vmatprep.subr.mxu0 0.0
    %1237 = vmatpush1.msra.mxu0 0.0
    %1238 = vmatprep.subr.mxu0 0.0
    %1239 = vmatpush1.msra.mxu0 0.0
    %1240 = vmatprep.subr.mxu0 0.0
    %1241 = vmatpush1.msra.mxu0 0.0
    %1242 = vmatprep.subr.mxu0 0.0
    %1243 = vmatpush1.msra.mxu0 0.0
    %1244 = vmatprep.subr.mxu0 0.0
    %1245 = vmatpush1.msra.mxu0 0.0
    %1246 = vmatprep.subr.mxu0 0.0
    %1247 = vmatpush1.msra.mxu0 0.0
    %1248 = vmatprep.subr.mxu0 0.0
    %1249 = vmatpush1.msra.mxu0 0.0
    %1250 = vmatprep.subr.mxu0 0.0
    %1251 = vmatpush1.msra.mxu0 0.0
    %1252 = vmatprep.subr.mxu0 0.0
    %1253 = vmatpush1.msra.mxu0 0.0
    %1254 = vmatprep.subr.mxu0 0.0
    %1255 = vmatpush1.msra.mxu0 0.0
    %1256 = vmatprep.subr.mxu0 0.0
    %1257 = vmatpush1.msra.mxu0 0.0
    %1258 = vmatprep.subr.mxu0 0.0
    %1259 = vmatpush1.msra.mxu0 0.0
    %1260 = vmatprep.subr.mxu0 0.0
    %1261 = vmatpush1.msra.mxu0 0.0
    %1262 = vmatprep.subr.mxu0 0.0
    %1263 = vmatpush1.msra.mxu0 0.0
    %1264 = vmatprep.subr.mxu0 0.0
    %1265 = vmatpush1.msra.mxu0 0.0
    %1266 = vmatprep.subr.mxu0 0.0
    %1267 = vmatpush1.msra.mxu0 0.0
    %1268 = vmatprep.subr.mxu0 0.0
    %1269 = vmatpush1.msra.mxu0 0.0
    %1270 = vmatprep.subr.mxu0 0.0
    %1271 = vmatpush1.msra.mxu0 0.0
    %1272 = vmatprep.subr.mxu0 0.0
    %1273 = vmatpush1.msra.mxu0 0.0
    %1274 = vmatprep.subr.mxu0 0.0
    %1275 = vmatpush1.msra.mxu0 0.0
    %1276 = vmatprep.subr.mxu0 0.0
    %1277 = vmatpush1.msra.mxu0 0.0
    %1278 = vmatprep.subr.mxu0 0.0
    %1279 = vmatpush1.msra.mxu0 0.0
    %1280 = vmatprep.subr.mxu0 0.0
    %1281 = vmatpush1.msra.mxu0 0.0
    %1282 = vmatprep.subr.mxu0 0.0
    %1283 = vmatpush1.msra.mxu0 0.0
    %1284 = vmatprep.subr.mxu0 0.0
    %1285 = vmatpush1.msra.mxu0 0.0
    %1286 = vmatprep.subr.mxu0 0.0
    %1287 = vmatpush1.msra.mxu0 0.0
    %1288 = vmatprep.subr.mxu0 0.0
    %1289 = vmatpush1.msra.mxu0 0.0
    %1290 = vmatprep.mubr.f32.mxu0 0.0
    %1291 = vmatmul.mubr.f32.gmra.mrb[0].mxu0 %v1224
    %v1292 = vpop.f32.mrb[0].mxu0
    %v1293 = vadd.f32 0.0, %v1292
    %v1294 = vpop.f32.mrb[0].mxu0
    %1295 = vdwg.mxu0
    %1296 = vrot.lane.b32.xlu0 %v138, 64
    %v1297 = vpop.permute.xlu0 %1296
    %v1300 = vsel %vm145, %v838, 0
    %1302 = vmatprep.subr.mxu0 0.0
    %1303 = vmatpush1.msra.mxu0 %v1297
    %1304 = vmatprep.subr.mxu0 0.0
    %1305 = vmatpush1.msra.mxu0 0.0
    %1306 = vmatprep.subr.mxu0 0.0
    %1307 = vmatpush1.msra.mxu0 0.0
    %1308 = vmatprep.subr.mxu0 0.0
    %1309 = vmatpush1.msra.mxu0 0.0
    %1310 = vmatprep.subr.mxu0 0.0
    %1311 = vmatpush1.msra.mxu0 0.0
    %1312 = vmatprep.subr.mxu0 0.0
    %1313 = vmatpush1.msra.mxu0 0.0
    %1314 = vmatprep.subr.mxu0 0.0
    %1315 = vmatpush1.msra.mxu0 0.0
    %1316 = vmatprep.subr.mxu0 0.0
    %1317 = vmatpush1.msra.mxu0 0.0
    %1318 = vmatprep.subr.mxu0 0.0
    %1319 = vmatpush1.msra.mxu0 0.0
    %1320 = vmatprep.subr.mxu0 0.0
    %1321 = vmatpush1.msra.mxu0 0.0
    %1322 = vmatprep.subr.mxu0 0.0
    %1323 = vmatpush1.msra.mxu0 0.0
    %1324 = vmatprep.subr.mxu0 0.0
    %1325 = vmatpush1.msra.mxu0 0.0
    %1326 = vmatprep.subr.mxu0 0.0
    %1327 = vmatpush1.msra.mxu0 0.0
    %1328 = vmatprep.subr.mxu0 0.0
    %1329 = vmatpush1.msra.mxu0 0.0
    %1330 = vmatprep.subr.mxu0 0.0
    %1331 = vmatpush1.msra.mxu0 0.0
    %1332 = vmatprep.subr.mxu0 0.0
    %1333 = vmatpush1.msra.mxu0 0.0
    %1334 = vmatprep.subr.mxu0 0.0
    %1335 = vmatpush1.msra.mxu0 0.0
    %1336 = vmatprep.subr.mxu0 0.0
    %1337 = vmatpush1.msra.mxu0 0.0
    %1338 = vmatprep.subr.mxu0 0.0
    %1339 = vmatpush1.msra.mxu0 0.0
    %1340 = vmatprep.subr.mxu0 0.0
    %1341 = vmatpush1.msra.mxu0 0.0
    %1342 = vmatprep.subr.mxu0 0.0
    %1343 = vmatpush1.msra.mxu0 0.0
    %1344 = vmatprep.subr.mxu0 0.0
    %1345 = vmatpush1.msra.mxu0 0.0
    %1346 = vmatprep.subr.mxu0 0.0
    %1347 = vmatpush1.msra.mxu0 0.0
    %1348 = vmatprep.subr.mxu0 0.0
    %1349 = vmatpush1.msra.mxu0 0.0
    %1350 = vmatprep.subr.mxu0 0.0
    %1351 = vmatpush1.msra.mxu0 0.0
    %1352 = vmatprep.subr.mxu0 0.0
    %1353 = vmatpush1.msra.mxu0 0.0
    %1354 = vmatprep.subr.mxu0 0.0
    %1355 = vmatpush1.msra.mxu0 0.0
    %1356 = vmatprep.subr.mxu0 0.0
    %1357 = vmatpush1.msra.mxu0 0.0
    %1358 = vmatprep.subr.mxu0 0.0
    %1359 = vmatpush1.msra.mxu0 0.0
    %1360 = vmatprep.subr.mxu0 0.0
    %1361 = vmatpush1.msra.mxu0 0.0
    %1362 = vmatprep.subr.mxu0 0.0
    %1363 = vmatpush1.msra.mxu0 0.0
    %1364 = vmatprep.subr.mxu0 0.0
    %1365 = vmatpush1.msra.mxu0 0.0
    %1366 = vmatprep.mubr.f32.mxu0 0.0
    %1367 = vmatmul.mubr.f32.gmra.mrb[0].mxu0 %v1300
    %v1368 = vpop.f32.mrb[0].mxu0
    %v1369 = vadd.f32 0.0, %v1368
    %v1370 = vpop.f32.mrb[0].mxu0
    %1371 = vdwg.mxu0
    %1372 = vrot.lane.b32.xlu0 %v142, 64
    %v1373 = vpop.permute.xlu0 %1372
    %v1376 = vsel %vm145, %v839, 0
    %1378 = vmatprep.subr.mxu0 0.0
    %1379 = vmatpush1.msra.mxu0 %v1373
    %1380 = vmatprep.subr.mxu0 0.0
    %1381 = vmatpush1.msra.mxu0 0.0
    %1382 = vmatprep.subr.mxu0 0.0
    %1383 = vmatpush1.msra.mxu0 0.0
    %1384 = vmatprep.subr.mxu0 0.0
    %1385 = vmatpush1.msra.mxu0 0.0
    %1386 = vmatprep.subr.mxu0 0.0
    %1387 = vmatpush1.msra.mxu0 0.0
    %1388 = vmatprep.subr.mxu0 0.0
    %1389 = vmatpush1.msra.mxu0 0.0
    %1390 = vmatprep.subr.mxu0 0.0
    %1391 = vmatpush1.msra.mxu0 0.0
    %1392 = vmatprep.subr.mxu0 0.0
    %1393 = vmatpush1.msra.mxu0 0.0
    %1394 = vmatprep.subr.mxu0 0.0
    %1395 = vmatpush1.msra.mxu0 0.0
    %1396 = vmatprep.subr.mxu0 0.0
    %1397 = vmatpush1.msra.mxu0 0.0
    %1398 = vmatprep.subr.mxu0 0.0
    %1399 = vmatpush1.msra.mxu0 0.0
    %1400 = vmatprep.subr.mxu0 0.0
    %1401 = vmatpush1.msra.mxu0 0.0
    %1402 = vmatprep.subr.mxu0 0.0
    %1403 = vmatpush1.msra.mxu0 0.0
    %1404 = vmatprep.subr.mxu0 0.0
    %1405 = vmatpush1.msra.mxu0 0.0
    %1406 = vmatprep.subr.mxu0 0.0
    %1407 = vmatpush1.msra.mxu0 0.0
    %1408 = vmatprep.subr.mxu0 0.0
    %1409 = vmatpush1.msra.mxu0 0.0
    %1410 = vmatprep.subr.mxu0 0.0
    %1411 = vmatpush1.msra.mxu0 0.0
    %1412 = vmatprep.subr.mxu0 0.0
    %1413 = vmatpush1.msra.mxu0 0.0
    %1414 = vmatprep.subr.mxu0 0.0
    %1415 = vmatpush1.msra.mxu0 0.0
    %1416 = vmatprep.subr.mxu0 0.0
    %1417 = vmatpush1.msra.mxu0 0.0
    %1418 = vmatprep.subr.mxu0 0.0
    %1419 = vmatpush1.msra.mxu0 0.0
    %1420 = vmatprep.subr.mxu0 0.0
    %1421 = vmatpush1.msra.mxu0 0.0
    %1422 = vmatprep.subr.mxu0 0.0
    %1423 = vmatpush1.msra.mxu0 0.0
    %1424 = vmatprep.subr.mxu0 0.0
    %1425 = vmatpush1.msra.mxu0 0.0
    %1426 = vmatprep.subr.mxu0 0.0
    %1427 = vmatpush1.msra.mxu0 0.0
    %1428 = vmatprep.subr.mxu0 0.0
    %1429 = vmatpush1.msra.mxu0 0.0
    %1430 = vmatprep.subr.mxu0 0.0
    %1431 = vmatpush1.msra.mxu0 0.0
    %1432 = vmatprep.subr.mxu0 0.0
    %1433 = vmatpush1.msra.mxu0 0.0
    %1434 = vmatprep.subr.mxu0 0.0
    %1435 = vmatpush1.msra.mxu0 0.0
    %1436 = vmatprep.subr.mxu0 0.0
    %1437 = vmatpush1.msra.mxu0 0.0
    %1438 = vmatprep.subr.mxu0 0.0
    %1439 = vmatpush1.msra.mxu0 0.0
    %1440 = vmatprep.subr.mxu0 0.0
    %1441 = vmatpush1.msra.mxu0 0.0
    %1442 = vmatprep.mubr.f32.mxu0 0.0
    %1443 = vmatmul.mubr.f32.gmra.mrb[0].mxu0 %v1376
    %v1444 = vpop.f32.mrb[0].mxu0
    %v1445 = vadd.f32 0.0, %v1444
    %v1446 = vpop.f32.mrb[0].mxu0
    %1447 = vdwg.mxu0
    %1450 = vrot.lane.b32.xlu0 %v989, 8
    %v1451 = vpop.permute.xlu0 %1450
    %1452 = vrot.lane.b32.xlu0 %v1293, 8
    %v1453 = vpop.permute.xlu0 %1452
    %1458 = vrot.lane.b32.xlu0 %v1065, 16
    %v1459 = vpop.permute.xlu0 %1458
    %1460 = vrot.lane.b32.xlu0 %v1369, 16
    %v1461 = vpop.permute.xlu0 %1460
    %1466 = vrot.lane.b32.xlu0 %v1141, 24
    %v1467 = vpop.permute.xlu0 %1466
    %1468 = vrot.lane.b32.xlu0 %v1445, 24
    %v1469 = vpop.permute.xlu0 %1468
    %v1472 = vsel %vm145, %v913, %v1451
    %v1473 = vsel %vm145, %v1217, %v1453
    %vm1474 = vcmask 130048
    %v1475 = vsel %vm1474, %v1472, %v1459
    %v1476 = vsel %vm1474, %v1473, %v1461
    %vm1477 = vcmask 195584
    %v1478 = vsel %vm1477, %v1475, %v1467
    %v1479 = vsel %vm1477, %v1476, %v1469
    %v1480 = vld [vmem:[%s3] sm:$0xff]
    %v1481 = vld [vmem:[%s3 + $0x8] sm:$0xff]
    %v1482 = vld [vmem:[%s3 + $0x10] sm:$0xff]
    %v1483 = vld [vmem:[%s3 + $0x18] sm:$0xff]
    %v1484 = vlaneseq
    %v1485 = vshrl.u32 %v1484, 7
    %v1486 = vsub.s32 0, %v1485
    %v1487 = vrot.slane %v32, %v1486
    %v1489 = vsel %vm47, %v1478, 0
    %v1492 = vsel %vm47, %v1479, 0
    %1494 = vmatprep.subr.mxu0 0.0
    %1495 = vmatpush1.msra.mxu0 %v1480
    %1496 = vmatprep.subr.mxu0 0.0
    %1497 = vmatpush1.msra.mxu0 %v1481
    %1498 = vmatprep.subr.mxu0 0.0
    %1499 = vmatpush1.msra.mxu0 %v1482
    %1500 = vmatprep.subr.mxu0 0.0
    %1501 = vmatpush1.msra.mxu0 %v1483
    %1502 = vmatprep.subr.mxu0 0.0
    %1503 = vmatpush1.msra.mxu0 0.0
    %1504 = vmatprep.subr.mxu0 0.0
    %1505 = vmatpush1.msra.mxu0 0.0
    %1506 = vmatprep.subr.mxu0 0.0
    %1507 = vmatpush1.msra.mxu0 0.0
    %1508 = vmatprep.subr.mxu0 0.0
    %1509 = vmatpush1.msra.mxu0 0.0
    %1510 = vmatprep.subr.mxu0 0.0
    %1511 = vmatpush1.msra.mxu0 0.0
    %1512 = vmatprep.subr.mxu0 0.0
    %1513 = vmatpush1.msra.mxu0 0.0
    %1514 = vmatprep.subr.mxu0 0.0
    %1515 = vmatpush1.msra.mxu0 0.0
    %1516 = vmatprep.subr.mxu0 0.0
    %1517 = vmatpush1.msra.mxu0 0.0
    %1518 = vmatprep.subr.mxu0 0.0
    %1519 = vmatpush1.msra.mxu0 0.0
    %1520 = vmatprep.subr.mxu0 0.0
    %1521 = vmatpush1.msra.mxu0 0.0
    %1522 = vmatprep.subr.mxu0 0.0
    %1523 = vmatpush1.msra.mxu0 0.0
    %1524 = vmatprep.subr.mxu0 0.0
    %1525 = vmatpush1.msra.mxu0 0.0
    %1526 = vmatprep.subr.mxu0 0.0
    %1527 = vmatpush1.msra.mxu0 0.0
    %1528 = vmatprep.subr.mxu0 0.0
    %1529 = vmatpush1.msra.mxu0 0.0
    %1530 = vmatprep.subr.mxu0 0.0
    %1531 = vmatpush1.msra.mxu0 0.0
    %1532 = vmatprep.subr.mxu0 0.0
    %1533 = vmatpush1.msra.mxu0 0.0
    %1534 = vmatprep.subr.mxu0 0.0
    %1535 = vmatpush1.msra.mxu0 0.0
    %1536 = vmatprep.subr.mxu0 0.0
    %1537 = vmatpush1.msra.mxu0 0.0
    %1538 = vmatprep.subr.mxu0 0.0
    %1539 = vmatpush1.msra.mxu0 0.0
    %1540 = vmatprep.subr.mxu0 0.0
    %1541 = vmatpush1.msra.mxu0 0.0
    %1542 = vmatprep.subr.mxu0 0.0
    %1543 = vmatpush1.msra.mxu0 0.0
    %1544 = vmatprep.subr.mxu0 0.0
    %1545 = vmatpush1.msra.mxu0 0.0
    %1546 = vmatprep.subr.mxu0 0.0
    %1547 = vmatpush1.msra.mxu0 0.0
    %1548 = vmatprep.subr.mxu0 0.0
    %1549 = vmatpush1.msra.mxu0 0.0
    %1550 = vmatprep.subr.mxu0 0.0
    %1551 = vmatpush1.msra.mxu0 0.0
    %1552 = vmatprep.subr.mxu0 0.0
    %1553 = vmatpush1.msra.mxu0 0.0
    %1554 = vmatprep.subr.mxu0 0.0
    %1555 = vmatpush1.msra.mxu0 0.0
    %1556 = vmatprep.subr.mxu0 0.0
    %1557 = vmatpush1.msra.mxu0 0.0
    %1558 = vmatprep.mubr.f32.mxu0 0.0
    %1559 = vmatmul.mubr.f32.gmra.mrb[0].mxu0 %v1489
    %v1560 = vpop.f32.mrb[0].mxu0
    %v1561 = vadd.f32 %v1487, %v1560
    %v1562 = vpop.f32.mrb[0].mxu0
    %1563 = vmatprep.mubr.f32.mxu0 0.0
    %1564 = vmatmul.mubr.f32.gmra.mrb[0].mxu0 %v1492
    %v1565 = vpop.f32.mrb[0].mxu0
    %v1566 = vadd.f32 %v1487, %v1565
    %v1567 = vpop.f32.mrb[0].mxu0
    %1568 = vdwg.mxu0
    %v1569 = vadd.f32 %v1561, %v27
    %v1570 = vadd.f32 %v1566, %v28
    %v1571 = vsel %vm47, %v1569, 0.0
    %1572 = vadd.xlane.f32.xlu0 %v1571
    %v1573 = vpop.xlane.xlu0 %1572
    %v1574 = vsel %vm47, %v1570, 0.0
    %1575 = vadd.xlane.f32.xlu0 %v1574
    %v1576 = vpop.xlane.xlu0 %1575
    %v1577 = vrcp.pop 32.0
    %v1578 = vmul.f32 %v1573, %v1577
    %v1579 = vmul.f32 %v1576, %v1577
    %v1580 = vsub.f32 %v1569, %v1578
    %v1581 = vsub.f32 %v1570, %v1579
    %v1582 = vmul.f32 %v1580, %v1580
    %v1583 = vmul.f32 %v1581, %v1581
    %v1584 = vsel %vm47, %v1582, 0.0
    %1585 = vadd.xlane.f32.xlu0 %v1584
    %v1586 = vpop.xlane.xlu0 %1585
    %v1587 = vsel %vm47, %v1583, 0.0
    %1588 = vadd.xlane.f32.xlu0 %v1587
    %v1589 = vpop.xlane.xlu0 %1588
    %v1590 = vmul.f32 %v1586, %v1577
    %v1591 = vmul.f32 %v1589, %v1577
    %v1592 = vadd.f32 %v1590, 1e-12
    %v1593 = vadd.f32 %v1591, 1e-12
    %v1594 = vrsqrt.pop %v1592
    %v1595 = vrsqrt.pop %v1593
    %v1596 = vmul.f32 %v1580, %v1594
    %v1597 = vmul.f32 %v1581, %v1595
    %v1598 = vlaneseq
    %v1599 = vshrl.u32 %v1598, 7
    %v1600 = vsub.s32 0, %v1599
    %v1601 = vrot.slane %v33, %v1600
    %v1602 = vmul.f32 %v1596, %v1601
    %v1603 = vmul.f32 %v1597, %v1601
    %v1604 = vlaneseq
    %v1605 = vshrl.u32 %v1604, 7
    %v1606 = vsub.s32 0, %v1605
    %v1607 = vrot.slane %v34, %v1606
    %v1608 = vadd.f32 %v1602, %v1607
    %v1609 = vadd.f32 %v1603, %v1607
    %v1610 = vld [vmem:[%s4] sm:$0xff]
    %v1611 = vld [vmem:[%s4 + $0x8] sm:$0xff]
    %v1612 = vld [vmem:[%s4 + $0x10] sm:$0xff]
    %v1613 = vld [vmem:[%s4 + $0x18] sm:$0xff]
    %v1614 = vlaneseq
    %v1615 = vshrl.u32 %v1614, 7
    %v1616 = vsub.s32 0, %v1615
    %v1617 = vrot.slane %v35, %v1616
    %v1619 = vsel %vm47, %v1608, 0
    %v1622 = vsel %vm47, %v1609, 0
    %1624 = vmatprep.subr.mxu0 0.0
    %1625 = vmatpush1.msra.mxu0 %v1610
    %1626 = vmatprep.subr.mxu0 0.0
    %1627 = vmatpush1.msra.mxu0 %v1611
    %1628 = vmatprep.subr.mxu0 0.0
    %1629 = vmatpush1.msra.mxu0 %v1612
    %1630 = vmatprep.subr.mxu0 0.0
    %1631 = vmatpush1.msra.mxu0 %v1613
    %1632 = vmatprep.subr.mxu0 0.0
    %1633 = vmatpush1.msra.mxu0 0.0
    %1634 = vmatprep.subr.mxu0 0.0
    %1635 = vmatpush1.msra.mxu0 0.0
    %1636 = vmatprep.subr.mxu0 0.0
    %1637 = vmatpush1.msra.mxu0 0.0
    %1638 = vmatprep.subr.mxu0 0.0
    %1639 = vmatpush1.msra.mxu0 0.0
    %1640 = vmatprep.subr.mxu0 0.0
    %1641 = vmatpush1.msra.mxu0 0.0
    %1642 = vmatprep.subr.mxu0 0.0
    %1643 = vmatpush1.msra.mxu0 0.0
    %1644 = vmatprep.subr.mxu0 0.0
    %1645 = vmatpush1.msra.mxu0 0.0
    %1646 = vmatprep.subr.mxu0 0.0
    %1647 = vmatpush1.msra.mxu0 0.0
    %1648 = vmatprep.subr.mxu0 0.0
    %1649 = vmatpush1.msra.mxu0 0.0
    %1650 = vmatprep.subr.mxu0 0.0
    %1651 = vmatpush1.msra.mxu0 0.0
    %1652 = vmatprep.subr.mxu0 0.0
    %1653 = vmatpush1.msra.mxu0 0.0
    %1654 = vmatprep.subr.mxu0 0.0
    %1655 = vmatpush1.msra.mxu0 0.0
    %1656 = vmatprep.subr.mxu0 0.0
    %1657 = vmatpush1.msra.mxu0 0.0
    %1658 = vmatprep.subr.mxu0 0.0
    %1659 = vmatpush1.msra.mxu0 0.0
    %1660 = vmatprep.subr.mxu0 0.0
    %1661 = vmatpush1.msra.mxu0 0.0
    %1662 = vmatprep.subr.mxu0 0.0
    %1663 = vmatpush1.msra.mxu0 0.0
    %1664 = vmatprep.subr.mxu0 0.0
    %1665 = vmatpush1.msra.mxu0 0.0
    %1666 = vmatprep.subr.mxu0 0.0
    %1667 = vmatpush1.msra.mxu0 0.0
    %1668 = vmatprep.subr.mxu0 0.0
    %1669 = vmatpush1.msra.mxu0 0.0
    %1670 = vmatprep.subr.mxu0 0.0
    %1671 = vmatpush1.msra.mxu0 0.0
    %1672 = vmatprep.subr.mxu0 0.0
    %1673 = vmatpush1.msra.mxu0 0.0
    %1674 = vmatprep.subr.mxu0 0.0
    %1675 = vmatpush1.msra.mxu0 0.0
    %1676 = vmatprep.subr.mxu0 0.0
    %1677 = vmatpush1.msra.mxu0 0.0
    %1678 = vmatprep.subr.mxu0 0.0
    %1679 = vmatpush1.msra.mxu0 0.0
    %1680 = vmatprep.subr.mxu0 0.0
    %1681 = vmatpush1.msra.mxu0 0.0
    %1682 = vmatprep.subr.mxu0 0.0
    %1683 = vmatpush1.msra.mxu0 0.0
    %1684 = vmatprep.subr.mxu0 0.0
    %1685 = vmatpush1.msra.mxu0 0.0
    %1686 = vmatprep.subr.mxu0 0.0
    %1687 = vmatpush1.msra.mxu0 0.0
    %1688 = vmatprep.mubr.f32.mxu0 0.0
    %1689 = vmatmul.mubr.f32.gmra.mrb[0].mxu0 %v1619
    %v1690 = vpop.f32.mrb[0].mxu0
    %v1691 = vadd.f32 %v1617, %v1690
    %v1692 = vpop.f32.mrb[0].mxu0
    %1693 = vmatprep.mubr.f32.mxu0 0.0
    %1694 = vmatmul.mubr.f32.gmra.mrb[0].mxu0 %v1622
    %v1695 = vpop.f32.mrb[0].mxu0
    %v1696 = vadd.f32 %v1617, %v1695
    %v1697 = vpop.f32.mrb[0].mxu0
    %1698 = vdwg.mxu0
    %v1699 = vmul.f32 %v1691, 0.5
    %v1700 = vmul.f32 %v1696, 0.5
    %v1701 = vmul.f32 %v1691, 0.70710677
    %v1702 = vmul.f32 %v1696, 0.70710677
    %vm1703 = vcmp.ge.f32.partialorder %v1701, 0.0
    %vm1704 = vcmp.ge.f32.partialorder %v1702, 0.0
    %v1705 = vsel %vm1703, 1.0, -1.0
    %v1706 = vsel %vm1704, 1.0, -1.0
    %v1707 = vand.u32 2147483647, %v1701
    %v1708 = vand.u32 2147483647, %v1702
    %v1709 = vmul.f32 %v1707, 0.3275911
    %v1710 = vmul.f32 %v1708, 0.3275911
    %v1711 = vadd.f32 %v1709, 1.0
    %v1712 = vadd.f32 %v1710, 1.0
    %v1713 = vrcp.pop %v1711
    %v1714 = vrcp.pop %v1712
    %v1715 = vmul.f32 %v1713, 1.0614054
    %v1716 = vmul.f32 %v1714, 1.0614054
    %v1717 = vadd.f32 %v1715, -1.4531521
    %v1718 = vadd.f32 %v1716, -1.4531521
    %v1719 = vmul.f32 %v1717, %v1713
    %v1720 = vmul.f32 %v1718, %v1714
    %v1721 = vadd.f32 %v1719, 1.4214138
    %v1722 = vadd.f32 %v1720, 1.4214138
    %v1723 = vmul.f32 %v1721, %v1713
    %v1724 = vmul.f32 %v1722, %v1714
    %v1725 = vadd.f32 %v1723, -0.28449672
    %v1726 = vadd.f32 %v1724, -0.28449672
    %v1727 = vmul.f32 %v1725, %v1713
    %v1728 = vmul.f32 %v1726, %v1714
    %v1729 = vadd.f32 %v1727, 0.2548296
    %v1730 = vadd.f32 %v1728, 0.2548296
    %v1731 = vmul.f32 %v1729, %v1713
    %v1732 = vmul.f32 %v1730, %v1714
    %v1733 = vsub.f32 0.0, %v1707
    %v1734 = vsub.f32 0.0, %v1708
    %v1735 = vmul.f32 %v1733, %v1707
    %v1736 = vmul.f32 %v1734, %v1708
    %v1737 = vmul.f32 %v1735, 1.442695
    %v1738 = vpow.pop %v1737
    %v1739 = vmul.f32 %v1736, 1.442695
    %v1740 = vpow.pop %v1739
    %v1741 = vmul.f32 %v1731, %v1738
    %v1742 = vmul.f32 %v1732, %v1740
    %v1743 = vsub.f32 1.0, %v1741
    %v1744 = vsub.f32 1.0, %v1742
    %v1745 = vmul.f32 %v1705, %v1743
    %v1746 = vmul.f32 %v1706, %v1744
    %v1747 = vadd.f32 %v1745, 1.0
    %v1748 = vadd.f32 %v1746, 1.0
    %v1749 = vmul.f32 %v1699, %v1747
    %v1750 = vmul.f32 %v1700, %v1748
    %v1751 = vld [vmem:[%s5] sm:$0xff]
    %v1752 = vld [vmem:[%s5 + $0x8] sm:$0xff]
    %v1753 = vld [vmem:[%s5 + $0x10] sm:$0xff]
    %v1754 = vld [vmem:[%s5 + $0x18] sm:$0xff]
    %v1755 = vld [vmem:[%s5 + $0x20] sm:$0xff]
    %v1756 = vld [vmem:[%s5 + $0x28] sm:$0xff]
    %v1757 = vld [vmem:[%s5 + $0x30] sm:$0xff]
    %v1758 = vld [vmem:[%s5 + $0x38] sm:$0xff]
    %v1759 = vld [vmem:[%s5 + $0x40] sm:$0xff]
    %v1760 = vld [vmem:[%s5 + $0x48] sm:$0xff]
    %v1761 = vld [vmem:[%s5 + $0x50] sm:$0xff]
    %v1762 = vld [vmem:[%s5 + $0x58] sm:$0xff]
    %v1763 = vld [vmem:[%s5 + $0x60] sm:$0xff]
    %v1764 = vld [vmem:[%s5 + $0x68] sm:$0xff]
    %v1765 = vld [vmem:[%s5 + $0x70] sm:$0xff]
    %v1766 = vld [vmem:[%s5 + $0x78] sm:$0xff]
    %v1767 = vlaneseq
    %v1768 = vshrl.u32 %v1767, 7
    %v1769 = vsub.s32 0, %v1768
    %v1770 = vrot.slane %v36, %v1769
    %1771 = vmatprep.subr.mxu0 0.0
    %1772 = vmatpush1.msra.mxu0 %v1751
    %1773 = vmatprep.subr.mxu0 0.0
    %1774 = vmatpush1.msra.mxu0 %v1752
    %1775 = vmatprep.subr.mxu0 0.0
    %1776 = vmatpush1.msra.mxu0 %v1753
    %1777 = vmatprep.subr.mxu0 0.0
    %1778 = vmatpush1.msra.mxu0 %v1754
    %1779 = vmatprep.subr.mxu0 0.0
    %1780 = vmatpush1.msra.mxu0 %v1755
    %1781 = vmatprep.subr.mxu0 0.0
    %1782 = vmatpush1.msra.mxu0 %v1756
    %1783 = vmatprep.subr.mxu0 0.0
    %1784 = vmatpush1.msra.mxu0 %v1757
    %1785 = vmatprep.subr.mxu0 0.0
    %1786 = vmatpush1.msra.mxu0 %v1758
    %1787 = vmatprep.subr.mxu0 0.0
    %1788 = vmatpush1.msra.mxu0 %v1759
    %1789 = vmatprep.subr.mxu0 0.0
    %1790 = vmatpush1.msra.mxu0 %v1760
    %1791 = vmatprep.subr.mxu0 0.0
    %1792 = vmatpush1.msra.mxu0 %v1761
    %1793 = vmatprep.subr.mxu0 0.0
    %1794 = vmatpush1.msra.mxu0 %v1762
    %1795 = vmatprep.subr.mxu0 0.0
    %1796 = vmatpush1.msra.mxu0 %v1763
    %1797 = vmatprep.subr.mxu0 0.0
    %1798 = vmatpush1.msra.mxu0 %v1764
    %1799 = vmatprep.subr.mxu0 0.0
    %1800 = vmatpush1.msra.mxu0 %v1765
    %1801 = vmatprep.subr.mxu0 0.0
    %1802 = vmatpush1.msra.mxu0 %v1766
    %1803 = vmatprep.subr.mxu0 0.0
    %1804 = vmatpush1.msra.mxu0 0.0
    %1805 = vmatprep.subr.mxu0 0.0
    %1806 = vmatpush1.msra.mxu0 0.0
    %1807 = vmatprep.subr.mxu0 0.0
    %1808 = vmatpush1.msra.mxu0 0.0
    %1809 = vmatprep.subr.mxu0 0.0
    %1810 = vmatpush1.msra.mxu0 0.0
    %1811 = vmatprep.subr.mxu0 0.0
    %1812 = vmatpush1.msra.mxu0 0.0
    %1813 = vmatprep.subr.mxu0 0.0
    %1814 = vmatpush1.msra.mxu0 0.0
    %1815 = vmatprep.subr.mxu0 0.0
    %1816 = vmatpush1.msra.mxu0 0.0
    %1817 = vmatprep.subr.mxu0 0.0
    %1818 = vmatpush1.msra.mxu0 0.0
    %1819 = vmatprep.subr.mxu0 0.0
    %1820 = vmatpush1.msra.mxu0 0.0
    %1821 = vmatprep.subr.mxu0 0.0
    %1822 = vmatpush1.msra.mxu0 0.0
    %1823 = vmatprep.subr.mxu0 0.0
    %1824 = vmatpush1.msra.mxu0 0.0
    %1825 = vmatprep.subr.mxu0 0.0
    %1826 = vmatpush1.msra.mxu0 0.0
    %1827 = vmatprep.subr.mxu0 0.0
    %1828 = vmatpush1.msra.mxu0 0.0
    %1829 = vmatprep.subr.mxu0 0.0
    %1830 = vmatpush1.msra.mxu0 0.0
    %1831 = vmatprep.subr.mxu0 0.0
    %1832 = vmatpush1.msra.mxu0 0.0
    %1833 = vmatprep.subr.mxu0 0.0
    %1834 = vmatpush1.msra.mxu0 0.0
    %1835 = vmatprep.mubr.f32.mxu0 0.0
    %1836 = vmatmul.mubr.f32.gmra.mrb[0].mxu0 %v1749
    %v1837 = vpop.f32.mrb[0].mxu0
    %v1838 = vadd.f32 %v1770, %v1837
    %v1839 = vpop.f32.mrb[0].mxu0
    %1840 = vmatprep.mubr.f32.mxu0 0.0
    %1841 = vmatmul.mubr.f32.gmra.mrb[0].mxu0 %v1750
    %v1842 = vpop.f32.mrb[0].mxu0
    %v1843 = vadd.f32 %v1770, %v1842
    %v1844 = vpop.f32.mrb[0].mxu0
    %1845 = vdwg.mxu0
    %v1846 = vadd.f32 %v1838, %v1608
    %v1847 = vadd.f32 %v1843, %v1609
    %v1848 = vsel %vm47, %v1846, 0.0
    %1849 = vadd.xlane.f32.xlu0 %v1848
    %v1850 = vpop.xlane.xlu0 %1849
    %v1851 = vsel %vm47, %v1847, 0.0
    %1852 = vadd.xlane.f32.xlu0 %v1851
    %v1853 = vpop.xlane.xlu0 %1852
    %v1854 = vmul.f32 %v1850, %v1577
    %v1855 = vmul.f32 %v1853, %v1577
    %v1856 = vsub.f32 %v1846, %v1854
    %v1857 = vsub.f32 %v1847, %v1855
    %v1858 = vmul.f32 %v1856, %v1856
    %v1859 = vmul.f32 %v1857, %v1857
    %v1860 = vsel %vm47, %v1858, 0.0
    %1861 = vadd.xlane.f32.xlu0 %v1860
    %v1862 = vpop.xlane.xlu0 %1861
    %v1863 = vsel %vm47, %v1859, 0.0
    %1864 = vadd.xlane.f32.xlu0 %v1863
    %v1865 = vpop.xlane.xlu0 %1864
    %v1866 = vmul.f32 %v1862, %v1577
    %v1867 = vmul.f32 %v1865, %v1577
    %v1868 = vadd.f32 %v1866, 1e-12
    %v1869 = vadd.f32 %v1867, 1e-12
    %v1870 = vrsqrt.pop %v1868
    %v1871 = vrsqrt.pop %v1869
    %v1872 = vmul.f32 %v1856, %v1870
    %v1873 = vmul.f32 %v1857, %v1871
    %v1874 = vlaneseq
    %v1875 = vshrl.u32 %v1874, 7
    %v1876 = vsub.s32 0, %v1875
    %v1877 = vrot.slane %v37, %v1876
    %v1878 = vmul.f32 %v1872, %v1877
    %v1879 = vmul.f32 %v1873, %v1877
    %v1880 = vlaneseq
    %v1881 = vshrl.u32 %v1880, 7
    %v1882 = vsub.s32 0, %v1881
    %v1883 = vrot.slane %v38, %v1882
    %v1884 = vadd.f32 %v1878, %v1883
    %v1885 = vadd.f32 %v1879, %v1883
    %1886 = vst.msk [vmem:[#allocation2] sm:$0xff] %vm47, %v1884
    %1887 = vst.msk [vmem:[#allocation2 + $0x8] sm:$0xff] %vm47, %v1885
    // Predicated region
    $region30: #{bert_encoder.3} parent=1 // pred_check
      _
    $region31: #{bert_encoder.3} parent=1 // pred_check_branch
      %1889 = sbr.rel (0) target = $region33
    $region32: #{bert_encoder.3} parent=1 // pred_region
      %s1891 = ssub.s32 256, 256
      %1892 = vsyncadd [#allocation3], %s1891
      %s1893 = sshll.u32 [#allocation2], 4
      %s1894 = int_to_ptr.vmem [resolvable:$true] %s1893
      %1899 = dma.vmem_to_hbm [thread:$0]  %s1894, 256, %s7, [#allocation3], 128, 128, 8
    $region33: #{bert_encoder.3} parent=1 // pred_fallthru
      _
    // Predicated region
    $region34: #{bert_encoder.3} parent=1 // pred_check
      _
    $region35: #{bert_encoder.3} parent=1 // pred_check_branch
      %1901 = sbr.rel (0) target = $region37
    $region36: #{bert_encoder.3} parent=1 // pred_region
      %1902 = dma.done [#allocation3], 256
    $region37: #{bert_encoder.3} parent=1 // pred_fallthru
      _
    %1903 = vsyncpa [#allocation3], 1

</llo_original>
